<compile_context>
chip_gen: v7x
topology: tpu7x:2x2x1
jax: 0.10.0
libtpu: 0.0.40
codegen_flags: <defaults>
</compile_context>

<pallas_src>
import functools

import jax
import jax.numpy as jnp
from jax.experimental import pallas as pl
from jax.experimental.pallas import tpu as pltpu


def _round_up(a, b):
    return (a + b - 1) // b * b


# -----------------------------------------------------------------------------
# Fused Pallas kernel for the whole Up block.
# -----------------------------------------------------------------------------
def _fused_up_kernel(mask_ref, x_ref, cat_ref, wrs_ref, w1_ref, w2_ref,
                     epi_ref, o_ref, a1_ref, a2_ref, stk_ref,
                     *, wp, mp, halo, inv_m):
    # mask_ref: (1, Mp)   f32  1.0 at interior pixels, 0.0 at zero-pad pixels
    # x_ref:    (Cin, Mh) bf16 upsampled input, padded/flattened, halo-embedded
    # cat_ref:  (Cc,  Mh) bf16 skip tensor, same layout
    # w*_ref:   (Co, 9*Ci) bf16 tap-stacked conv weights
    # epi_ref:  (3, 3, Co, 1) f32 per layer [bias, gamma, beta] column vectors
    # o_ref:    (Co, Mp)  f32  final BN3 output (padded-flat, lane-dense)
    # a1/a2:    (Co, Mh)  bf16 VMEM scratch for inter-layer activations
    # stk_ref:  (Kmax, Mp) bf16 VMEM scratch for the stacked im2col operand
    mask = mask_ref[...]                               # (1, Mp)
    epi = epi_ref[...]                                 # (3, 3, Co, 1)
    co = o_ref.shape[0]
    offs = [(i - 1) * wp + (j - 1) for i in range(3) for j in range(3)]

    def stack(src_ref, row0):
        # Ref-sliced shifted slabs, stacked along sublanes into stk_ref.
        ci = src_ref.shape[0]
        for t, off in enumerate(offs):
            stk_ref[row0 + t * ci:row0 + (t + 1) * ci, :] = (
                src_ref[:, halo + off:halo + off + mp])
        return row0 + 9 * ci

    def conv(w_ref, k):
        # One MXU dot per conv: (Co, K) @ (K, Mp) -> f32 accumulator.
        return jnp.dot(w_ref[...], stk_ref[:k, :],
                       preferred_element_type=jnp.float32)

    def bias_relu_bn(acc, layer):
        bias, gamma, beta = epi[layer, 0], epi[layer, 1], epi[layer, 2]  # (Co,1)
        z = jnp.maximum(acc + bias, 0.0) * mask        # ReLU; borders zeroed
        mean = jnp.sum(z, axis=1, keepdims=True) * inv_m                 # (Co,1)
        var = jnp.sum(z * z, axis=1, keepdims=True) * inv_m - mean * mean
        zn = (z - mean) * jax.lax.rsqrt(var + 1e-5) * gamma + beta
        return zn * mask                               # restore zero padding

    zeros_halo = jnp.zeros((co, halo), a1_ref.dtype)

    # ---- layer 1: resize_conv on the upsampled input -------------------------
    k1 = stack(x_ref, 0)
    y1 = bias_relu_bn(conv(wrs_ref, k1), 0)            # (Co, Mp) f32
    a1_ref[:, :halo] = zeros_halo
    a1_ref[:, halo + mp:] = zeros_halo
    a1_ref[:, halo:halo + mp] = y1.astype(a1_ref.dtype)

    # ---- layer 2: conv1 on concat([cat, y1]) == one stacked dot, K=9*(Cc+Co) -
    kc = stack(cat_ref, 0)
    k2 = stack(a1_ref, kc)
    y2 = bias_relu_bn(conv(w1_ref, k2), 1)
    a2_ref[:, :halo] = zeros_halo
    a2_ref[:, halo + mp:] = zeros_halo
    a2_ref[:, halo:halo + mp] = y2.astype(a2_ref.dtype)

    # ---- layer 3: conv2 -------------------------------------------------------
    k3 = stack(a2_ref, 0)
    o_ref[...] = bias_relu_bn(conv(w2_ref, k3), 2)


# -----------------------------------------------------------------------------
# Host wrapper: layout plumbing + one pallas_call.
# -----------------------------------------------------------------------------
def up_forward(x_nchw, cat_nchw, params, kernel_size=3, padding=1, stride=1):
    """Pallas implementation of Up.forward. x/cat/output are NCHW."""
    assert kernel_size == 3 and padding == 1 and stride == 1, (
        "fused kernel implements the standard same-conv config (k=3, p=1, s=1)")

    N, Cin, H, W = x_nchw.shape
    Co = params["w_rs"].shape[0]
    Cc = cat_nchw.shape[1]
    assert Cc + Co == Cin, "cat channels + out_channels must equal in_channels"
    Hu, Wu = 2 * H, 2 * W
    assert cat_nchw.shape == (N, Cc, Hu, Wu)
    assert params["w1"].shape[1] == Cc + Co

    Hp, Wp = Hu + 2, Wu + 2                   # spatially zero-padded size
    Mp_real = N * Hp * Wp                     # flattened padded pixel count
    Mvalid = N * Hu * Wu                      # interior pixels (BN denominator)
    Mpad = _round_up(Mp_real, 128)            # lane-dense (multiple of 128)
    HALO = _round_up(Wp + 1, 128)             # covers max tap offset +/-(Wp+1)
    Mh = Mpad + 2 * HALO
    Kmax = 9 * max(Cin, Cc + Co, Co)

    bf16, f32 = jnp.bfloat16, jnp.float32
    x = x_nchw.astype(bf16)
    cat = cat_nchw.astype(bf16)

    # nearest-neighbour 2x upsample (f.interpolate default mode)
    xu = jnp.repeat(jnp.repeat(x, 2, axis=2), 2, axis=3)            # (N,Cin,Hu,Wu)

    def to_flat(a_nchw):
        # NCHW -> channel-major, spatially zero-padded, flattened (n,h,w) on the
        # lane axis, embedded at lane offset HALO inside a zero buffer.
        c = a_nchw.shape[1]
        a = jnp.pad(a_nchw, ((0, 0), (0, 0), (1, 1), (1, 1)))       # (N,C,Hp,Wp)
        a = jnp.transpose(a, (1, 0, 2, 3)).reshape(c, Mp_real)      # (C, Mp_real)
        return jnp.pad(a, ((0, 0), (HALO, Mh - HALO - Mp_real)))    # (C, Mh)

    x_flat = to_flat(xu)                                            # (Cin, Mh)
    cat_flat = to_flat(cat)                                         # (Cc,  Mh)

    # interior-pixel mask in the same flat layout (f32)
    hw = jnp.zeros((Hp, Wp), f32).at[1:-1, 1:-1].set(1.0)
    mask = jnp.zeros((1, Mpad), f32).at[:, :Mp_real].set(
        jnp.tile(hw.reshape(-1), N)[None])

    def taps_stacked(w_oihw):
        # torch (Co, Ci, 3, 3) -> tap-stacked (Co, 9*Ci): column t*Ci+c holds
        # w[o, c, t//3, t%3], matching the row order produced by stack().
        co_, ci = w_oihw.shape[0], w_oihw.shape[1]
        t = jnp.transpose(w_oihw, (2, 3, 0, 1)).reshape(9, co_, ci)
        return jnp.transpose(t, (1, 0, 2)).reshape(co_, 9 * ci).astype(bf16)

    w_rs = taps_stacked(params["w_rs"])                             # (Co, 9*Cin)
    w1 = jnp.concatenate([taps_stacked(params["w1"][:, :Cc]),       # cat taps
                          taps_stacked(params["w1"][:, Cc:])],      # x taps
                         axis=1)                                    # (Co, 9*(Cc+Co))
    w2 = taps_stacked(params["w2"])                                 # (Co, 9*Co)

    # per-layer epilogue params: [bias, gamma, beta] as column vectors (f32)
    epi = jnp.stack([
        jnp.stack([params["b_rs"], params["g1"], params["be1"]]),
        jnp.stack([params["b1"], params["g2"], params["be2"]]),
        jnp.stack([params["b2"], params["g3"], params["be3"]]),
    ]).astype(f32)[..., None]                                       # (3,3,Co,1)

    # VMEM budget: resident buffers + f32 epilogue temporaries, with headroom.
    est_bytes = (2 * (Cin + Cc) * Mh                # bf16 inputs
                 + 2 * 2 * Co * Mh                  # bf16 a1/a2 scratch
                 + 2 * Kmax * Mpad                  # bf16 stacked operand
                 + 4 * Co * Mpad                    # f32 output
                 + 4 * Mpad                         # f32 mask
                 + 2 * Co * (9 * Cin + 9 * (Cc + Co) + 9 * Co)      # weights
                 + 4 * 6 * Co * Mpad)               # f32 acc/z temporaries
    vmem_limit = int(min(max(2 * est_bytes, 32 * 1024 * 1024),
                         100 * 1024 * 1024))

    kernel = functools.partial(_fused_up_kernel, wp=Wp, mp=Mpad, halo=HALO,
                               inv_m=1.0 / Mvalid)

    out_flat = pl.pallas_call(
        kernel,
        out_shape=jax.ShapeDtypeStruct((Co, Mpad), f32),
        scratch_shapes=[pltpu.VMEM((Co, Mh), bf16),
                        pltpu.VMEM((Co, Mh), bf16),
                        pltpu.VMEM((Kmax, Mpad), bf16)],
        compiler_params=pltpu.CompilerParams(vmem_limit_bytes=vmem_limit),
    )(mask, x_flat, cat_flat, w_rs, w1, w2, epi)

    # (Co, Mpad) -> NCHW interior
    out = out_flat[:, :Mp_real].reshape(Co, N, Hp, Wp)[:, :, 1:-1, 1:-1]
    return jnp.transpose(out, (1, 0, 2, 3))                         # (N,Co,Hu,Wu)


# -----------------------------------------------------------------------------
# Plain-JAX reference (for correctness check)
# -----------------------------------------------------------------------------
def _ref_up(x_nchw, cat_nchw, params):
    def conv(z, w, b):  # z NHWC, w torch (Co,Ci,kh,kw), p=1, s=1
        out = jax.lax.conv_general_dilated(
            z, jnp.transpose(w, (2, 3, 1, 0)), (1, 1), [(1, 1), (1, 1)],
            dimension_numbers=("NHWC", "HWIO", "NHWC"))
        return out + b

    def bn(z, g, b):
        m = z.mean(axis=(0, 1, 2))
        v = ((z - m) ** 2).mean(axis=(0, 1, 2))
        return (z - m) * jax.lax.rsqrt(v + 1e-5) * g + b

    x = jnp.transpose(x_nchw, (0, 2, 3, 1)).astype(jnp.float32)
    cat = jnp.transpose(cat_nchw, (0, 2, 3, 1)).astype(jnp.float32)
    x = jnp.repeat(jnp.repeat(x, 2, axis=1), 2, axis=2)             # nearest x2
    x = bn(jax.nn.relu(conv(x, params["w_rs"], params["b_rs"])),
           params["g1"], params["be1"])
    x = jnp.concatenate([cat, x], axis=-1)
    x = bn(jax.nn.relu(conv(x, params["w1"], params["b1"])),
           params["g2"], params["be2"])
    x = bn(jax.nn.relu(conv(x, params["w2"], params["b2"])),
           params["g3"], params["be3"])
    return jnp.transpose(x, (0, 3, 1, 2))


# -----------------------------------------------------------------------------
# main
# -----------------------------------------------------------------------------
if __name__ == "__main__":
    # Up(in_channels=8, out_channels=4, kernel_size=3, padding=1, stride=1)
    N, Cin, Co, H, W = 2, 8, 4, 8, 8
    Cc = Cin - Co

    key = jax.random.PRNGKey(0)
    ks = jax.random.split(key, 8)
    params = {
        "w_rs": 0.1 * jax.random.normal(ks[0], (Co, Cin, 3, 3), jnp.float32),
        "b_rs": 0.1 * jax.random.normal(ks[1], (Co,), jnp.float32),
        "g1": jnp.ones((Co,), jnp.float32),
        "be1": jnp.zeros((Co,), jnp.float32),
        "w1": 0.1 * jax.random.normal(ks[2], (Co, Cin, 3, 3), jnp.float32),
        "b1": 0.1 * jax.random.normal(ks[3], (Co,), jnp.float32),
        "g2": jnp.ones((Co,), jnp.float32),
        "be2": jnp.zeros((Co,), jnp.float32),
        "w2": 0.1 * jax.random.normal(ks[4], (Co, Co, 3, 3), jnp.float32),
        "b2": 0.1 * jax.random.normal(ks[5], (Co,), jnp.float32),
        "g3": jnp.ones((Co,), jnp.float32),
        "be3": jnp.zeros((Co,), jnp.float32),
    }

    x = jax.random.normal(ks[6], (N, Cin, H, W), jnp.float32)        # NCHW
    cat = jax.random.normal(ks[7], (N, Cc, 2 * H, 2 * W), jnp.float32)

    fwd = jax.jit(up_forward)
    out = jax.block_until_ready(fwd(x, cat, params))

    ref = _ref_up(x, cat, params)
    assert out.shape == (N, Co, 2 * H, 2 * W), out.shape
    # bf16 matmul operands (f32 accumulate/epilogue) -> looser tolerance than a
    # pure-f32 kernel; structural bugs would show O(1) errors.
    err = float(jnp.abs(out - ref).max())
    assert jnp.allclose(out, ref, atol=5e-2, rtol=5e-2), err

    print("KERNEL_OK")
</pallas_src>

<mosaic_0001>
module attributes {stable_mosaic.version = 11 : i64} {
  func.func @_fused_up_kernel(%arg0: memref<1x768xf32, #tpu.memory_space<vmem>>, %arg1: memref<8x1024xbf16, #tpu.memory_space<vmem>>, %arg2: memref<4x1024xbf16, #tpu.memory_space<vmem>>, %arg3: memref<4x72xbf16, #tpu.memory_space<vmem>>, %arg4: memref<4x72xbf16, #tpu.memory_space<vmem>>, %arg5: memref<4x36xbf16, #tpu.memory_space<vmem>>, %arg6: memref<3x3x4x1xf32, #tpu.memory_space<vmem>>, %arg7: memref<4x768xf32, #tpu.memory_space<vmem>>, %arg8: memref<4x1024xbf16, #tpu.memory_space<vmem>>, %arg9: memref<4x1024xbf16, #tpu.memory_space<vmem>>, %arg10: memref<72x768xbf16, #tpu.memory_space<vmem>>) attributes {dimension_semantics = [], scalar_prefetch = 0 : i64, scratch_operands = 3 : i64, tpu.core_type = #tpu.core_type<tc>} {
    %c0 = arith.constant 0 : index
    %c0_0 = arith.constant 0 : index
    %0 = vector.load %arg0[%c0, %c0_0] : memref<1x768xf32, #tpu.memory_space<vmem>>, vector<1x768xf32>
    %c0_1 = arith.constant 0 : index
    %c0_2 = arith.constant 0 : index
    %c0_3 = arith.constant 0 : index
    %c0_4 = arith.constant 0 : index
    %1 = vector.load %arg6[%c0_1, %c0_2, %c0_3, %c0_4] : memref<3x3x4x1xf32, #tpu.memory_space<vmem>>, vector<3x3x4x1xf32>
    %cst = arith.constant 0.000000e+00 : bf16
    %2 = vector.broadcast %cst : bf16 to vector<4x128xbf16>
    %c0_5 = arith.constant 0 : index
    %c109 = arith.constant 109 : index
    %3 = vector.load %arg1[%c0_5, %c109] : memref<8x1024xbf16, #tpu.memory_space<vmem>>, vector<8x768xbf16>
    %c0_6 = arith.constant 0 : index
    %c0_7 = arith.constant 0 : index
    %4 = vector.load %arg10[%c0_6, %c0_7] : memref<72x768xbf16, #tpu.memory_space<vmem>>, vector<8x768xbf16>
    tpu.vector_store %arg10[%c0_6, %c0_7], %3 {strides = array<i32>} : memref<72x768xbf16, #tpu.memory_space<vmem>>, vector<8x768xbf16>,
    %c0_8 = arith.constant 0 : index
    %c110 = arith.constant 110 : index
    %5 = vector.load %arg1[%c0_8, %c110] : memref<8x1024xbf16, #tpu.memory_space<vmem>>, vector<8x768xbf16>
    %c8 = arith.constant 8 : index
    %c0_9 = arith.constant 0 : index
    %6 = vector.load %arg10[%c8, %c0_9] : memref<72x768xbf16, #tpu.memory_space<vmem>>, vector<8x768xbf16>
    tpu.vector_store %arg10[%c8, %c0_9], %5 {strides = array<i32>} : memref<72x768xbf16, #tpu.memory_space<vmem>>, vector<8x768xbf16>,
    %c0_10 = arith.constant 0 : index
    %c111 = arith.constant 111 : index
    %7 = vector.load %arg1[%c0_10, %c111] : memref<8x1024xbf16, #tpu.memory_space<vmem>>, vector<8x768xbf16>
    %c16 = arith.constant 16 : index
    %c0_11 = arith.constant 0 : index
    %8 = vector.load %arg10[%c16, %c0_11] : memref<72x768xbf16, #tpu.memory_space<vmem>>, vector<8x768xbf16>
    tpu.vector_store %arg10[%c16, %c0_11], %7 {strides = array<i32>} : memref<72x768xbf16, #tpu.memory_space<vmem>>, vector<8x768xbf16>,
    %c0_12 = arith.constant 0 : index
    %c127 = arith.constant 127 : index
    %9 = vector.load %arg1[%c0_12, %c127] : memref<8x1024xbf16, #tpu.memory_space<vmem>>, vector<8x768xbf16>
    %c24 = arith.constant 24 : index
    %c0_13 = arith.constant 0 : index
    %10 = vector.load %arg10[%c24, %c0_13] : memref<72x768xbf16, #tpu.memory_space<vmem>>, vector<8x768xbf16>
    tpu.vector_store %arg10[%c24, %c0_13], %9 {strides = array<i32>} : memref<72x768xbf16, #tpu.memory_space<vmem>>, vector<8x768xbf16>,
    %c0_14 = arith.constant 0 : index
    %c128 = arith.constant 128 : index
    %11 = vector.load %arg1[%c0_14, %c128] : memref<8x1024xbf16, #tpu.memory_space<vmem>>, vector<8x768xbf16>
    %c32 = arith.constant 32 : index
    %c0_15 = arith.constant 0 : index
    %12 = vector.load %arg10[%c32, %c0_15] : memref<72x768xbf16, #tpu.memory_space<vmem>>, vector<8x768xbf16>
    tpu.vector_store %arg10[%c32, %c0_15], %11 {strides = array<i32>} : memref<72x768xbf16, #tpu.memory_space<vmem>>, vector<8x768xbf16>,
    %c0_16 = arith.constant 0 : index
    %c129 = arith.constant 129 : index
    %13 = vector.load %arg1[%c0_16, %c129] : memref<8x1024xbf16, #tpu.memory_space<vmem>>, vector<8x768xbf16>
    %c40 = arith.constant 40 : index
    %c0_17 = arith.constant 0 : index
    %14 = vector.load %arg10[%c40, %c0_17] : memref<72x768xbf16, #tpu.memory_space<vmem>>, vector<8x768xbf16>
    tpu.vector_store %arg10[%c40, %c0_17], %13 {strides = array<i32>} : memref<72x768xbf16, #tpu.memory_space<vmem>>, vector<8x768xbf16>,
    %c0_18 = arith.constant 0 : index
    %c145 = arith.constant 145 : index
    %15 = vector.load %arg1[%c0_18, %c145] : memref<8x1024xbf16, #tpu.memory_space<vmem>>, vector<8x768xbf16>
    %c48 = arith.constant 48 : index
    %c0_19 = arith.constant 0 : index
    %16 = vector.load %arg10[%c48, %c0_19] : memref<72x768xbf16, #tpu.memory_space<vmem>>, vector<8x768xbf16>
    tpu.vector_store %arg10[%c48, %c0_19], %15 {strides = array<i32>} : memref<72x768xbf16, #tpu.memory_space<vmem>>, vector<8x768xbf16>,
    %c0_20 = arith.constant 0 : index
    %c146 = arith.constant 146 : index
    %17 = vector.load %arg1[%c0_20, %c146] : memref<8x1024xbf16, #tpu.memory_space<vmem>>, vector<8x768xbf16>
    %c56 = arith.constant 56 : index
    %c0_21 = arith.constant 0 : index
    %18 = vector.load %arg10[%c56, %c0_21] : memref<72x768xbf16, #tpu.memory_space<vmem>>, vector<8x768xbf16>
    tpu.vector_store %arg10[%c56, %c0_21], %17 {strides = array<i32>} : memref<72x768xbf16, #tpu.memory_space<vmem>>, vector<8x768xbf16>,
    %c0_22 = arith.constant 0 : index
    %c147 = arith.constant 147 : index
    %19 = vector.load %arg1[%c0_22, %c147] : memref<8x1024xbf16, #tpu.memory_space<vmem>>, vector<8x768xbf16>
    %c64 = arith.constant 64 : index
    %c0_23 = arith.constant 0 : index
    %20 = vector.load %arg10[%c64, %c0_23] : memref<72x768xbf16, #tpu.memory_space<vmem>>, vector<8x768xbf16>
    tpu.vector_store %arg10[%c64, %c0_23], %19 {strides = array<i32>} : memref<72x768xbf16, #tpu.memory_space<vmem>>, vector<8x768xbf16>,
    %c0_24 = arith.constant 0 : index
    %c0_25 = arith.constant 0 : index
    %21 = vector.load %arg3[%c0_24, %c0_25] : memref<4x72xbf16, #tpu.memory_space<vmem>>, vector<4x72xbf16>
    %c0_26 = arith.constant 0 : index
    %c0_27 = arith.constant 0 : index
    %22 = vector.load %arg10[%c0_26, %c0_27] : memref<72x768xbf16, #tpu.memory_space<vmem>>, vector<72x768xbf16>
    %cst_28 = arith.constant dense<0.000000e+00> : vector<4x768xf32>
    %23 = tpu.matmul %21, %22, %cst_28 {dimension_numbers = #tpu.dot_dimension_numbers<[1], [0], [0], [1], [0, 0, 1, 1], [], []>} : vector<4x72xbf16>, vector<72x768xbf16>, vector<4x768xf32> -> vector<4x768xf32>
    %24 = vector.extract_strided_slice %1 {offsets = [0, 0, 0, 0], sizes = [1, 1, 4, 1], strides = [1, 1, 1, 1]} : vector<3x3x4x1xf32> to vector<1x1x4x1xf32>
    %25 = vector.shape_cast %24 : vector<1x1x4x1xf32> to vector<4x1xf32>
    %26 = vector.extract_strided_slice %1 {offsets = [0, 1, 0, 0], sizes = [1, 1, 4, 1], strides = [1, 1, 1, 1]} : vector<3x3x4x1xf32> to vector<1x1x4x1xf32>
    %27 = vector.shape_cast %26 : vector<1x1x4x1xf32> to vector<4x1xf32>
    %28 = vector.extract_strided_slice %1 {offsets = [0, 2, 0, 0], sizes = [1, 1, 4, 1], strides = [1, 1, 1, 1]} : vector<3x3x4x1xf32> to vector<1x1x4x1xf32>
    %29 = vector.shape_cast %28 : vector<1x1x4x1xf32> to vector<4x1xf32>
    %30 = vector.broadcast %25 : vector<4x1xf32> to vector<4x768xf32>
    %31 = arith.addf %23, %30 : vector<4x768xf32>
    %cst_29 = arith.constant 0.000000e+00 : f32
    %32 = vector.broadcast %cst_29 : f32 to vector<4x768xf32>
    %33 = arith.maximumf %31, %32 : vector<4x768xf32>
    %34 = vector.broadcast %0 : vector<1x768xf32> to vector<4x768xf32>
    %35 = arith.mulf %33, %34 : vector<4x768xf32>
    %cst_30 = arith.constant dense<0.000000e+00> : vector<4xf32>
    %36 = vector.multi_reduction <add>, %35, %cst_30 [1] : vector<4x768xf32> to vector<4xf32>
    %37 = vector.shape_cast %36 : vector<4xf32> to vector<4x1xf32>
    %cst_31 = arith.constant 0.001953125 : f32
    %38 = vector.broadcast %cst_31 : f32 to vector<4x1xf32>
    %39 = arith.mulf %37, %38 : vector<4x1xf32>
    %40 = arith.mulf %35, %35 : vector<4x768xf32>
    %cst_32 = arith.constant dense<0.000000e+00> : vector<4xf32>
    %41 = vector.multi_reduction <add>, %40, %cst_32 [1] : vector<4x768xf32> to vector<4xf32>
    %42 = vector.shape_cast %41 : vector<4xf32> to vector<4x1xf32>
    %cst_33 = arith.constant 0.001953125 : f32
    %43 = vector.broadcast %cst_33 : f32 to vector<4x1xf32>
    %44 = arith.mulf %42, %43 : vector<4x1xf32>
    %45 = arith.mulf %39, %39 : vector<4x1xf32>
    %46 = arith.subf %44, %45 : vector<4x1xf32>
    %47 = vector.broadcast %39 : vector<4x1xf32> to vector<4x768xf32>
    %48 = arith.subf %35, %47 : vector<4x768xf32>
    %cst_34 = arith.constant 9.99999974E-6 : f32
    %49 = vector.broadcast %cst_34 : f32 to vector<4x1xf32>
    %50 = arith.addf %46, %49 : vector<4x1xf32>
    %51 = math.rsqrt %50 : vector<4x1xf32>
    %52 = vector.broadcast %51 : vector<4x1xf32> to vector<4x768xf32>
    %53 = arith.mulf %48, %52 : vector<4x768xf32>
    %54 = vector.broadcast %27 : vector<4x1xf32> to vector<4x768xf32>
    %55 = arith.mulf %53, %54 : vector<4x768xf32>
    %56 = vector.broadcast %29 : vector<4x1xf32> to vector<4x768xf32>
    %57 = arith.addf %55, %56 : vector<4x768xf32>
    %58 = vector.broadcast %0 : vector<1x768xf32> to vector<4x768xf32>
    %59 = arith.mulf %57, %58 : vector<4x768xf32>
    %c0_35 = arith.constant 0 : index
    %c0_36 = arith.constant 0 : index
    %60 = vector.load %arg8[%c0_35, %c0_36] : memref<4x1024xbf16, #tpu.memory_space<vmem>>, vector<4x128xbf16>
    tpu.vector_store %arg8[%c0_35, %c0_36], %2 {strides = array<i32>} : memref<4x1024xbf16, #tpu.memory_space<vmem>>, vector<4x128xbf16>,
    %c0_37 = arith.constant 0 : index
    %c896 = arith.constant 896 : index
    %61 = vector.load %arg8[%c0_37, %c896] : memref<4x1024xbf16, #tpu.memory_space<vmem>>, vector<4x128xbf16>
    tpu.vector_store %arg8[%c0_37, %c896], %2 {strides = array<i32>} : memref<4x1024xbf16, #tpu.memory_space<vmem>>, vector<4x128xbf16>,
    %62 = arith.truncf %59 : vector<4x768xf32> to vector<4x768xbf16>
    %c0_38 = arith.constant 0 : index
    %c128_39 = arith.constant 128 : index
    %63 = vector.load %arg8[%c0_38, %c128_39] : memref<4x1024xbf16, #tpu.memory_space<vmem>>, vector<4x768xbf16>
    tpu.vector_store %arg8[%c0_38, %c128_39], %62 {strides = array<i32>} : memref<4x1024xbf16, #tpu.memory_space<vmem>>, vector<4x768xbf16>,
    %c0_40 = arith.constant 0 : index
    %c109_41 = arith.constant 109 : index
    %64 = vector.load %arg2[%c0_40, %c109_41] : memref<4x1024xbf16, #tpu.memory_space<vmem>>, vector<4x768xbf16>
    %c0_42 = arith.constant 0 : index
    %c0_43 = arith.constant 0 : index
    %65 = vector.load %arg10[%c0_42, %c0_43] : memref<72x768xbf16, #tpu.memory_space<vmem>>, vector<4x768xbf16>
    tpu.vector_store %arg10[%c0_42, %c0_43], %64 {strides = array<i32>} : memref<72x768xbf16, #tpu.memory_space<vmem>>, vector<4x768xbf16>,
    %c0_44 = arith.constant 0 : index
    %c110_45 = arith.constant 110 : index
    %66 = vector.load %arg2[%c0_44, %c110_45] : memref<4x1024xbf16, #tpu.memory_space<vmem>>, vector<4x768xbf16>
    %c4 = arith.constant 4 : index
    %c0_46 = arith.constant 0 : index
    %67 = vector.load %arg10[%c4, %c0_46] : memref<72x768xbf16, #tpu.memory_space<vmem>>, vector<4x768xbf16>
    tpu.vector_store %arg10[%c4, %c0_46], %66 {strides = array<i32>} : memref<72x768xbf16, #tpu.memory_space<vmem>>, vector<4x768xbf16>,
    %c0_47 = arith.constant 0 : index
    %c111_48 = arith.constant 111 : index
    %68 = vector.load %arg2[%c0_47, %c111_48] : memref<4x1024xbf16, #tpu.memory_space<vmem>>, vector<4x768xbf16>
    %c8_49 = arith.constant 8 : index
    %c0_50 = arith.constant 0 : index
    %69 = vector.load %arg10[%c8_49, %c0_50] : memref<72x768xbf16, #tpu.memory_space<vmem>>, vector<4x768xbf16>
    tpu.vector_store %arg10[%c8_49, %c0_50], %68 {strides = array<i32>} : memref<72x768xbf16, #tpu.memory_space<vmem>>, vector<4x768xbf16>,
    %c0_51 = arith.constant 0 : index
    %c127_52 = arith.constant 127 : index
    %70 = vector.load %arg2[%c0_51, %c127_52] : memref<4x1024xbf16, #tpu.memory_space<vmem>>, vector<4x768xbf16>
    %c12 = arith.constant 12 : index
    %c0_53 = arith.constant 0 : index
    %71 = vector.load %arg10[%c12, %c0_53] : memref<72x768xbf16, #tpu.memory_space<vmem>>, vector<4x768xbf16>
    tpu.vector_store %arg10[%c12, %c0_53], %70 {strides = array<i32>} : memref<72x768xbf16, #tpu.memory_space<vmem>>, vector<4x768xbf16>,
    %c0_54 = arith.constant 0 : index
    %c128_55 = arith.constant 128 : index
    %72 = vector.load %arg2[%c0_54, %c128_55] : memref<4x1024xbf16, #tpu.memory_space<vmem>>, vector<4x768xbf16>
    %c16_56 = arith.constant 16 : index
    %c0_57 = arith.constant 0 : index
    %73 = vector.load %arg10[%c16_56, %c0_57] : memref<72x768xbf16, #tpu.memory_space<vmem>>, vector<4x768xbf16>
    tpu.vector_store %arg10[%c16_56, %c0_57], %72 {strides = array<i32>} : memref<72x768xbf16, #tpu.memory_space<vmem>>, vector<4x768xbf16>,
    %c0_58 = arith.constant 0 : index
    %c129_59 = arith.constant 129 : index
    %74 = vector.load %arg2[%c0_58, %c129_59] : memref<4x1024xbf16, #tpu.memory_space<vmem>>, vector<4x768xbf16>
    %c20 = arith.constant 20 : index
    %c0_60 = arith.constant 0 : index
    %75 = vector.load %arg10[%c20, %c0_60] : memref<72x768xbf16, #tpu.memory_space<vmem>>, vector<4x768xbf16>
    tpu.vector_store %arg10[%c20, %c0_60], %74 {strides = array<i32>} : memref<72x768xbf16, #tpu.memory_space<vmem>>, vector<4x768xbf16>,
    %c0_61 = arith.constant 0 : index
    %c145_62 = arith.constant 145 : index
    %76 = vector.load %arg2[%c0_61, %c145_62] : memref<4x1024xbf16, #tpu.memory_space<vmem>>, vector<4x768xbf16>
    %c24_63 = arith.constant 24 : index
    %c0_64 = arith.constant 0 : index
    %77 = vector.load %arg10[%c24_63, %c0_64] : memref<72x768xbf16, #tpu.memory_space<vmem>>, vector<4x768xbf16>
    tpu.vector_store %arg10[%c24_63, %c0_64], %76 {strides = array<i32>} : memref<72x768xbf16, #tpu.memory_space<vmem>>, vector<4x768xbf16>,
    %c0_65 = arith.constant 0 : index
    %c146_66 = arith.constant 146 : index
    %78 = vector.load %arg2[%c0_65, %c146_66] : memref<4x1024xbf16, #tpu.memory_space<vmem>>, vector<4x768xbf16>
    %c28 = arith.constant 28 : index
    %c0_67 = arith.constant 0 : index
    %79 = vector.load %arg10[%c28, %c0_67] : memref<72x768xbf16, #tpu.memory_space<vmem>>, vector<4x768xbf16>
    tpu.vector_store %arg10[%c28, %c0_67], %78 {strides = array<i32>} : memref<72x768xbf16, #tpu.memory_space<vmem>>, vector<4x768xbf16>,
    %c0_68 = arith.constant 0 : index
    %c147_69 = arith.constant 147 : index
    %80 = vector.load %arg2[%c0_68, %c147_69] : memref<4x1024xbf16, #tpu.memory_space<vmem>>, vector<4x768xbf16>
    %c32_70 = arith.constant 32 : index
    %c0_71 = arith.constant 0 : index
    %81 = vector.load %arg10[%c32_70, %c0_71] : memref<72x768xbf16, #tpu.memory_space<vmem>>, vector<4x768xbf16>
    tpu.vector_store %arg10[%c32_70, %c0_71], %80 {strides = array<i32>} : memref<72x768xbf16, #tpu.memory_space<vmem>>, vector<4x768xbf16>,
    %c0_72 = arith.constant 0 : index
    %c109_73 = arith.constant 109 : index
    %82 = vector.load %arg8[%c0_72, %c109_73] : memref<4x1024xbf16, #tpu.memory_space<vmem>>, vector<4x768xbf16>
    %c36 = arith.constant 36 : index
    %c0_74 = arith.constant 0 : index
    %83 = vector.load %arg10[%c36, %c0_74] : memref<72x768xbf16, #tpu.memory_space<vmem>>, vector<4x768xbf16>
    tpu.vector_store %arg10[%c36, %c0_74], %82 {strides = array<i32>} : memref<72x768xbf16, #tpu.memory_space<vmem>>, vector<4x768xbf16>,
    %c0_75 = arith.constant 0 : index
    %c110_76 = arith.constant 110 : index
    %84 = vector.load %arg8[%c0_75, %c110_76] : memref<4x1024xbf16, #tpu.memory_space<vmem>>, vector<4x768xbf16>
    %c40_77 = arith.constant 40 : index
    %c0_78 = arith.constant 0 : index
    %85 = vector.load %arg10[%c40_77, %c0_78] : memref<72x768xbf16, #tpu.memory_space<vmem>>, vector<4x768xbf16>
    tpu.vector_store %arg10[%c40_77, %c0_78], %84 {strides = array<i32>} : memref<72x768xbf16, #tpu.memory_space<vmem>>, vector<4x768xbf16>,
    %c0_79 = arith.constant 0 : index
    %c111_80 = arith.constant 111 : index
    %86 = vector.load %arg8[%c0_79, %c111_80] : memref<4x1024xbf16, #tpu.memory_space<vmem>>, vector<4x768xbf16>
    %c44 = arith.constant 44 : index
    %c0_81 = arith.constant 0 : index
    %87 = vector.load %arg10[%c44, %c0_81] : memref<72x768xbf16, #tpu.memory_space<vmem>>, vector<4x768xbf16>
    tpu.vector_store %arg10[%c44, %c0_81], %86 {strides = array<i32>} : memref<72x768xbf16, #tpu.memory_space<vmem>>, vector<4x768xbf16>,
    %c0_82 = arith.constant 0 : index
    %c127_83 = arith.constant 127 : index
    %88 = vector.load %arg8[%c0_82, %c127_83] : memref<4x1024xbf16, #tpu.memory_space<vmem>>, vector<4x768xbf16>
    %c48_84 = arith.constant 48 : index
    %c0_85 = arith.constant 0 : index
    %89 = vector.load %arg10[%c48_84, %c0_85] : memref<72x768xbf16, #tpu.memory_space<vmem>>, vector<4x768xbf16>
    tpu.vector_store %arg10[%c48_84, %c0_85], %88 {strides = array<i32>} : memref<72x768xbf16, #tpu.memory_space<vmem>>, vector<4x768xbf16>,
    %c0_86 = arith.constant 0 : index
    %c128_87 = arith.constant 128 : index
    %90 = vector.load %arg8[%c0_86, %c128_87] : memref<4x1024xbf16, #tpu.memory_space<vmem>>, vector<4x768xbf16>
    %c52 = arith.constant 52 : index
    %c0_88 = arith.constant 0 : index
    %91 = vector.load %arg10[%c52, %c0_88] : memref<72x768xbf16, #tpu.memory_space<vmem>>, vector<4x768xbf16>
    tpu.vector_store %arg10[%c52, %c0_88], %90 {strides = array<i32>} : memref<72x768xbf16, #tpu.memory_space<vmem>>, vector<4x768xbf16>,
    %c0_89 = arith.constant 0 : index
    %c129_90 = arith.constant 129 : index
    %92 = vector.load %arg8[%c0_89, %c129_90] : memref<4x1024xbf16, #tpu.memory_space<vmem>>, vector<4x768xbf16>
    %c56_91 = arith.constant 56 : index
    %c0_92 = arith.constant 0 : index
    %93 = vector.load %arg10[%c56_91, %c0_92] : memref<72x768xbf16, #tpu.memory_space<vmem>>, vector<4x768xbf16>
    tpu.vector_store %arg10[%c56_91, %c0_92], %92 {strides = array<i32>} : memref<72x768xbf16, #tpu.memory_space<vmem>>, vector<4x768xbf16>,
    %c0_93 = arith.constant 0 : index
    %c145_94 = arith.constant 145 : index
    %94 = vector.load %arg8[%c0_93, %c145_94] : memref<4x1024xbf16, #tpu.memory_space<vmem>>, vector<4x768xbf16>
    %c60 = arith.constant 60 : index
    %c0_95 = arith.constant 0 : index
    %95 = vector.load %arg10[%c60, %c0_95] : memref<72x768xbf16, #tpu.memory_space<vmem>>, vector<4x768xbf16>
    tpu.vector_store %arg10[%c60, %c0_95], %94 {strides = array<i32>} : memref<72x768xbf16, #tpu.memory_space<vmem>>, vector<4x768xbf16>,
    %c0_96 = arith.constant 0 : index
    %c146_97 = arith.constant 146 : index
    %96 = vector.load %arg8[%c0_96, %c146_97] : memref<4x1024xbf16, #tpu.memory_space<vmem>>, vector<4x768xbf16>
    %c64_98 = arith.constant 64 : index
    %c0_99 = arith.constant 0 : index
    %97 = vector.load %arg10[%c64_98, %c0_99] : memref<72x768xbf16, #tpu.memory_space<vmem>>, vector<4x768xbf16>
    tpu.vector_store %arg10[%c64_98, %c0_99], %96 {strides = array<i32>} : memref<72x768xbf16, #tpu.memory_space<vmem>>, vector<4x768xbf16>,
    %c0_100 = arith.constant 0 : index
    %c147_101 = arith.constant 147 : index
    %98 = vector.load %arg8[%c0_100, %c147_101] : memref<4x1024xbf16, #tpu.memory_space<vmem>>, vector<4x768xbf16>
    %c68 = arith.constant 68 : index
    %c0_102 = arith.constant 0 : index
    %99 = vector.load %arg10[%c68, %c0_102] : memref<72x768xbf16, #tpu.memory_space<vmem>>, vector<4x768xbf16>
    tpu.vector_store %arg10[%c68, %c0_102], %98 {strides = array<i32>} : memref<72x768xbf16, #tpu.memory_space<vmem>>, vector<4x768xbf16>,
    %c0_103 = arith.constant 0 : index
    %c0_104 = arith.constant 0 : index
    %100 = vector.load %arg4[%c0_103, %c0_104] : memref<4x72xbf16, #tpu.memory_space<vmem>>, vector<4x72xbf16>
    %c0_105 = arith.constant 0 : index
    %c0_106 = arith.constant 0 : index
    %101 = vector.load %arg10[%c0_105, %c0_106] : memref<72x768xbf16, #tpu.memory_space<vmem>>, vector<72x768xbf16>
    %cst_107 = arith.constant dense<0.000000e+00> : vector<4x768xf32>
    %102 = tpu.matmul %100, %101, %cst_107 {dimension_numbers = #tpu.dot_dimension_numbers<[1], [0], [0], [1], [0, 0, 1, 1], [], []>} : vector<4x72xbf16>, vector<72x768xbf16>, vector<4x768xf32> -> vector<4x768xf32>
    %103 = vector.extract_strided_slice %1 {offsets = [1, 0, 0, 0], sizes = [1, 1, 4, 1], strides = [1, 1, 1, 1]} : vector<3x3x4x1xf32> to vector<1x1x4x1xf32>
    %104 = vector.shape_cast %103 : vector<1x1x4x1xf32> to vector<4x1xf32>
    %105 = vector.extract_strided_slice %1 {offsets = [1, 1, 0, 0], sizes = [1, 1, 4, 1], strides = [1, 1, 1, 1]} : vector<3x3x4x1xf32> to vector<1x1x4x1xf32>
    %106 = vector.shape_cast %105 : vector<1x1x4x1xf32> to vector<4x1xf32>
    %107 = vector.extract_strided_slice %1 {offsets = [1, 2, 0, 0], sizes = [1, 1, 4, 1], strides = [1, 1, 1, 1]} : vector<3x3x4x1xf32> to vector<1x1x4x1xf32>
    %108 = vector.shape_cast %107 : vector<1x1x4x1xf32> to vector<4x1xf32>
    %109 = vector.broadcast %104 : vector<4x1xf32> to vector<4x768xf32>
    %110 = arith.addf %102, %109 : vector<4x768xf32>
    %cst_108 = arith.constant 0.000000e+00 : f32
    %111 = vector.broadcast %cst_108 : f32 to vector<4x768xf32>
    %112 = arith.maximumf %110, %111 : vector<4x768xf32>
    %113 = vector.broadcast %0 : vector<1x768xf32> to vector<4x768xf32>
    %114 = arith.mulf %112, %113 : vector<4x768xf32>
    %cst_109 = arith.constant dense<0.000000e+00> : vector<4xf32>
    %115 = vector.multi_reduction <add>, %114, %cst_109 [1] : vector<4x768xf32> to vector<4xf32>
    %116 = vector.shape_cast %115 : vector<4xf32> to vector<4x1xf32>
    %cst_110 = arith.constant 0.001953125 : f32
    %117 = vector.broadcast %cst_110 : f32 to vector<4x1xf32>
    %118 = arith.mulf %116, %117 : vector<4x1xf32>
    %119 = arith.mulf %114, %114 : vector<4x768xf32>
    %cst_111 = arith.constant dense<0.000000e+00> : vector<4xf32>
    %120 = vector.multi_reduction <add>, %119, %cst_111 [1] : vector<4x768xf32> to vector<4xf32>
    %121 = vector.shape_cast %120 : vector<4xf32> to vector<4x1xf32>
    %cst_112 = arith.constant 0.001953125 : f32
    %122 = vector.broadcast %cst_112 : f32 to vector<4x1xf32>
    %123 = arith.mulf %121, %122 : vector<4x1xf32>
    %124 = arith.mulf %118, %118 : vector<4x1xf32>
    %125 = arith.subf %123, %124 : vector<4x1xf32>
    %126 = vector.broadcast %118 : vector<4x1xf32> to vector<4x768xf32>
    %127 = arith.subf %114, %126 : vector<4x768xf32>
    %cst_113 = arith.constant 9.99999974E-6 : f32
    %128 = vector.broadcast %cst_113 : f32 to vector<4x1xf32>
    %129 = arith.addf %125, %128 : vector<4x1xf32>
    %130 = math.rsqrt %129 : vector<4x1xf32>
    %131 = vector.broadcast %130 : vector<4x1xf32> to vector<4x768xf32>
    %132 = arith.mulf %127, %131 : vector<4x768xf32>
    %133 = vector.broadcast %106 : vector<4x1xf32> to vector<4x768xf32>
    %134 = arith.mulf %132, %133 : vector<4x768xf32>
    %135 = vector.broadcast %108 : vector<4x1xf32> to vector<4x768xf32>
    %136 = arith.addf %134, %135 : vector<4x768xf32>
    %137 = vector.broadcast %0 : vector<1x768xf32> to vector<4x768xf32>
    %138 = arith.mulf %136, %137 : vector<4x768xf32>
    %c0_114 = arith.constant 0 : index
    %c0_115 = arith.constant 0 : index
    %139 = vector.load %arg9[%c0_114, %c0_115] : memref<4x1024xbf16, #tpu.memory_space<vmem>>, vector<4x128xbf16>
    tpu.vector_store %arg9[%c0_114, %c0_115], %2 {strides = array<i32>} : memref<4x1024xbf16, #tpu.memory_space<vmem>>, vector<4x128xbf16>,
    %c0_116 = arith.constant 0 : index
    %c896_117 = arith.constant 896 : index
    %140 = vector.load %arg9[%c0_116, %c896_117] : memref<4x1024xbf16, #tpu.memory_space<vmem>>, vector<4x128xbf16>
    tpu.vector_store %arg9[%c0_116, %c896_117], %2 {strides = array<i32>} : memref<4x1024xbf16, #tpu.memory_space<vmem>>, vector<4x128xbf16>,
    %141 = arith.truncf %138 : vector<4x768xf32> to vector<4x768xbf16>
    %c0_118 = arith.constant 0 : index
    %c128_119 = arith.constant 128 : index
    %142 = vector.load %arg9[%c0_118, %c128_119] : memref<4x1024xbf16, #tpu.memory_space<vmem>>, vector<4x768xbf16>
    tpu.vector_store %arg9[%c0_118, %c128_119], %141 {strides = array<i32>} : memref<4x1024xbf16, #tpu.memory_space<vmem>>, vector<4x768xbf16>,
    %c0_120 = arith.constant 0 : index
    %c109_121 = arith.constant 109 : index
    %143 = vector.load %arg9[%c0_120, %c109_121] : memref<4x1024xbf16, #tpu.memory_space<vmem>>, vector<4x768xbf16>
    %c0_122 = arith.constant 0 : index
    %c0_123 = arith.constant 0 : index
    %144 = vector.load %arg10[%c0_122, %c0_123] : memref<72x768xbf16, #tpu.memory_space<vmem>>, vector<4x768xbf16>
    tpu.vector_store %arg10[%c0_122, %c0_123], %143 {strides = array<i32>} : memref<72x768xbf16, #tpu.memory_space<vmem>>, vector<4x768xbf16>,
    %c0_124 = arith.constant 0 : index
    %c110_125 = arith.constant 110 : index
    %145 = vector.load %arg9[%c0_124, %c110_125] : memref<4x1024xbf16, #tpu.memory_space<vmem>>, vector<4x768xbf16>
    %c4_126 = arith.constant 4 : index
    %c0_127 = arith.constant 0 : index
    %146 = vector.load %arg10[%c4_126, %c0_127] : memref<72x768xbf16, #tpu.memory_space<vmem>>, vector<4x768xbf16>
    tpu.vector_store %arg10[%c4_126, %c0_127], %145 {strides = array<i32>} : memref<72x768xbf16, #tpu.memory_space<vmem>>, vector<4x768xbf16>,
    %c0_128 = arith.constant 0 : index
    %c111_129 = arith.constant 111 : index
    %147 = vector.load %arg9[%c0_128, %c111_129] : memref<4x1024xbf16, #tpu.memory_space<vmem>>, vector<4x768xbf16>
    %c8_130 = arith.constant 8 : index
    %c0_131 = arith.constant 0 : index
    %148 = vector.load %arg10[%c8_130, %c0_131] : memref<72x768xbf16, #tpu.memory_space<vmem>>, vector<4x768xbf16>
    tpu.vector_store %arg10[%c8_130, %c0_131], %147 {strides = array<i32>} : memref<72x768xbf16, #tpu.memory_space<vmem>>, vector<4x768xbf16>,
    %c0_132 = arith.constant 0 : index
    %c127_133 = arith.constant 127 : index
    %149 = vector.load %arg9[%c0_132, %c127_133] : memref<4x1024xbf16, #tpu.memory_space<vmem>>, vector<4x768xbf16>
    %c12_134 = arith.constant 12 : index
    %c0_135 = arith.constant 0 : index
    %150 = vector.load %arg10[%c12_134, %c0_135] : memref<72x768xbf16, #tpu.memory_space<vmem>>, vector<4x768xbf16>
    tpu.vector_store %arg10[%c12_134, %c0_135], %149 {strides = array<i32>} : memref<72x768xbf16, #tpu.memory_space<vmem>>, vector<4x768xbf16>,
    %c0_136 = arith.constant 0 : index
    %c128_137 = arith.constant 128 : index
    %151 = vector.load %arg9[%c0_136, %c128_137] : memref<4x1024xbf16, #tpu.memory_space<vmem>>, vector<4x768xbf16>
    %c16_138 = arith.constant 16 : index
    %c0_139 = arith.constant 0 : index
    %152 = vector.load %arg10[%c16_138, %c0_139] : memref<72x768xbf16, #tpu.memory_space<vmem>>, vector<4x768xbf16>
    tpu.vector_store %arg10[%c16_138, %c0_139], %151 {strides = array<i32>} : memref<72x768xbf16, #tpu.memory_space<vmem>>, vector<4x768xbf16>,
    %c0_140 = arith.constant 0 : index
    %c129_141 = arith.constant 129 : index
    %153 = vector.load %arg9[%c0_140, %c129_141] : memref<4x1024xbf16, #tpu.memory_space<vmem>>, vector<4x768xbf16>
    %c20_142 = arith.constant 20 : index
    %c0_143 = arith.constant 0 : index
    %154 = vector.load %arg10[%c20_142, %c0_143] : memref<72x768xbf16, #tpu.memory_space<vmem>>, vector<4x768xbf16>
    tpu.vector_store %arg10[%c20_142, %c0_143], %153 {strides = array<i32>} : memref<72x768xbf16, #tpu.memory_space<vmem>>, vector<4x768xbf16>,
    %c0_144 = arith.constant 0 : index
    %c145_145 = arith.constant 145 : index
    %155 = vector.load %arg9[%c0_144, %c145_145] : memref<4x1024xbf16, #tpu.memory_space<vmem>>, vector<4x768xbf16>
    %c24_146 = arith.constant 24 : index
    %c0_147 = arith.constant 0 : index
    %156 = vector.load %arg10[%c24_146, %c0_147] : memref<72x768xbf16, #tpu.memory_space<vmem>>, vector<4x768xbf16>
    tpu.vector_store %arg10[%c24_146, %c0_147], %155 {strides = array<i32>} : memref<72x768xbf16, #tpu.memory_space<vmem>>, vector<4x768xbf16>,
    %c0_148 = arith.constant 0 : index
    %c146_149 = arith.constant 146 : index
    %157 = vector.load %arg9[%c0_148, %c146_149] : memref<4x1024xbf16, #tpu.memory_space<vmem>>, vector<4x768xbf16>
    %c28_150 = arith.constant 28 : index
    %c0_151 = arith.constant 0 : index
    %158 = vector.load %arg10[%c28_150, %c0_151] : memref<72x768xbf16, #tpu.memory_space<vmem>>, vector<4x768xbf16>
    tpu.vector_store %arg10[%c28_150, %c0_151], %157 {strides = array<i32>} : memref<72x768xbf16, #tpu.memory_space<vmem>>, vector<4x768xbf16>,
    %c0_152 = arith.constant 0 : index
    %c147_153 = arith.constant 147 : index
    %159 = vector.load %arg9[%c0_152, %c147_153] : memref<4x1024xbf16, #tpu.memory_space<vmem>>, vector<4x768xbf16>
    %c32_154 = arith.constant 32 : index
    %c0_155 = arith.constant 0 : index
    %160 = vector.load %arg10[%c32_154, %c0_155] : memref<72x768xbf16, #tpu.memory_space<vmem>>, vector<4x768xbf16>
    tpu.vector_store %arg10[%c32_154, %c0_155], %159 {strides = array<i32>} : memref<72x768xbf16, #tpu.memory_space<vmem>>, vector<4x768xbf16>,
    %c0_156 = arith.constant 0 : index
    %c0_157 = arith.constant 0 : index
    %161 = vector.load %arg5[%c0_156, %c0_157] : memref<4x36xbf16, #tpu.memory_space<vmem>>, vector<4x36xbf16>
    %c0_158 = arith.constant 0 : index
    %c0_159 = arith.constant 0 : index
    %162 = vector.load %arg10[%c0_158, %c0_159] : memref<72x768xbf16, #tpu.memory_space<vmem>>, vector<36x768xbf16>
    %cst_160 = arith.constant dense<0.000000e+00> : vector<4x768xf32>
    %163 = tpu.matmul %161, %162, %cst_160 {dimension_numbers = #tpu.dot_dimension_numbers<[1], [0], [0], [1], [0, 0, 1, 1], [], []>} : vector<4x36xbf16>, vector<36x768xbf16>, vector<4x768xf32> -> vector<4x768xf32>
    %164 = vector.extract_strided_slice %1 {offsets = [2, 0, 0, 0], sizes = [1, 1, 4, 1], strides = [1, 1, 1, 1]} : vector<3x3x4x1xf32> to vector<1x1x4x1xf32>
    %165 = vector.shape_cast %164 : vector<1x1x4x1xf32> to vector<4x1xf32>
    %166 = vector.extract_strided_slice %1 {offsets = [2, 1, 0, 0], sizes = [1, 1, 4, 1], strides = [1, 1, 1, 1]} : vector<3x3x4x1xf32> to vector<1x1x4x1xf32>
    %167 = vector.shape_cast %166 : vector<1x1x4x1xf32> to vector<4x1xf32>
    %168 = vector.extract_strided_slice %1 {offsets = [2, 2, 0, 0], sizes = [1, 1, 4, 1], strides = [1, 1, 1, 1]} : vector<3x3x4x1xf32> to vector<1x1x4x1xf32>
    %169 = vector.shape_cast %168 : vector<1x1x4x1xf32> to vector<4x1xf32>
    %170 = vector.broadcast %165 : vector<4x1xf32> to vector<4x768xf32>
    %171 = arith.addf %163, %170 : vector<4x768xf32>
    %cst_161 = arith.constant 0.000000e+00 : f32
    %172 = vector.broadcast %cst_161 : f32 to vector<4x768xf32>
    %173 = arith.maximumf %171, %172 : vector<4x768xf32>
    %174 = vector.broadcast %0 : vector<1x768xf32> to vector<4x768xf32>
    %175 = arith.mulf %173, %174 : vector<4x768xf32>
    %cst_162 = arith.constant dense<0.000000e+00> : vector<4xf32>
    %176 = vector.multi_reduction <add>, %175, %cst_162 [1] : vector<4x768xf32> to vector<4xf32>
    %177 = vector.shape_cast %176 : vector<4xf32> to vector<4x1xf32>
    %cst_163 = arith.constant 0.001953125 : f32
    %178 = vector.broadcast %cst_163 : f32 to vector<4x1xf32>
    %179 = arith.mulf %177, %178 : vector<4x1xf32>
    %180 = arith.mulf %175, %175 : vector<4x768xf32>
    %cst_164 = arith.constant dense<0.000000e+00> : vector<4xf32>
    %181 = vector.multi_reduction <add>, %180, %cst_164 [1] : vector<4x768xf32> to vector<4xf32>
    %182 = vector.shape_cast %181 : vector<4xf32> to vector<4x1xf32>
    %cst_165 = arith.constant 0.001953125 : f32
    %183 = vector.broadcast %cst_165 : f32 to vector<4x1xf32>
    %184 = arith.mulf %182, %183 : vector<4x1xf32>
    %185 = arith.mulf %179, %179 : vector<4x1xf32>
    %186 = arith.subf %184, %185 : vector<4x1xf32>
    %187 = vector.broadcast %179 : vector<4x1xf32> to vector<4x768xf32>
    %188 = arith.subf %175, %187 : vector<4x768xf32>
    %cst_166 = arith.constant 9.99999974E-6 : f32
    %189 = vector.broadcast %cst_166 : f32 to vector<4x1xf32>
    %190 = arith.addf %186, %189 : vector<4x1xf32>
    %191 = math.rsqrt %190 : vector<4x1xf32>
    %192 = vector.broadcast %191 : vector<4x1xf32> to vector<4x768xf32>
    %193 = arith.mulf %188, %192 : vector<4x768xf32>
    %194 = vector.broadcast %167 : vector<4x1xf32> to vector<4x768xf32>
    %195 = arith.mulf %193, %194 : vector<4x768xf32>
    %196 = vector.broadcast %169 : vector<4x1xf32> to vector<4x768xf32>
    %197 = arith.addf %195, %196 : vector<4x768xf32>
    %198 = vector.broadcast %0 : vector<1x768xf32> to vector<4x768xf32>
    %199 = arith.mulf %197, %198 : vector<4x768xf32>
    %c0_167 = arith.constant 0 : index
    %c0_168 = arith.constant 0 : index
    %200 = vector.load %arg7[%c0_167, %c0_168] : memref<4x768xf32, #tpu.memory_space<vmem>>, vector<4x768xf32>
    tpu.vector_store %arg7[%c0_167, %c0_168], %199 {strides = array<i32>} : memref<4x768xf32, #tpu.memory_space<vmem>>, vector<4x768xf32>,
    return
  }
}

</mosaic_0001>

<llo_original>
// kernel: up_forward.1
$region0: #{up_forward.1}
  #allocation0 [shape = 'u32[]', space=smem, size = 0x4, offset = 0x4, fixed_abs, tag = 'smem constant byte address 0x4 - core index']
  #allocation1 [shape = 'u32[144,128]{1,0:T(1,128)}', space=vmem, size = 0x12000, scoped, tag = 'internal scratch']
  #allocation2 [shape = 'bf16[4,1024]{1,0:T(4,128)(2,1)}', space=vmem, size = 0x2000, scoped, tag = 'scratch operand']
  #allocation3 [shape = 'bf16[4,1024]{1,0:T(4,128)(2,1)}', space=vmem, size = 0x2000, scoped, tag = 'scratch operand']
  #allocation4 [shape = 'bf16[72,768]{1,0:T(8,128)(2,1)}', space=vmem, size = 0x1b000, scoped, tag = 'scratch operand']
  %s0 = inlined_call_operand.vmem [shape: f32[1,768], index: 0, kind: input, shape index: {}]
  %s1 = inlined_call_operand.vmem [shape: bf16[8,1024], index: 1, kind: input, shape index: {}]
  %s2 = inlined_call_operand.vmem [shape: bf16[4,1024], index: 2, kind: input, shape index: {}]
  %s3 = inlined_call_operand.vmem [shape: bf16[4,72], index: 3, kind: input, shape index: {}]
  %s4 = inlined_call_operand.vmem [shape: bf16[4,72], index: 4, kind: input, shape index: {}]
  %s5 = inlined_call_operand.vmem [shape: bf16[4,36], index: 5, kind: input, shape index: {}]
  %s6 = inlined_call_operand.vmem [shape: f32[3,3,4,1], index: 6, kind: input, shape index: {}]
  %s7 = inlined_call_operand.vmem [shape: f32[4,768], index: 7, kind: output, shape index: {}]
  %s8 = sld [smem:[#allocation0]]
  $region38: #{up_forward.1} parent=0
    _
  %s10 = ssub.s32 1, %s8
  %s11 = scalar_select 0, %s10, %s8
  // Predicated region
  $region2: #{up_forward.1} parent=0 // pred_check
    _
  $region3: #{up_forward.1} parent=0 // pred_check_branch
    %13 = sbr.rel (0) target = $region5
  $region4: #{up_forward.1} parent=0 // pred_region
    _
  $region5: #{up_forward.1} parent=0 // pred_fallthru
    _
  // Predicated region
  $region6: #{up_forward.1} parent=0 // pred_check
    _
  $region7: #{up_forward.1} parent=0 // pred_check_branch
    %15 = sbr.rel (0) target = $region9
  $region8: #{up_forward.1} parent=0 // pred_region
    _
  $region9: #{up_forward.1} parent=0 // pred_fallthru
    _
  // Predicated region
  $region10: #{up_forward.1} parent=0 // pred_check
    _
  $region11: #{up_forward.1} parent=0 // pred_check_branch
    %17 = sbr.rel (0) target = $region13
  $region12: #{up_forward.1} parent=0 // pred_region
    _
  $region13: #{up_forward.1} parent=0 // pred_fallthru
    _
  // Predicated region
  $region14: #{up_forward.1} parent=0 // pred_check
    _
  $region15: #{up_forward.1} parent=0 // pred_check_branch
    %19 = sbr.rel (0) target = $region17
  $region16: #{up_forward.1} parent=0 // pred_region
    _
  $region17: #{up_forward.1} parent=0 // pred_fallthru
    _
  // Predicated region
  $region18: #{up_forward.1} parent=0 // pred_check
    _
  $region19: #{up_forward.1} parent=0 // pred_check_branch
    %21 = sbr.rel (0) target = $region21
  $region20: #{up_forward.1} parent=0 // pred_region
    _
  $region21: #{up_forward.1} parent=0 // pred_fallthru
    _
  // Predicated region
  $region22: #{up_forward.1} parent=0 // pred_check
    _
  $region23: #{up_forward.1} parent=0 // pred_check_branch
    %23 = sbr.rel (0) target = $region25
  $region24: #{up_forward.1} parent=0 // pred_region
    _
  $region25: #{up_forward.1} parent=0 // pred_fallthru
    _
  // Predicated region
  $region26: #{up_forward.1} parent=0 // pred_check
    _
  $region27: #{up_forward.1} parent=0 // pred_check_branch
    %25 = sbr.rel (0) target = $region29
  $region28: #{up_forward.1} parent=0 // pred_region
    _
  $region29: #{up_forward.1} parent=0 // pred_fallthru
    _
  %v27 = vld [vmem:[%s0] sm:$0x3f]
  %v28 = vld [vmem:[%s6] sm:$0xf]
  %v29 = vld [vmem:[%s6 + $0x4] sm:$0xf]
  %v30 = vld [vmem:[%s6 + $0x8] sm:$0xf]
  %v31 = vld [vmem:[%s6 + $0xc] sm:$0xf]
  %v32 = vld [vmem:[%s6 + $0x10] sm:$0xf]
  %v33 = vld [vmem:[%s6 + $0x14] sm:$0xf]
  %v34 = vld [vmem:[%s6 + $0x18] sm:$0xf]
  %v35 = vld [vmem:[%s6 + $0x1c] sm:$0xf]
  %v36 = vld [vmem:[%s6 + $0x20] sm:$0xf]
  %v37 = vld [vmem:[%s1] sm:$0xff]
  %v38 = vld [vmem:[%s1 + $0x8] sm:$0xff]
  %v39 = vld [vmem:[%s1 + $0x10] sm:$0xff]
  %v40 = vld [vmem:[%s1 + $0x18] sm:$0xf]
  %45 = vrot.lane.b32.xlu0 %v37, 19
  %v46 = vpop.permute.xlu0 %45
  %47 = vrot.lane.b32.xlu0 %v38, 19
  %v48 = vpop.permute.xlu0 %47
  %49 = vrot.lane.b32.xlu0 %v39, 19
  %v50 = vpop.permute.xlu0 %49
  %51 = vrot.lane.b32.xlu0 %v40, 19
  %v52 = vpop.permute.xlu0 %51
  %v53 = vrot.slane %v46, 4
  %v54 = vrot.slane %v48, 4
  %v55 = vrot.slane %v50, 4
  %v56 = vrot.slane %v52, 4
  %vm57 = vcmask 1043456
  %v58 = vsel %vm57, %v53, %v54
  %vm59 = vcmask 154624
  %v60 = vsel %vm59, %v46, %v58
  %v61 = vsel %vm57, %v54, %v55
  %v62 = vsel %vm59, %v48, %v61
  %v63 = vsel %vm57, %v55, %v56
  %v64 = vsel %vm59, %v50, %v63
  %68 = vst [vmem:[#allocation4] sm:$0xff] %v60
  %69 = vst [vmem:[#allocation4 + $0x8] sm:$0xff] %v62
  %70 = vst [vmem:[#allocation4 + $0x10] sm:$0xff] %v64
  %v71 = vld [vmem:[%s1] sm:$0xff]
  %v72 = vld [vmem:[%s1 + $0x8] sm:$0xff]
  %v73 = vld [vmem:[%s1 + $0x10] sm:$0xff]
  %v74 = vld [vmem:[%s1 + $0x18] sm:$0xf]
  %79 = vrot.lane.b32.xlu0 %v71, 18
  %v80 = vpop.permute.xlu0 %79
  %81 = vrot.lane.b32.xlu0 %v72, 18
  %v82 = vpop.permute.xlu0 %81
  %83 = vrot.lane.b32.xlu0 %v73, 18
  %v84 = vpop.permute.xlu0 %83
  %85 = vrot.lane.b32.xlu0 %v74, 18
  %v86 = vpop.permute.xlu0 %85
  %v87 = vrot.slane %v80, 4
  %v88 = vrot.slane %v82, 4
  %v89 = vrot.slane %v84, 4
  %v90 = vrot.slane %v86, 4
  %v91 = vsel %vm57, %v87, %v88
  %vm92 = vcmask 146432
  %v93 = vsel %vm92, %v80, %v91
  %v94 = vsel %vm57, %v88, %v89
  %v95 = vsel %vm92, %v82, %v94
  %v96 = vsel %vm57, %v89, %v90
  %v97 = vsel %vm92, %v84, %v96
  %101 = vst [vmem:[#allocation4 + $0x18] sm:$0xff] %v93
  %102 = vst [vmem:[#allocation4 + $0x20] sm:$0xff] %v95
  %103 = vst [vmem:[#allocation4 + $0x28] sm:$0xff] %v97
  %v104 = vld [vmem:[%s1] sm:$0xff]
  %v105 = vld [vmem:[%s1 + $0x8] sm:$0xff]
  %v106 = vld [vmem:[%s1 + $0x10] sm:$0xff]
  %v107 = vld [vmem:[%s1 + $0x18] sm:$0xf]
  %112 = vrot.lane.b32.xlu0 %v104, 17
  %v113 = vpop.permute.xlu0 %112
  %114 = vrot.lane.b32.xlu0 %v105, 17
  %v115 = vpop.permute.xlu0 %114
  %116 = vrot.lane.b32.xlu0 %v106, 17
  %v117 = vpop.permute.xlu0 %116
  %118 = vrot.lane.b32.xlu0 %v107, 17
  %v119 = vpop.permute.xlu0 %118
  %v120 = vrot.slane %v113, 4
  %v121 = vrot.slane %v115, 4
  %v122 = vrot.slane %v117, 4
  %v123 = vrot.slane %v119, 4
  %v124 = vsel %vm57, %v120, %v121
  %vm125 = vcmask 138240
  %v126 = vsel %vm125, %v113, %v124
  %v127 = vsel %vm57, %v121, %v122
  %v128 = vsel %vm125, %v115, %v127
  %v129 = vsel %vm57, %v122, %v123
  %v130 = vsel %vm125, %v117, %v129
  %134 = vst [vmem:[#allocation4 + $0x30] sm:$0xff] %v126
  %135 = vst [vmem:[#allocation4 + $0x38] sm:$0xff] %v128
  %136 = vst [vmem:[#allocation4 + $0x40] sm:$0xff] %v130
  %v137 = vld [vmem:[%s1] sm:$0xff]
  %v138 = vld [vmem:[%s1 + $0x8] sm:$0xff]
  %v139 = vld [vmem:[%s1 + $0x10] sm:$0xff]
  %v140 = vld [vmem:[%s1 + $0x18] sm:$0xf]
  %145 = vrot.lane.b32.xlu0 %v137, 1
  %v146 = vpop.permute.xlu0 %145
  %147 = vrot.lane.b32.xlu0 %v138, 1
  %v148 = vpop.permute.xlu0 %147
  %149 = vrot.lane.b32.xlu0 %v139, 1
  %v150 = vpop.permute.xlu0 %149
  %151 = vrot.lane.b32.xlu0 %v140, 1
  %v152 = vpop.permute.xlu0 %151
  %v153 = vrot.slane %v146, 4
  %v154 = vrot.slane %v148, 4
  %v155 = vrot.slane %v150, 4
  %v156 = vrot.slane %v152, 4
  %v157 = vsel %vm57, %v153, %v154
  %vm158 = vcmask 7168
  %v159 = vsel %vm158, %v146, %v157
  %v160 = vsel %vm57, %v154, %v155
  %v161 = vsel %vm158, %v148, %v160
  %v162 = vsel %vm57, %v155, %v156
  %v163 = vsel %vm158, %v150, %v162
  %167 = vst [vmem:[#allocation4 + $0x48] sm:$0xff] %v159
  %168 = vst [vmem:[#allocation4 + $0x50] sm:$0xff] %v161
  %169 = vst [vmem:[#allocation4 + $0x58] sm:$0xff] %v163
  %v170 = vld [vmem:[%s1 + $0x4] sm:$0xff]
  %v171 = vld [vmem:[%s1 + $0xc] sm:$0xff]
  %v172 = vld [vmem:[%s1 + $0x14] sm:$0xff]
  %173 = vst [vmem:[#allocation4 + $0x60] sm:$0xff] %v170
  %174 = vst [vmem:[#allocation4 + $0x68] sm:$0xff] %v171
  %175 = vst [vmem:[#allocation4 + $0x70] sm:$0xff] %v172
  %v176 = vld [vmem:[%s1 + $0x4] sm:$0xff]
  %v177 = vld [vmem:[%s1 + $0xc] sm:$0xff]
  %v178 = vld [vmem:[%s1 + $0x14] sm:$0xff]
  %v179 = vld [vmem:[%s1 + $0x1c] sm:$0xf]
  %184 = vrot.lane.b32.xlu0 %v176, 127
  %v185 = vpop.permute.xlu0 %184
  %186 = vrot.lane.b32.xlu0 %v177, 127
  %v187 = vpop.permute.xlu0 %186
  %188 = vrot.lane.b32.xlu0 %v178, 127
  %v189 = vpop.permute.xlu0 %188
  %190 = vrot.lane.b32.xlu0 %v179, 127
  %v191 = vpop.permute.xlu0 %190
  %v192 = vrot.slane %v185, 4
  %v193 = vrot.slane %v187, 4
  %v194 = vrot.slane %v189, 4
  %v195 = vrot.slane %v191, 4
  %v196 = vsel %vm57, %v192, %v193
  %vm197 = vcmask 1039360
  %v198 = vsel %vm197, %v185, %v196
  %v199 = vsel %vm57, %v193, %v194
  %v200 = vsel %vm197, %v187, %v199
  %v201 = vsel %vm57, %v194, %v195
  %v202 = vsel %vm197, %v189, %v201
  %206 = vst [vmem:[#allocation4 + $0x78] sm:$0xff] %v198
  %207 = vst [vmem:[#allocation4 + $0x80] sm:$0xff] %v200
  %208 = vst [vmem:[#allocation4 + $0x88] sm:$0xff] %v202
  %v209 = vld [vmem:[%s1 + $0x4] sm:$0xff]
  %v210 = vld [vmem:[%s1 + $0xc] sm:$0xff]
  %v211 = vld [vmem:[%s1 + $0x14] sm:$0xff]
  %v212 = vld [vmem:[%s1 + $0x1c] sm:$0xf]
  %217 = vrot.lane.b32.xlu0 %v209, 111
  %v218 = vpop.permute.xlu0 %217
  %219 = vrot.lane.b32.xlu0 %v210, 111
  %v220 = vpop.permute.xlu0 %219
  %221 = vrot.lane.b32.xlu0 %v211, 111
  %v222 = vpop.permute.xlu0 %221
  %223 = vrot.lane.b32.xlu0 %v212, 111
  %v224 = vpop.permute.xlu0 %223
  %v225 = vrot.slane %v218, 4
  %v226 = vrot.slane %v220, 4
  %v227 = vrot.slane %v222, 4
  %v228 = vrot.slane %v224, 4
  %v229 = vsel %vm57, %v225, %v226
  %vm230 = vcmask 908288
  %v231 = vsel %vm230, %v218, %v229
  %v232 = vsel %vm57, %v226, %v227
  %v233 = vsel %vm230, %v220, %v232
  %v234 = vsel %vm57, %v227, %v228
  %v235 = vsel %vm230, %v222, %v234
  %239 = vst [vmem:[#allocation4 + $0x90] sm:$0xff] %v231
  %240 = vst [vmem:[#allocation4 + $0x98] sm:$0xff] %v233
  %241 = vst [vmem:[#allocation4 + $0xa0] sm:$0xff] %v235
  %v242 = vld [vmem:[%s1 + $0x4] sm:$0xff]
  %v243 = vld [vmem:[%s1 + $0xc] sm:$0xff]
  %v244 = vld [vmem:[%s1 + $0x14] sm:$0xff]
  %v245 = vld [vmem:[%s1 + $0x1c] sm:$0xf]
  %250 = vrot.lane.b32.xlu0 %v242, 110
  %v251 = vpop.permute.xlu0 %250
  %252 = vrot.lane.b32.xlu0 %v243, 110
  %v253 = vpop.permute.xlu0 %252
  %254 = vrot.lane.b32.xlu0 %v244, 110
  %v255 = vpop.permute.xlu0 %254
  %256 = vrot.lane.b32.xlu0 %v245, 110
  %v257 = vpop.permute.xlu0 %256
  %v258 = vrot.slane %v251, 4
  %v259 = vrot.slane %v253, 4
  %v260 = vrot.slane %v255, 4
  %v261 = vrot.slane %v257, 4
  %v262 = vsel %vm57, %v258, %v259
  %vm263 = vcmask 900096
  %v264 = vsel %vm263, %v251, %v262
  %v265 = vsel %vm57, %v259, %v260
  %v266 = vsel %vm263, %v253, %v265
  %v267 = vsel %vm57, %v260, %v261
  %v268 = vsel %vm263, %v255, %v267
  %272 = vst [vmem:[#allocation4 + $0xa8] sm:$0xff] %v264
  %273 = vst [vmem:[#allocation4 + $0xb0] sm:$0xff] %v266
  %274 = vst [vmem:[#allocation4 + $0xb8] sm:$0xff] %v268
  %v275 = vld [vmem:[%s1 + $0x4] sm:$0xff]
  %v276 = vld [vmem:[%s1 + $0xc] sm:$0xff]
  %v277 = vld [vmem:[%s1 + $0x14] sm:$0xff]
  %v278 = vld [vmem:[%s1 + $0x1c] sm:$0xf]
  %283 = vrot.lane.b32.xlu0 %v275, 109
  %v284 = vpop.permute.xlu0 %283
  %285 = vrot.lane.b32.xlu0 %v276, 109
  %v286 = vpop.permute.xlu0 %285
  %287 = vrot.lane.b32.xlu0 %v277, 109
  %v288 = vpop.permute.xlu0 %287
  %289 = vrot.lane.b32.xlu0 %v278, 109
  %v290 = vpop.permute.xlu0 %289
  %v291 = vrot.slane %v284, 4
  %v292 = vrot.slane %v286, 4
  %v293 = vrot.slane %v288, 4
  %v294 = vrot.slane %v290, 4
  %v295 = vsel %vm57, %v291, %v292
  %vm296 = vcmask 891904
  %v297 = vsel %vm296, %v284, %v295
  %v298 = vsel %vm57, %v292, %v293
  %v299 = vsel %vm296, %v286, %v298
  %v300 = vsel %vm57, %v293, %v294
  %v301 = vsel %vm296, %v288, %v300
  %305 = vst [vmem:[#allocation4 + $0xc0] sm:$0xff] %v297
  %306 = vst [vmem:[#allocation4 + $0xc8] sm:$0xff] %v299
  %307 = vst [vmem:[#allocation4 + $0xd0] sm:$0xff] %v301
  %v308 = vld [vmem:[%s3] sm:$0x3]
  %v309 = vld [vmem:[#allocation4] sm:$0xff]
  %v310 = vld [vmem:[#allocation4 + $0x8] sm:$0xff]
  %v311 = vld [vmem:[#allocation4 + $0x10] sm:$0xff]
  %v312 = vld [vmem:[#allocation4 + $0x18] sm:$0xff]
  %v313 = vld [vmem:[#allocation4 + $0x20] sm:$0xff]
  %v314 = vld [vmem:[#allocation4 + $0x28] sm:$0xff]
  %v315 = vld [vmem:[#allocation4 + $0x30] sm:$0xff]
  %v316 = vld [vmem:[#allocation4 + $0x38] sm:$0xff]
  %v317 = vld [vmem:[#allocation4 + $0x40] sm:$0xff]
  %v318 = vld [vmem:[#allocation4 + $0x48] sm:$0xff]
  %v319 = vld [vmem:[#allocation4 + $0x50] sm:$0xff]
  %v320 = vld [vmem:[#allocation4 + $0x58] sm:$0xff]
  %v321 = vld [vmem:[#allocation4 + $0x60] sm:$0xff]
  %v322 = vld [vmem:[#allocation4 + $0x68] sm:$0xff]
  %v323 = vld [vmem:[#allocation4 + $0x70] sm:$0xff]
  %v324 = vld [vmem:[#allocation4 + $0x78] sm:$0xff]
  %v325 = vld [vmem:[#allocation4 + $0x80] sm:$0xff]
  %v326 = vld [vmem:[#allocation4 + $0x88] sm:$0xff]
  %v327 = vld [vmem:[#allocation4 + $0x90] sm:$0xff]
  %v328 = vld [vmem:[#allocation4 + $0x98] sm:$0xff]
  %v329 = vld [vmem:[#allocation4 + $0xa0] sm:$0xff]
  %v330 = vld [vmem:[#allocation4 + $0xa8] sm:$0xff]
  %v331 = vld [vmem:[#allocation4 + $0xb0] sm:$0xff]
  %v332 = vld [vmem:[#allocation4 + $0xb8] sm:$0xff]
  %v333 = vld [vmem:[#allocation4 + $0xc0] sm:$0xff]
  %v334 = vld [vmem:[#allocation4 + $0xc8] sm:$0xff]
  %v335 = vld [vmem:[#allocation4 + $0xd0] sm:$0xff]
  %337 = vset.pattern.permute.xlu0 0
  %338 = vperm.xlu0 %337, %v28
  %v339 = vpop.permute.xlu0 %338
  %v368 = vunpack.c.l.b16 %v309
  %v369 = vunpack.c.h.b16 %v309
  %v370 = vunpack.c.l.b16 %v310
  %v371 = vunpack.c.h.b16 %v310
  %v372 = vunpack.c.l.b16 %v311
  %v373 = vunpack.c.h.b16 %v311
  %v374 = vunpack.c.l.b16 %v312
  %v375 = vunpack.c.h.b16 %v312
  %v376 = vunpack.c.l.b16 %v313
  %v377 = vunpack.c.h.b16 %v313
  %v378 = vunpack.c.l.b16 %v314
  %v379 = vunpack.c.h.b16 %v314
  %v380 = vunpack.c.l.b16 %v315
  %v381 = vunpack.c.h.b16 %v315
  %v382 = vunpack.c.l.b16 %v316
  %v383 = vunpack.c.h.b16 %v316
  %v384 = vunpack.c.l.b16 %v317
  %v385 = vunpack.c.h.b16 %v317
  %v386 = vunpack.c.l.b16 %v318
  %v387 = vunpack.c.h.b16 %v318
  %v388 = vunpack.c.l.b16 %v319
  %v389 = vunpack.c.h.b16 %v319
  %v390 = vunpack.c.l.b16 %v320
  %v391 = vunpack.c.h.b16 %v320
  %v392 = vunpack.c.l.b16 %v321
  %v393 = vunpack.c.h.b16 %v321
  %v394 = vunpack.c.l.b16 %v322
  %v395 = vunpack.c.h.b16 %v322
  %v396 = vunpack.c.l.b16 %v323
  %v397 = vunpack.c.h.b16 %v323
  %v398 = vunpack.c.l.b16 %v324
  %v399 = vunpack.c.h.b16 %v324
  %v400 = vunpack.c.l.b16 %v325
  %v401 = vunpack.c.h.b16 %v325
  %v402 = vunpack.c.l.b16 %v326
  %v403 = vunpack.c.h.b16 %v326
  %v404 = vunpack.c.l.b16 %v327
  %v405 = vunpack.c.h.b16 %v327
  %v406 = vunpack.c.l.b16 %v328
  %v407 = vunpack.c.h.b16 %v328
  %v408 = vunpack.c.l.b16 %v329
  %v409 = vunpack.c.h.b16 %v329
  %v410 = vunpack.c.l.b16 %v330
  %v411 = vunpack.c.h.b16 %v330
  %v412 = vunpack.c.l.b16 %v331
  %v413 = vunpack.c.h.b16 %v331
  %v414 = vunpack.c.l.b16 %v332
  %v415 = vunpack.c.h.b16 %v332
  %v416 = vunpack.c.l.b16 %v333
  %v417 = vunpack.c.h.b16 %v333
  %v418 = vunpack.c.l.b16 %v334
  %v419 = vunpack.c.h.b16 %v334
  %v420 = vunpack.c.l.b16 %v335
  %v421 = vunpack.c.h.b16 %v335
  %v422 = vpack.c.b16 %v374, %v368
  %v423 = vpack.c.b16 %v375, %v369
  %v424 = vpack.c.b16 %v376, %v370
  %v425 = vpack.c.b16 %v377, %v371
  %v426 = vpack.c.b16 %v378, %v372
  %v427 = vpack.c.b16 %v379, %v373
  %v428 = vpack.c.b16 %v386, %v380
  %v429 = vpack.c.b16 %v387, %v381
  %v430 = vpack.c.b16 %v388, %v382
  %v431 = vpack.c.b16 %v389, %v383
  %v432 = vpack.c.b16 %v390, %v384
  %v433 = vpack.c.b16 %v391, %v385
  %v434 = vpack.c.b16 %v398, %v392
  %v435 = vpack.c.b16 %v399, %v393
  %v436 = vpack.c.b16 %v400, %v394
  %v437 = vpack.c.b16 %v401, %v395
  %v438 = vpack.c.b16 %v402, %v396
  %v439 = vpack.c.b16 %v403, %v397
  %v440 = vpack.c.b16 %v410, %v404
  %v441 = vpack.c.b16 %v411, %v405
  %v442 = vpack.c.b16 %v412, %v406
  %v443 = vpack.c.b16 %v413, %v407
  %v444 = vpack.c.b16 %v414, %v408
  %v445 = vpack.c.b16 %v415, %v409
  %v446 = vpack.c.b16 %v416, %v416
  %v447 = vpack.c.b16 %v417, %v417
  %v448 = vpack.c.b16 %v418, %v418
  %v449 = vpack.c.b16 %v419, %v419
  %v450 = vpack.c.b16 %v420, %v420
  %v451 = vpack.c.b16 %v421, %v421
  %vm476 = vcmask 588800
  %v478 = vsel %vm476, %v308, 0
  %vm480 = vcmask 1043456
  %v482 = vsel %vm480, %v446, 0
  %v485 = vsel %vm480, %v447, 0
  %v488 = vsel %vm480, %v448, 0
  %v491 = vsel %vm480, %v449, 0
  %v494 = vsel %vm480, %v450, 0
  %v497 = vsel %vm480, %v451, 0
  %499 = vmatprep.subr.bf16.mxu0 %v423
  %500 = vmatpush1.bf16.msra.mxu0 %v422
  %501 = vmatprep.subr.bf16.mxu0 %v429
  %502 = vmatpush1.bf16.msra.mxu0 %v428
  %503 = vmatprep.subr.bf16.mxu0 %v435
  %504 = vmatpush1.bf16.msra.mxu0 %v434
  %505 = vmatprep.subr.bf16.mxu0 %v441
  %506 = vmatpush1.bf16.msra.mxu0 %v440
  %507 = vmatprep.subr.bf16.mxu0 %v485
  %508 = vmatpush1.bf16.msra.mxu0 %v482
  %509 = vmatprep.subr.bf16.mxu0 0
  %510 = vmatpush1.bf16.msra.mxu0 0
  %511 = vmatprep.subr.bf16.mxu0 0
  %512 = vmatpush1.bf16.msra.mxu0 0
  %513 = vmatprep.subr.bf16.mxu0 0
  %514 = vmatpush1.bf16.msra.mxu0 0
  %515 = vmatprep.subr.bf16.mxu0 0
  %516 = vmatpush1.bf16.msra.mxu0 0
  %517 = vmatprep.subr.bf16.mxu0 0
  %518 = vmatpush1.bf16.msra.mxu0 0
  %519 = vmatprep.subr.bf16.mxu0 0
  %520 = vmatpush1.bf16.msra.mxu0 0
  %521 = vmatprep.subr.bf16.mxu0 0
  %522 = vmatpush1.bf16.msra.mxu0 0
  %523 = vmatprep.subr.bf16.mxu0 0
  %524 = vmatpush1.bf16.msra.mxu0 0
  %525 = vmatprep.subr.bf16.mxu0 0
  %526 = vmatpush1.bf16.msra.mxu0 0
  %527 = vmatprep.subr.bf16.mxu0 0
  %528 = vmatpush1.bf16.msra.mxu0 0
  %529 = vmatprep.subr.bf16.mxu0 0
  %530 = vmatpush1.bf16.msra.mxu0 0
  %531 = vmatprep.mubr.bf16.mxu0 0
  %532 = vmatmul.mubr.bf16.gmra.mrb[0].mxu0 %v478
  %v533 = vpop.f32.mrb[0].mxu0
  %v534 = vadd.f32 %v339, %v533
  %v535 = vpop.f32.mrb[0].mxu0
  %v536 = vadd.f32 %v339, %v535
  %v537 = vpop.f32.mrb[0].mxu0
  %v538 = vpop.f32.mrb[0].mxu0
  %539 = vdwg.mxu0
  %540 = vmatprep.subr.bf16.mxu0 %v425
  %541 = vmatpush1.bf16.msra.mxu0 %v424
  %542 = vmatprep.subr.bf16.mxu0 %v431
  %543 = vmatpush1.bf16.msra.mxu0 %v430
  %544 = vmatprep.subr.bf16.mxu0 %v437
  %545 = vmatpush1.bf16.msra.mxu0 %v436
  %546 = vmatprep.subr.bf16.mxu0 %v443
  %547 = vmatpush1.bf16.msra.mxu0 %v442
  %548 = vmatprep.subr.bf16.mxu0 %v491
  %549 = vmatpush1.bf16.msra.mxu0 %v488
  %550 = vmatprep.subr.bf16.mxu0 0
  %551 = vmatpush1.bf16.msra.mxu0 0
  %552 = vmatprep.subr.bf16.mxu0 0
  %553 = vmatpush1.bf16.msra.mxu0 0
  %554 = vmatprep.subr.bf16.mxu0 0
  %555 = vmatpush1.bf16.msra.mxu0 0
  %556 = vmatprep.subr.bf16.mxu0 0
  %557 = vmatpush1.bf16.msra.mxu0 0
  %558 = vmatprep.subr.bf16.mxu0 0
  %559 = vmatpush1.bf16.msra.mxu0 0
  %560 = vmatprep.subr.bf16.mxu0 0
  %561 = vmatpush1.bf16.msra.mxu0 0
  %562 = vmatprep.subr.bf16.mxu0 0
  %563 = vmatpush1.bf16.msra.mxu0 0
  %564 = vmatprep.subr.bf16.mxu0 0
  %565 = vmatpush1.bf16.msra.mxu0 0
  %566 = vmatprep.subr.bf16.mxu0 0
  %567 = vmatpush1.bf16.msra.mxu0 0
  %568 = vmatprep.subr.bf16.mxu0 0
  %569 = vmatpush1.bf16.msra.mxu0 0
  %570 = vmatprep.subr.bf16.mxu0 0
  %571 = vmatpush1.bf16.msra.mxu0 0
  %572 = vmatprep.mubr.bf16.mxu0 0
  %573 = vmatmul.mubr.bf16.gmra.mrb[0].mxu0 %v478
  %v574 = vpop.f32.mrb[0].mxu0
  %v575 = vadd.f32 %v339, %v574
  %v576 = vpop.f32.mrb[0].mxu0
  %v577 = vadd.f32 %v339, %v576
  %v578 = vpop.f32.mrb[0].mxu0
  %v579 = vpop.f32.mrb[0].mxu0
  %580 = vdwg.mxu0
  %581 = vmatprep.subr.bf16.mxu0 %v427
  %582 = vmatpush1.bf16.msra.mxu0 %v426
  %583 = vmatprep.subr.bf16.mxu0 %v433
  %584 = vmatpush1.bf16.msra.mxu0 %v432
  %585 = vmatprep.subr.bf16.mxu0 %v439
  %586 = vmatpush1.bf16.msra.mxu0 %v438
  %587 = vmatprep.subr.bf16.mxu0 %v445
  %588 = vmatpush1.bf16.msra.mxu0 %v444
  %589 = vmatprep.subr.bf16.mxu0 %v497
  %590 = vmatpush1.bf16.msra.mxu0 %v494
  %591 = vmatprep.subr.bf16.mxu0 0
  %592 = vmatpush1.bf16.msra.mxu0 0
  %593 = vmatprep.subr.bf16.mxu0 0
  %594 = vmatpush1.bf16.msra.mxu0 0
  %595 = vmatprep.subr.bf16.mxu0 0
  %596 = vmatpush1.bf16.msra.mxu0 0
  %597 = vmatprep.subr.bf16.mxu0 0
  %598 = vmatpush1.bf16.msra.mxu0 0
  %599 = vmatprep.subr.bf16.mxu0 0
  %600 = vmatpush1.bf16.msra.mxu0 0
  %601 = vmatprep.subr.bf16.mxu0 0
  %602 = vmatpush1.bf16.msra.mxu0 0
  %603 = vmatprep.subr.bf16.mxu0 0
  %604 = vmatpush1.bf16.msra.mxu0 0
  %605 = vmatprep.subr.bf16.mxu0 0
  %606 = vmatpush1.bf16.msra.mxu0 0
  %607 = vmatprep.subr.bf16.mxu0 0
  %608 = vmatpush1.bf16.msra.mxu0 0
  %609 = vmatprep.subr.bf16.mxu0 0
  %610 = vmatpush1.bf16.msra.mxu0 0
  %611 = vmatprep.subr.bf16.mxu0 0
  %612 = vmatpush1.bf16.msra.mxu0 0
  %613 = vmatprep.mubr.bf16.mxu0 0
  %614 = vmatmul.mubr.bf16.gmra.mrb[0].mxu0 %v478
  %v615 = vpop.f32.mrb[0].mxu0
  %v616 = vadd.f32 %v339, %v615
  %v617 = vpop.f32.mrb[0].mxu0
  %v618 = vadd.f32 %v339, %v617
  %v619 = vpop.f32.mrb[0].mxu0
  %v620 = vpop.f32.mrb[0].mxu0
  %621 = vdwg.mxu0
  %v622 = vmax.f32 %v534, 0.0
  %v623 = vmax.f32 %v536, 0.0
  %v624 = vmax.f32 %v575, 0.0
  %v625 = vmax.f32 %v577, 0.0
  %v626 = vmax.f32 %v616, 0.0
  %v627 = vmax.f32 %v618, 0.0
  %v629 = vlaneseq
  %v630 = vshrl.u32 %v629, 7
  %v631 = vsub.s32 0, %v630
  %v632 = vrot.slane %v27, %v631
  %v633 = vlaneseq
  %v634 = vshrl.u32 %v633, 7
  %v635 = vsub.s32 1, %v634
  %v636 = vrot.slane %v27, %v635
  %v637 = vlaneseq
  %v638 = vshrl.u32 %v637, 7
  %v639 = vsub.s32 2, %v638
  %v640 = vrot.slane %v27, %v639
  %v641 = vlaneseq
  %v642 = vshrl.u32 %v641, 7
  %v643 = vsub.s32 3, %v642
  %v644 = vrot.slane %v27, %v643
  %v645 = vlaneseq
  %v646 = vshrl.u32 %v645, 7
  %v647 = vsub.s32 4, %v646
  %v648 = vrot.slane %v27, %v647
  %v649 = vlaneseq
  %v650 = vshrl.u32 %v649, 7
  %v651 = vsub.s32 5, %v650
  %v652 = vrot.slane %v27, %v651
  %v659 = vmul.f32 %v622, %v632
  %v660 = vmul.f32 %v623, %v636
  %v661 = vmul.f32 %v624, %v640
  %v662 = vmul.f32 %v625, %v644
  %v663 = vmul.f32 %v626, %v648
  %v664 = vmul.f32 %v627, %v652
  %v665 = vsel %vm480, %v659, 0.0
  %v666 = vsel %vm480, %v660, 0.0
  %v667 = vadd.f32 %v665, %v666
  %v668 = vsel %vm480, %v661, 0.0
  %v669 = vadd.f32 %v667, %v668
  %v670 = vsel %vm480, %v662, 0.0
  %v671 = vadd.f32 %v669, %v670
  %v672 = vsel %vm480, %v663, 0.0
  %v673 = vadd.f32 %v671, %v672
  %v674 = vsel %vm480, %v664, 0.0
  %v675 = vadd.f32 %v673, %v674
  %676 = vadd.xlane.f32.xlu0 %v675
  %v677 = vpop.xlane.xlu0 %676
  %v678 = vmul.f32 %v677, 0.001953125
  %v679 = vmul.f32 %v659, %v659
  %v680 = vmul.f32 %v660, %v660
  %v681 = vmul.f32 %v661, %v661
  %v682 = vmul.f32 %v662, %v662
  %v683 = vmul.f32 %v663, %v663
  %v684 = vmul.f32 %v664, %v664
  %v685 = vsel %vm480, %v679, 0.0
  %v686 = vsel %vm480, %v680, 0.0
  %v687 = vadd.f32 %v685, %v686
  %v688 = vsel %vm480, %v681, 0.0
  %v689 = vadd.f32 %v687, %v688
  %v690 = vsel %vm480, %v682, 0.0
  %v691 = vadd.f32 %v689, %v690
  %v692 = vsel %vm480, %v683, 0.0
  %v693 = vadd.f32 %v691, %v692
  %v694 = vsel %vm480, %v684, 0.0
  %v695 = vadd.f32 %v693, %v694
  %696 = vadd.xlane.f32.xlu0 %v695
  %v697 = vpop.xlane.xlu0 %696
  %v698 = vmul.f32 %v697, 0.001953125
  %v699 = vmul.f32 %v678, %v678
  %v700 = vsub.f32 %v698, %v699
  %v701 = vsub.f32 %v659, %v678
  %v702 = vsub.f32 %v660, %v678
  %v703 = vsub.f32 %v661, %v678
  %v704 = vsub.f32 %v662, %v678
  %v705 = vsub.f32 %v663, %v678
  %v706 = vsub.f32 %v664, %v678
  %v707 = vadd.f32 %v700, 1e-05
  %v708 = vrsqrt.pop %v707
  %v709 = vmul.f32 %v701, %v708
  %v710 = vmul.f32 %v702, %v708
  %v711 = vmul.f32 %v703, %v708
  %v712 = vmul.f32 %v704, %v708
  %v713 = vmul.f32 %v705, %v708
  %v714 = vmul.f32 %v706, %v708
  %716 = vset.pattern.permute.xlu0 0
  %717 = vperm.xlu0 %716, %v29
  %v718 = vpop.permute.xlu0 %717
  %v720 = vmul.f32 %v709, %v718
  %v721 = vmul.f32 %v710, %v718
  %v722 = vmul.f32 %v711, %v718
  %v723 = vmul.f32 %v712, %v718
  %v724 = vmul.f32 %v713, %v718
  %v725 = vmul.f32 %v714, %v718
  %727 = vset.pattern.permute.xlu0 0
  %728 = vperm.xlu0 %727, %v30
  %v729 = vpop.permute.xlu0 %728
  %v731 = vadd.f32 %v720, %v729
  %v732 = vadd.f32 %v721, %v729
  %v733 = vadd.f32 %v722, %v729
  %v734 = vadd.f32 %v723, %v729
  %v735 = vadd.f32 %v724, %v729
  %v736 = vadd.f32 %v725, %v729
  %v737 = vmul.f32 %v731, %v632
  %v738 = vmul.f32 %v732, %v636
  %v739 = vmul.f32 %v733, %v640
  %v740 = vmul.f32 %v734, %v644
  %v741 = vmul.f32 %v735, %v648
  %v742 = vmul.f32 %v736, %v652
  %743 = vst [vmem:[#allocation2] sm:$0x3] 0
  %744 = vst [vmem:[#allocation2 + $0xe] sm:$0x3] 0
  %v745 = vpack.c.bf16 %v737, %v737
  %v746 = vpack.c.bf16 %v738, %v738
  %v747 = vpack.c.bf16 %v739, %v739
  %v748 = vpack.c.bf16 %v740, %v740
  %v749 = vpack.c.bf16 %v741, %v741
  %v750 = vpack.c.bf16 %v742, %v742
  %v757 = vcombine.low %v745, %v746
  %v758 = vcombine.low %v747, %v748
  %v760 = vunpack.c.l.s4 1983009808
  %v761 = vunpack.c.0.s8 %v760
  %v762 = vlaneseq
  %v763 = vshrl.u32 %v762, 7
  %v764 = vsub.s32 %v761, %v763
  %v765 = vrot.slane %v757, %v764
  %v767 = vunpack.c.l.s4 1983009808
  %v768 = vunpack.c.0.s8 %v767
  %v769 = vlaneseq
  %v770 = vshrl.u32 %v769, 7
  %v771 = vsub.s32 %v768, %v770
  %v772 = vrot.slane %v758, %v771
  %v773 = vcombine.low %v765, %v772
  %v774 = vcombine.low %v749, %v750
  %v776 = vunpack.c.l.s4 1983009808
  %v777 = vunpack.c.0.s8 %v776
  %v778 = vlaneseq
  %v779 = vshrl.u32 %v778, 7
  %v780 = vsub.s32 %v777, %v779
  %v781 = vrot.slane %v774, %v780
  %784 = vst [vmem:[#allocation2 + $0x2] sm:$0xff] %v773
  %785 = vst [vmem:[#allocation2 + $0xa] sm:$0xf] %v781
  %v786 = vld [vmem:[%s2] sm:$0xff]
  %v787 = vld [vmem:[%s2 + $0x8] sm:$0x3f]
  %v790 = vcombine.high %v786, %v786
  %v792 = vunpack.c.l.s4 1983009808
  %v793 = vunpack.c.0.s8 %v792
  %v794 = vlaneseq
  %v795 = vshrl.u32 %v794, 7
  %v796 = vsub.s32 %v793, %v795
  %v797 = vrot.slane %v786, %v796
  %v799 = vunpack.c.l.s4 1983009808
  %v800 = vunpack.c.0.s8 %v799
  %v801 = vlaneseq
  %v802 = vshrl.u32 %v801, 7
  %v803 = vsub.s32 %v800, %v802
  %v804 = vrot.slane %v790, %v803
  %v805 = vcombine.high %v787, %v787
  %v807 = vunpack.c.l.s4 1983009808
  %v808 = vunpack.c.0.s8 %v807
  %v809 = vlaneseq
  %v810 = vshrl.u32 %v809, 7
  %v811 = vsub.s32 %v808, %v810
  %v812 = vrot.slane %v787, %v811
  %v814 = vunpack.c.l.s4 1983009808
  %v815 = vunpack.c.0.s8 %v814
  %v816 = vlaneseq
  %v817 = vshrl.u32 %v816, 7
  %v818 = vsub.s32 %v815, %v817
  %v819 = vrot.slane %v805, %v818
  %820 = vrot.lane.b32.xlu0 %v797, 19
  %v821 = vpop.permute.xlu0 %820
  %822 = vrot.lane.b32.xlu0 %v804, 19
  %v823 = vpop.permute.xlu0 %822
  %824 = vrot.lane.b32.xlu0 %v812, 19
  %v825 = vpop.permute.xlu0 %824
  %826 = vrot.lane.b32.xlu0 %v819, 19
  %v827 = vpop.permute.xlu0 %826
  %v828 = vrot.slane %v821, 4
  %v829 = vrot.slane %v823, 4
  %v830 = vrot.slane %v825, 4
  %v831 = vrot.slane %v827, 4
  %v832 = vsel %vm57, %v828, %v829
  %v833 = vsel %vm59, %v821, %v832
  %v834 = vsel %vm57, %v829, %v830
  %v835 = vsel %vm59, %v823, %v834
  %v836 = vsel %vm57, %v830, %v831
  %v837 = vsel %vm59, %v825, %v836
  %841 = vst [vmem:[#allocation4] sm:$0x33] %v833
  %842 = vst [vmem:[#allocation4 + $0x8] sm:$0x33] %v835
  %843 = vst [vmem:[#allocation4 + $0x10] sm:$0x33] %v837
  %v844 = vld [vmem:[%s2] sm:$0xff]
  %v845 = vld [vmem:[%s2 + $0x8] sm:$0x3f]
  %v848 = vcombine.low %v844, %v844
  %v850 = vunpack.c.l.s4 1983009808
  %v851 = vunpack.c.0.s8 %v850
  %v852 = vlaneseq
  %v853 = vshrl.u32 %v852, 7
  %v854 = vsub.s32 %v851, %v853
  %v855 = vrot.slane %v848, %v854
  %v857 = vunpack.c.l.s4 1983009808
  %v858 = vunpack.c.0.s8 %v857
  %v859 = vlaneseq
  %v860 = vshrl.u32 %v859, 7
  %v861 = vsub.s32 %v858, %v860
  %v862 = vrot.slane %v844, %v861
  %v863 = vcombine.low %v845, %v845
  %v865 = vunpack.c.l.s4 1983009808
  %v866 = vunpack.c.0.s8 %v865
  %v867 = vlaneseq
  %v868 = vshrl.u32 %v867, 7
  %v869 = vsub.s32 %v866, %v868
  %v870 = vrot.slane %v863, %v869
  %v872 = vunpack.c.l.s4 1983009808
  %v873 = vunpack.c.0.s8 %v872
  %v874 = vlaneseq
  %v875 = vshrl.u32 %v874, 7
  %v876 = vsub.s32 %v873, %v875
  %v877 = vrot.slane %v845, %v876
  %878 = vrot.lane.b32.xlu0 %v855, 18
  %v879 = vpop.permute.xlu0 %878
  %880 = vrot.lane.b32.xlu0 %v862, 18
  %v881 = vpop.permute.xlu0 %880
  %882 = vrot.lane.b32.xlu0 %v870, 18
  %v883 = vpop.permute.xlu0 %882
  %884 = vrot.lane.b32.xlu0 %v877, 18
  %v885 = vpop.permute.xlu0 %884
  %v886 = vrot.slane %v879, 4
  %v887 = vrot.slane %v881, 4
  %v888 = vrot.slane %v883, 4
  %v889 = vrot.slane %v885, 4
  %v890 = vsel %vm57, %v886, %v887
  %v891 = vsel %vm92, %v879, %v890
  %v892 = vsel %vm57, %v887, %v888
  %v893 = vsel %vm92, %v881, %v892
  %v894 = vsel %vm57, %v888, %v889
  %v895 = vsel %vm92, %v883, %v894
  %899 = vst [vmem:[#allocation4] sm:$0xcc] %v891
  %900 = vst [vmem:[#allocation4 + $0x8] sm:$0xcc] %v893
  %901 = vst [vmem:[#allocation4 + $0x10] sm:$0xcc] %v895
  %v902 = vld [vmem:[%s2] sm:$0xff]
  %v903 = vld [vmem:[%s2 + $0x8] sm:$0x3f]
  %v906 = vcombine.high %v902, %v902
  %v908 = vunpack.c.l.s4 1983009808
  %v909 = vunpack.c.0.s8 %v908
  %v910 = vlaneseq
  %v911 = vshrl.u32 %v910, 7
  %v912 = vsub.s32 %v909, %v911
  %v913 = vrot.slane %v902, %v912
  %v915 = vunpack.c.l.s4 1983009808
  %v916 = vunpack.c.0.s8 %v915
  %v917 = vlaneseq
  %v918 = vshrl.u32 %v917, 7
  %v919 = vsub.s32 %v916, %v918
  %v920 = vrot.slane %v906, %v919
  %v921 = vcombine.high %v903, %v903
  %v923 = vunpack.c.l.s4 1983009808
  %v924 = vunpack.c.0.s8 %v923
  %v925 = vlaneseq
  %v926 = vshrl.u32 %v925, 7
  %v927 = vsub.s32 %v924, %v926
  %v928 = vrot.slane %v903, %v927
  %v930 = vunpack.c.l.s4 1983009808
  %v931 = vunpack.c.0.s8 %v930
  %v932 = vlaneseq
  %v933 = vshrl.u32 %v932, 7
  %v934 = vsub.s32 %v931, %v933
  %v935 = vrot.slane %v921, %v934
  %936 = vrot.lane.b32.xlu0 %v913, 17
  %v937 = vpop.permute.xlu0 %936
  %938 = vrot.lane.b32.xlu0 %v920, 17
  %v939 = vpop.permute.xlu0 %938
  %940 = vrot.lane.b32.xlu0 %v928, 17
  %v941 = vpop.permute.xlu0 %940
  %942 = vrot.lane.b32.xlu0 %v935, 17
  %v943 = vpop.permute.xlu0 %942
  %v944 = vrot.slane %v937, 4
  %v945 = vrot.slane %v939, 4
  %v946 = vrot.slane %v941, 4
  %v947 = vrot.slane %v943, 4
  %v948 = vsel %vm57, %v944, %v945
  %v949 = vsel %vm125, %v937, %v948
  %v950 = vsel %vm57, %v945, %v946
  %v951 = vsel %vm125, %v939, %v950
  %v952 = vsel %vm57, %v946, %v947
  %v953 = vsel %vm125, %v941, %v952
  %957 = vst [vmem:[#allocation4 + $0x18] sm:$0x33] %v949
  %958 = vst [vmem:[#allocation4 + $0x20] sm:$0x33] %v951
  %959 = vst [vmem:[#allocation4 + $0x28] sm:$0x33] %v953
  %v960 = vld [vmem:[%s2] sm:$0xff]
  %v961 = vld [vmem:[%s2 + $0x8] sm:$0x3f]
  %v964 = vcombine.low %v960, %v960
  %v966 = vunpack.c.l.s4 1983009808
  %v967 = vunpack.c.0.s8 %v966
  %v968 = vlaneseq
  %v969 = vshrl.u32 %v968, 7
  %v970 = vsub.s32 %v967, %v969
  %v971 = vrot.slane %v964, %v970
  %v973 = vunpack.c.l.s4 1983009808
  %v974 = vunpack.c.0.s8 %v973
  %v975 = vlaneseq
  %v976 = vshrl.u32 %v975, 7
  %v977 = vsub.s32 %v974, %v976
  %v978 = vrot.slane %v960, %v977
  %v979 = vcombine.low %v961, %v961
  %v981 = vunpack.c.l.s4 1983009808
  %v982 = vunpack.c.0.s8 %v981
  %v983 = vlaneseq
  %v984 = vshrl.u32 %v983, 7
  %v985 = vsub.s32 %v982, %v984
  %v986 = vrot.slane %v979, %v985
  %v988 = vunpack.c.l.s4 1983009808
  %v989 = vunpack.c.0.s8 %v988
  %v990 = vlaneseq
  %v991 = vshrl.u32 %v990, 7
  %v992 = vsub.s32 %v989, %v991
  %v993 = vrot.slane %v961, %v992
  %994 = vrot.lane.b32.xlu0 %v971, 1
  %v995 = vpop.permute.xlu0 %994
  %996 = vrot.lane.b32.xlu0 %v978, 1
  %v997 = vpop.permute.xlu0 %996
  %998 = vrot.lane.b32.xlu0 %v986, 1
  %v999 = vpop.permute.xlu0 %998
  %1000 = vrot.lane.b32.xlu0 %v993, 1
  %v1001 = vpop.permute.xlu0 %1000
  %v1002 = vrot.slane %v995, 4
  %v1003 = vrot.slane %v997, 4
  %v1004 = vrot.slane %v999, 4
  %v1005 = vrot.slane %v1001, 4
  %v1006 = vsel %vm57, %v1002, %v1003
  %v1007 = vsel %vm158, %v995, %v1006
  %v1008 = vsel %vm57, %v1003, %v1004
  %v1009 = vsel %vm158, %v997, %v1008
  %v1010 = vsel %vm57, %v1004, %v1005
  %v1011 = vsel %vm158, %v999, %v1010
  %1015 = vst [vmem:[#allocation4 + $0x18] sm:$0xcc] %v1007
  %1016 = vst [vmem:[#allocation4 + $0x20] sm:$0xcc] %v1009
  %1017 = vst [vmem:[#allocation4 + $0x28] sm:$0xcc] %v1011
  %v1018 = vld [vmem:[%s2 + $0x2] sm:$0xff]
  %v1019 = vld [vmem:[%s2 + $0xa] sm:$0xf]
  %v1022 = vcombine.high %v1018, %v1018
  %v1024 = vunpack.c.l.s4 1983009808
  %v1025 = vunpack.c.0.s8 %v1024
  %v1026 = vlaneseq
  %v1027 = vshrl.u32 %v1026, 7
  %v1028 = vsub.s32 %v1025, %v1027
  %v1029 = vrot.slane %v1018, %v1028
  %v1031 = vunpack.c.l.s4 1983009808
  %v1032 = vunpack.c.0.s8 %v1031
  %v1033 = vlaneseq
  %v1034 = vshrl.u32 %v1033, 7
  %v1035 = vsub.s32 %v1032, %v1034
  %v1036 = vrot.slane %v1022, %v1035
  %v1038 = vunpack.c.l.s4 1983009808
  %v1039 = vunpack.c.0.s8 %v1038
  %v1040 = vlaneseq
  %v1041 = vshrl.u32 %v1040, 7
  %v1042 = vsub.s32 %v1039, %v1041
  %v1043 = vrot.slane %v1019, %v1042
  %1047 = vst [vmem:[#allocation4 + $0x30] sm:$0x33] %v1029
  %1048 = vst [vmem:[#allocation4 + $0x38] sm:$0x33] %v1036
  %1049 = vst [vmem:[#allocation4 + $0x40] sm:$0x33] %v1043
  %v1050 = vld [vmem:[%s2 + $0x2] sm:$0xff]
  %v1051 = vld [vmem:[%s2 + $0xa] sm:$0x3f]
  %v1054 = vcombine.low %v1050, %v1050
  %v1056 = vunpack.c.l.s4 1983009808
  %v1057 = vunpack.c.0.s8 %v1056
  %v1058 = vlaneseq
  %v1059 = vshrl.u32 %v1058, 7
  %v1060 = vsub.s32 %v1057, %v1059
  %v1061 = vrot.slane %v1054, %v1060
  %v1063 = vunpack.c.l.s4 1983009808
  %v1064 = vunpack.c.0.s8 %v1063
  %v1065 = vlaneseq
  %v1066 = vshrl.u32 %v1065, 7
  %v1067 = vsub.s32 %v1064, %v1066
  %v1068 = vrot.slane %v1050, %v1067
  %v1069 = vcombine.low %v1051, %v1051
  %v1071 = vunpack.c.l.s4 1983009808
  %v1072 = vunpack.c.0.s8 %v1071
  %v1073 = vlaneseq
  %v1074 = vshrl.u32 %v1073, 7
  %v1075 = vsub.s32 %v1072, %v1074
  %v1076 = vrot.slane %v1069, %v1075
  %v1078 = vunpack.c.l.s4 1983009808
  %v1079 = vunpack.c.0.s8 %v1078
  %v1080 = vlaneseq
  %v1081 = vshrl.u32 %v1080, 7
  %v1082 = vsub.s32 %v1079, %v1081
  %v1083 = vrot.slane %v1051, %v1082
  %1084 = vrot.lane.b32.xlu0 %v1061, 127
  %v1085 = vpop.permute.xlu0 %1084
  %1086 = vrot.lane.b32.xlu0 %v1068, 127
  %v1087 = vpop.permute.xlu0 %1086
  %1088 = vrot.lane.b32.xlu0 %v1076, 127
  %v1089 = vpop.permute.xlu0 %1088
  %1090 = vrot.lane.b32.xlu0 %v1083, 127
  %v1091 = vpop.permute.xlu0 %1090
  %v1092 = vrot.slane %v1085, 4
  %v1093 = vrot.slane %v1087, 4
  %v1094 = vrot.slane %v1089, 4
  %v1095 = vrot.slane %v1091, 4
  %v1096 = vsel %vm57, %v1092, %v1093
  %v1097 = vsel %vm197, %v1085, %v1096
  %v1098 = vsel %vm57, %v1093, %v1094
  %v1099 = vsel %vm197, %v1087, %v1098
  %v1100 = vsel %vm57, %v1094, %v1095
  %v1101 = vsel %vm197, %v1089, %v1100
  %1105 = vst [vmem:[#allocation4 + $0x30] sm:$0xcc] %v1097
  %1106 = vst [vmem:[#allocation4 + $0x38] sm:$0xcc] %v1099
  %1107 = vst [vmem:[#allocation4 + $0x40] sm:$0xcc] %v1101
  %v1108 = vld [vmem:[%s2 + $0x2] sm:$0xff]
  %v1109 = vld [vmem:[%s2 + $0xa] sm:$0x3f]
  %v1112 = vcombine.high %v1108, %v1108
  %v1114 = vunpack.c.l.s4 1983009808
  %v1115 = vunpack.c.0.s8 %v1114
  %v1116 = vlaneseq
  %v1117 = vshrl.u32 %v1116, 7
  %v1118 = vsub.s32 %v1115, %v1117
  %v1119 = vrot.slane %v1108, %v1118
  %v1121 = vunpack.c.l.s4 1983009808
  %v1122 = vunpack.c.0.s8 %v1121
  %v1123 = vlaneseq
  %v1124 = vshrl.u32 %v1123, 7
  %v1125 = vsub.s32 %v1122, %v1124
  %v1126 = vrot.slane %v1112, %v1125
  %v1127 = vcombine.high %v1109, %v1109
  %v1129 = vunpack.c.l.s4 1983009808
  %v1130 = vunpack.c.0.s8 %v1129
  %v1131 = vlaneseq
  %v1132 = vshrl.u32 %v1131, 7
  %v1133 = vsub.s32 %v1130, %v1132
  %v1134 = vrot.slane %v1109, %v1133
  %v1136 = vunpack.c.l.s4 1983009808
  %v1137 = vunpack.c.0.s8 %v1136
  %v1138 = vlaneseq
  %v1139 = vshrl.u32 %v1138, 7
  %v1140 = vsub.s32 %v1137, %v1139
  %v1141 = vrot.slane %v1127, %v1140
  %1142 = vrot.lane.b32.xlu0 %v1119, 111
  %v1143 = vpop.permute.xlu0 %1142
  %1144 = vrot.lane.b32.xlu0 %v1126, 111
  %v1145 = vpop.permute.xlu0 %1144
  %1146 = vrot.lane.b32.xlu0 %v1134, 111
  %v1147 = vpop.permute.xlu0 %1146
  %1148 = vrot.lane.b32.xlu0 %v1141, 111
  %v1149 = vpop.permute.xlu0 %1148
  %v1150 = vrot.slane %v1143, 4
  %v1151 = vrot.slane %v1145, 4
  %v1152 = vrot.slane %v1147, 4
  %v1153 = vrot.slane %v1149, 4
  %v1154 = vsel %vm57, %v1150, %v1151
  %v1155 = vsel %vm230, %v1143, %v1154
  %v1156 = vsel %vm57, %v1151, %v1152
  %v1157 = vsel %vm230, %v1145, %v1156
  %v1158 = vsel %vm57, %v1152, %v1153
  %v1159 = vsel %vm230, %v1147, %v1158
  %1163 = vst [vmem:[#allocation4 + $0x48] sm:$0x33] %v1155
  %1164 = vst [vmem:[#allocation4 + $0x50] sm:$0x33] %v1157
  %1165 = vst [vmem:[#allocation4 + $0x58] sm:$0x33] %v1159
  %v1166 = vld [vmem:[%s2 + $0x2] sm:$0xff]
  %v1167 = vld [vmem:[%s2 + $0xa] sm:$0x3f]
  %v1170 = vcombine.low %v1166, %v1166
  %v1172 = vunpack.c.l.s4 1983009808
  %v1173 = vunpack.c.0.s8 %v1172
  %v1174 = vlaneseq
  %v1175 = vshrl.u32 %v1174, 7
  %v1176 = vsub.s32 %v1173, %v1175
  %v1177 = vrot.slane %v1170, %v1176
  %v1179 = vunpack.c.l.s4 1983009808
  %v1180 = vunpack.c.0.s8 %v1179
  %v1181 = vlaneseq
  %v1182 = vshrl.u32 %v1181, 7
  %v1183 = vsub.s32 %v1180, %v1182
  %v1184 = vrot.slane %v1166, %v1183
  %v1185 = vcombine.low %v1167, %v1167
  %v1187 = vunpack.c.l.s4 1983009808
  %v1188 = vunpack.c.0.s8 %v1187
  %v1189 = vlaneseq
  %v1190 = vshrl.u32 %v1189, 7
  %v1191 = vsub.s32 %v1188, %v1190
  %v1192 = vrot.slane %v1185, %v1191
  %v1194 = vunpack.c.l.s4 1983009808
  %v1195 = vunpack.c.0.s8 %v1194
  %v1196 = vlaneseq
  %v1197 = vshrl.u32 %v1196, 7
  %v1198 = vsub.s32 %v1195, %v1197
  %v1199 = vrot.slane %v1167, %v1198
  %1200 = vrot.lane.b32.xlu0 %v1177, 110
  %v1201 = vpop.permute.xlu0 %1200
  %1202 = vrot.lane.b32.xlu0 %v1184, 110
  %v1203 = vpop.permute.xlu0 %1202
  %1204 = vrot.lane.b32.xlu0 %v1192, 110
  %v1205 = vpop.permute.xlu0 %1204
  %1206 = vrot.lane.b32.xlu0 %v1199, 110
  %v1207 = vpop.permute.xlu0 %1206
  %v1208 = vrot.slane %v1201, 4
  %v1209 = vrot.slane %v1203, 4
  %v1210 = vrot.slane %v1205, 4
  %v1211 = vrot.slane %v1207, 4
  %v1212 = vsel %vm57, %v1208, %v1209
  %v1213 = vsel %vm263, %v1201, %v1212
  %v1214 = vsel %vm57, %v1209, %v1210
  %v1215 = vsel %vm263, %v1203, %v1214
  %v1216 = vsel %vm57, %v1210, %v1211
  %v1217 = vsel %vm263, %v1205, %v1216
  %1221 = vst [vmem:[#allocation4 + $0x48] sm:$0xcc] %v1213
  %1222 = vst [vmem:[#allocation4 + $0x50] sm:$0xcc] %v1215
  %1223 = vst [vmem:[#allocation4 + $0x58] sm:$0xcc] %v1217
  %v1224 = vld [vmem:[%s2 + $0x2] sm:$0xff]
  %v1225 = vld [vmem:[%s2 + $0xa] sm:$0x3f]
  %v1228 = vcombine.high %v1224, %v1224
  %v1230 = vunpack.c.l.s4 1983009808
  %v1231 = vunpack.c.0.s8 %v1230
  %v1232 = vlaneseq
  %v1233 = vshrl.u32 %v1232, 7
  %v1234 = vsub.s32 %v1231, %v1233
  %v1235 = vrot.slane %v1224, %v1234
  %v1237 = vunpack.c.l.s4 1983009808
  %v1238 = vunpack.c.0.s8 %v1237
  %v1239 = vlaneseq
  %v1240 = vshrl.u32 %v1239, 7
  %v1241 = vsub.s32 %v1238, %v1240
  %v1242 = vrot.slane %v1228, %v1241
  %v1243 = vcombine.high %v1225, %v1225
  %v1245 = vunpack.c.l.s4 1983009808
  %v1246 = vunpack.c.0.s8 %v1245
  %v1247 = vlaneseq
  %v1248 = vshrl.u32 %v1247, 7
  %v1249 = vsub.s32 %v1246, %v1248
  %v1250 = vrot.slane %v1225, %v1249
  %v1252 = vunpack.c.l.s4 1983009808
  %v1253 = vunpack.c.0.s8 %v1252
  %v1254 = vlaneseq
  %v1255 = vshrl.u32 %v1254, 7
  %v1256 = vsub.s32 %v1253, %v1255
  %v1257 = vrot.slane %v1243, %v1256
  %1258 = vrot.lane.b32.xlu0 %v1235, 109
  %v1259 = vpop.permute.xlu0 %1258
  %1260 = vrot.lane.b32.xlu0 %v1242, 109
  %v1261 = vpop.permute.xlu0 %1260
  %1262 = vrot.lane.b32.xlu0 %v1250, 109
  %v1263 = vpop.permute.xlu0 %1262
  %1264 = vrot.lane.b32.xlu0 %v1257, 109
  %v1265 = vpop.permute.xlu0 %1264
  %v1266 = vrot.slane %v1259, 4
  %v1267 = vrot.slane %v1261, 4
  %v1268 = vrot.slane %v1263, 4
  %v1269 = vrot.slane %v1265, 4
  %v1270 = vsel %vm57, %v1266, %v1267
  %v1271 = vsel %vm296, %v1259, %v1270
  %v1272 = vsel %vm57, %v1267, %v1268
  %v1273 = vsel %vm296, %v1261, %v1272
  %v1274 = vsel %vm57, %v1268, %v1269
  %v1275 = vsel %vm296, %v1263, %v1274
  %1279 = vst [vmem:[#allocation4 + $0x60] sm:$0x33] %v1271
  %1280 = vst [vmem:[#allocation4 + $0x68] sm:$0x33] %v1273
  %1281 = vst [vmem:[#allocation4 + $0x70] sm:$0x33] %v1275
  %v1282 = vld [vmem:[#allocation2] sm:$0xff]
  %v1283 = vld [vmem:[#allocation2 + $0x8] sm:$0x3f]
  %v1286 = vcombine.low %v1282, %v1282
  %v1288 = vunpack.c.l.s4 1983009808
  %v1289 = vunpack.c.0.s8 %v1288
  %v1290 = vlaneseq
  %v1291 = vshrl.u32 %v1290, 7
  %v1292 = vsub.s32 %v1289, %v1291
  %v1293 = vrot.slane %v1286, %v1292
  %v1295 = vunpack.c.l.s4 1983009808
  %v1296 = vunpack.c.0.s8 %v1295
  %v1297 = vlaneseq
  %v1298 = vshrl.u32 %v1297, 7
  %v1299 = vsub.s32 %v1296, %v1298
  %v1300 = vrot.slane %v1282, %v1299
  %v1301 = vcombine.low %v1283, %v1283
  %v1303 = vunpack.c.l.s4 1983009808
  %v1304 = vunpack.c.0.s8 %v1303
  %v1305 = vlaneseq
  %v1306 = vshrl.u32 %v1305, 7
  %v1307 = vsub.s32 %v1304, %v1306
  %v1308 = vrot.slane %v1301, %v1307
  %v1310 = vunpack.c.l.s4 1983009808
  %v1311 = vunpack.c.0.s8 %v1310
  %v1312 = vlaneseq
  %v1313 = vshrl.u32 %v1312, 7
  %v1314 = vsub.s32 %v1311, %v1313
  %v1315 = vrot.slane %v1283, %v1314
  %1316 = vrot.lane.b32.xlu0 %v1293, 19
  %v1317 = vpop.permute.xlu0 %1316
  %1318 = vrot.lane.b32.xlu0 %v1300, 19
  %v1319 = vpop.permute.xlu0 %1318
  %1320 = vrot.lane.b32.xlu0 %v1308, 19
  %v1321 = vpop.permute.xlu0 %1320
  %1322 = vrot.lane.b32.xlu0 %v1315, 19
  %v1323 = vpop.permute.xlu0 %1322
  %v1324 = vrot.slane %v1317, 4
  %v1325 = vrot.slane %v1319, 4
  %v1326 = vrot.slane %v1321, 4
  %v1327 = vrot.slane %v1323, 4
  %v1328 = vsel %vm57, %v1324, %v1325
  %v1329 = vsel %vm59, %v1317, %v1328
  %v1330 = vsel %vm57, %v1325, %v1326
  %v1331 = vsel %vm59, %v1319, %v1330
  %v1332 = vsel %vm57, %v1326, %v1327
  %v1333 = vsel %vm59, %v1321, %v1332
  %1337 = vst [vmem:[#allocation4 + $0x60] sm:$0xcc] %v1329
  %1338 = vst [vmem:[#allocation4 + $0x68] sm:$0xcc] %v1331
  %1339 = vst [vmem:[#allocation4 + $0x70] sm:$0xcc] %v1333
  %v1340 = vld [vmem:[#allocation2] sm:$0xff]
  %v1341 = vld [vmem:[#allocation2 + $0x8] sm:$0x3f]
  %v1344 = vcombine.high %v1340, %v1340
  %v1346 = vunpack.c.l.s4 1983009808
  %v1347 = vunpack.c.0.s8 %v1346
  %v1348 = vlaneseq
  %v1349 = vshrl.u32 %v1348, 7
  %v1350 = vsub.s32 %v1347, %v1349
  %v1351 = vrot.slane %v1340, %v1350
  %v1353 = vunpack.c.l.s4 1983009808
  %v1354 = vunpack.c.0.s8 %v1353
  %v1355 = vlaneseq
  %v1356 = vshrl.u32 %v1355, 7
  %v1357 = vsub.s32 %v1354, %v1356
  %v1358 = vrot.slane %v1344, %v1357
  %v1359 = vcombine.high %v1341, %v1341
  %v1361 = vunpack.c.l.s4 1983009808
  %v1362 = vunpack.c.0.s8 %v1361
  %v1363 = vlaneseq
  %v1364 = vshrl.u32 %v1363, 7
  %v1365 = vsub.s32 %v1362, %v1364
  %v1366 = vrot.slane %v1341, %v1365
  %v1368 = vunpack.c.l.s4 1983009808
  %v1369 = vunpack.c.0.s8 %v1368
  %v1370 = vlaneseq
  %v1371 = vshrl.u32 %v1370, 7
  %v1372 = vsub.s32 %v1369, %v1371
  %v1373 = vrot.slane %v1359, %v1372
  %1374 = vrot.lane.b32.xlu0 %v1351, 18
  %v1375 = vpop.permute.xlu0 %1374
  %1376 = vrot.lane.b32.xlu0 %v1358, 18
  %v1377 = vpop.permute.xlu0 %1376
  %1378 = vrot.lane.b32.xlu0 %v1366, 18
  %v1379 = vpop.permute.xlu0 %1378
  %1380 = vrot.lane.b32.xlu0 %v1373, 18
  %v1381 = vpop.permute.xlu0 %1380
  %v1382 = vrot.slane %v1375, 4
  %v1383 = vrot.slane %v1377, 4
  %v1384 = vrot.slane %v1379, 4
  %v1385 = vrot.slane %v1381, 4
  %v1386 = vsel %vm57, %v1382, %v1383
  %v1387 = vsel %vm92, %v1375, %v1386
  %v1388 = vsel %vm57, %v1383, %v1384
  %v1389 = vsel %vm92, %v1377, %v1388
  %v1390 = vsel %vm57, %v1384, %v1385
  %v1391 = vsel %vm92, %v1379, %v1390
  %1395 = vst [vmem:[#allocation4 + $0x78] sm:$0x33] %v1387
  %1396 = vst [vmem:[#allocation4 + $0x80] sm:$0x33] %v1389
  %1397 = vst [vmem:[#allocation4 + $0x88] sm:$0x33] %v1391
  %v1398 = vld [vmem:[#allocation2] sm:$0xff]
  %v1399 = vld [vmem:[#allocation2 + $0x8] sm:$0x3f]
  %v1402 = vcombine.low %v1398, %v1398
  %v1404 = vunpack.c.l.s4 1983009808
  %v1405 = vunpack.c.0.s8 %v1404
  %v1406 = vlaneseq
  %v1407 = vshrl.u32 %v1406, 7
  %v1408 = vsub.s32 %v1405, %v1407
  %v1409 = vrot.slane %v1402, %v1408
  %v1411 = vunpack.c.l.s4 1983009808
  %v1412 = vunpack.c.0.s8 %v1411
  %v1413 = vlaneseq
  %v1414 = vshrl.u32 %v1413, 7
  %v1415 = vsub.s32 %v1412, %v1414
  %v1416 = vrot.slane %v1398, %v1415
  %v1417 = vcombine.low %v1399, %v1399
  %v1419 = vunpack.c.l.s4 1983009808
  %v1420 = vunpack.c.0.s8 %v1419
  %v1421 = vlaneseq
  %v1422 = vshrl.u32 %v1421, 7
  %v1423 = vsub.s32 %v1420, %v1422
  %v1424 = vrot.slane %v1417, %v1423
  %v1426 = vunpack.c.l.s4 1983009808
  %v1427 = vunpack.c.0.s8 %v1426
  %v1428 = vlaneseq
  %v1429 = vshrl.u32 %v1428, 7
  %v1430 = vsub.s32 %v1427, %v1429
  %v1431 = vrot.slane %v1399, %v1430
  %1432 = vrot.lane.b32.xlu0 %v1409, 17
  %v1433 = vpop.permute.xlu0 %1432
  %1434 = vrot.lane.b32.xlu0 %v1416, 17
  %v1435 = vpop.permute.xlu0 %1434
  %1436 = vrot.lane.b32.xlu0 %v1424, 17
  %v1437 = vpop.permute.xlu0 %1436
  %1438 = vrot.lane.b32.xlu0 %v1431, 17
  %v1439 = vpop.permute.xlu0 %1438
  %v1440 = vrot.slane %v1433, 4
  %v1441 = vrot.slane %v1435, 4
  %v1442 = vrot.slane %v1437, 4
  %v1443 = vrot.slane %v1439, 4
  %v1444 = vsel %vm57, %v1440, %v1441
  %v1445 = vsel %vm125, %v1433, %v1444
  %v1446 = vsel %vm57, %v1441, %v1442
  %v1447 = vsel %vm125, %v1435, %v1446
  %v1448 = vsel %vm57, %v1442, %v1443
  %v1449 = vsel %vm125, %v1437, %v1448
  %1453 = vst [vmem:[#allocation4 + $0x78] sm:$0xcc] %v1445
  %1454 = vst [vmem:[#allocation4 + $0x80] sm:$0xcc] %v1447
  %1455 = vst [vmem:[#allocation4 + $0x88] sm:$0xcc] %v1449
  %v1456 = vld [vmem:[#allocation2] sm:$0xff]
  %v1457 = vld [vmem:[#allocation2 + $0x8] sm:$0x3f]
  %v1460 = vcombine.high %v1456, %v1456
  %v1462 = vunpack.c.l.s4 1983009808
  %v1463 = vunpack.c.0.s8 %v1462
  %v1464 = vlaneseq
  %v1465 = vshrl.u32 %v1464, 7
  %v1466 = vsub.s32 %v1463, %v1465
  %v1467 = vrot.slane %v1456, %v1466
  %v1469 = vunpack.c.l.s4 1983009808
  %v1470 = vunpack.c.0.s8 %v1469
  %v1471 = vlaneseq
  %v1472 = vshrl.u32 %v1471, 7
  %v1473 = vsub.s32 %v1470, %v1472
  %v1474 = vrot.slane %v1460, %v1473
  %v1475 = vcombine.high %v1457, %v1457
  %v1477 = vunpack.c.l.s4 1983009808
  %v1478 = vunpack.c.0.s8 %v1477
  %v1479 = vlaneseq
  %v1480 = vshrl.u32 %v1479, 7
  %v1481 = vsub.s32 %v1478, %v1480
  %v1482 = vrot.slane %v1457, %v1481
  %v1484 = vunpack.c.l.s4 1983009808
  %v1485 = vunpack.c.0.s8 %v1484
  %v1486 = vlaneseq
  %v1487 = vshrl.u32 %v1486, 7
  %v1488 = vsub.s32 %v1485, %v1487
  %v1489 = vrot.slane %v1475, %v1488
  %1490 = vrot.lane.b32.xlu0 %v1467, 1
  %v1491 = vpop.permute.xlu0 %1490
  %1492 = vrot.lane.b32.xlu0 %v1474, 1
  %v1493 = vpop.permute.xlu0 %1492
  %1494 = vrot.lane.b32.xlu0 %v1482, 1
  %v1495 = vpop.permute.xlu0 %1494
  %1496 = vrot.lane.b32.xlu0 %v1489, 1
  %v1497 = vpop.permute.xlu0 %1496
  %v1498 = vrot.slane %v1491, 4
  %v1499 = vrot.slane %v1493, 4
  %v1500 = vrot.slane %v1495, 4
  %v1501 = vrot.slane %v1497, 4
  %v1502 = vsel %vm57, %v1498, %v1499
  %v1503 = vsel %vm158, %v1491, %v1502
  %v1504 = vsel %vm57, %v1499, %v1500
  %v1505 = vsel %vm158, %v1493, %v1504
  %v1506 = vsel %vm57, %v1500, %v1501
  %v1507 = vsel %vm158, %v1495, %v1506
  %1511 = vst [vmem:[#allocation4 + $0x90] sm:$0x33] %v1503
  %1512 = vst [vmem:[#allocation4 + $0x98] sm:$0x33] %v1505
  %1513 = vst [vmem:[#allocation4 + $0xa0] sm:$0x33] %v1507
  %v1514 = vld [vmem:[#allocation2 + $0x2] sm:$0xff]
  %v1515 = vld [vmem:[#allocation2 + $0xa] sm:$0xf]
  %v1518 = vcombine.low %v1514, %v1514
  %v1520 = vunpack.c.l.s4 1983009808
  %v1521 = vunpack.c.0.s8 %v1520
  %v1522 = vlaneseq
  %v1523 = vshrl.u32 %v1522, 7
  %v1524 = vsub.s32 %v1521, %v1523
  %v1525 = vrot.slane %v1518, %v1524
  %v1527 = vunpack.c.l.s4 1983009808
  %v1528 = vunpack.c.0.s8 %v1527
  %v1529 = vlaneseq
  %v1530 = vshrl.u32 %v1529, 7
  %v1531 = vsub.s32 %v1528, %v1530
  %v1532 = vrot.slane %v1514, %v1531
  %v1533 = vcombine.low %v1515, %v1515
  %v1535 = vunpack.c.l.s4 1983009808
  %v1536 = vunpack.c.0.s8 %v1535
  %v1537 = vlaneseq
  %v1538 = vshrl.u32 %v1537, 7
  %v1539 = vsub.s32 %v1536, %v1538
  %v1540 = vrot.slane %v1533, %v1539
  %1544 = vst [vmem:[#allocation4 + $0x90] sm:$0xcc] %v1525
  %1545 = vst [vmem:[#allocation4 + $0x98] sm:$0xcc] %v1532
  %1546 = vst [vmem:[#allocation4 + $0xa0] sm:$0xcc] %v1540
  %v1547 = vld [vmem:[#allocation2 + $0x2] sm:$0xff]
  %v1548 = vld [vmem:[#allocation2 + $0xa] sm:$0x3f]
  %v1551 = vcombine.high %v1547, %v1547
  %v1553 = vunpack.c.l.s4 1983009808
  %v1554 = vunpack.c.0.s8 %v1553
  %v1555 = vlaneseq
  %v1556 = vshrl.u32 %v1555, 7
  %v1557 = vsub.s32 %v1554, %v1556
  %v1558 = vrot.slane %v1547, %v1557
  %v1560 = vunpack.c.l.s4 1983009808
  %v1561 = vunpack.c.0.s8 %v1560
  %v1562 = vlaneseq
  %v1563 = vshrl.u32 %v1562, 7
  %v1564 = vsub.s32 %v1561, %v1563
  %v1565 = vrot.slane %v1551, %v1564
  %v1566 = vcombine.high %v1548, %v1548
  %v1568 = vunpack.c.l.s4 1983009808
  %v1569 = vunpack.c.0.s8 %v1568
  %v1570 = vlaneseq
  %v1571 = vshrl.u32 %v1570, 7
  %v1572 = vsub.s32 %v1569, %v1571
  %v1573 = vrot.slane %v1548, %v1572
  %v1575 = vunpack.c.l.s4 1983009808
  %v1576 = vunpack.c.0.s8 %v1575
  %v1577 = vlaneseq
  %v1578 = vshrl.u32 %v1577, 7
  %v1579 = vsub.s32 %v1576, %v1578
  %v1580 = vrot.slane %v1566, %v1579
  %1581 = vrot.lane.b32.xlu0 %v1558, 127
  %v1582 = vpop.permute.xlu0 %1581
  %1583 = vrot.lane.b32.xlu0 %v1565, 127
  %v1584 = vpop.permute.xlu0 %1583
  %1585 = vrot.lane.b32.xlu0 %v1573, 127
  %v1586 = vpop.permute.xlu0 %1585
  %1587 = vrot.lane.b32.xlu0 %v1580, 127
  %v1588 = vpop.permute.xlu0 %1587
  %v1589 = vrot.slane %v1582, 4
  %v1590 = vrot.slane %v1584, 4
  %v1591 = vrot.slane %v1586, 4
  %v1592 = vrot.slane %v1588, 4
  %v1593 = vsel %vm57, %v1589, %v1590
  %v1594 = vsel %vm197, %v1582, %v1593
  %v1595 = vsel %vm57, %v1590, %v1591
  %v1596 = vsel %vm197, %v1584, %v1595
  %v1597 = vsel %vm57, %v1591, %v1592
  %v1598 = vsel %vm197, %v1586, %v1597
  %1602 = vst [vmem:[#allocation4 + $0xa8] sm:$0x33] %v1594
  %1603 = vst [vmem:[#allocation4 + $0xb0] sm:$0x33] %v1596
  %1604 = vst [vmem:[#allocation4 + $0xb8] sm:$0x33] %v1598
  %v1605 = vld [vmem:[#allocation2 + $0x2] sm:$0xff]
  %v1606 = vld [vmem:[#allocation2 + $0xa] sm:$0x3f]
  %v1609 = vcombine.low %v1605, %v1605
  %v1611 = vunpack.c.l.s4 1983009808
  %v1612 = vunpack.c.0.s8 %v1611
  %v1613 = vlaneseq
  %v1614 = vshrl.u32 %v1613, 7
  %v1615 = vsub.s32 %v1612, %v1614
  %v1616 = vrot.slane %v1609, %v1615
  %v1618 = vunpack.c.l.s4 1983009808
  %v1619 = vunpack.c.0.s8 %v1618
  %v1620 = vlaneseq
  %v1621 = vshrl.u32 %v1620, 7
  %v1622 = vsub.s32 %v1619, %v1621
  %v1623 = vrot.slane %v1605, %v1622
  %v1624 = vcombine.low %v1606, %v1606
  %v1626 = vunpack.c.l.s4 1983009808
  %v1627 = vunpack.c.0.s8 %v1626
  %v1628 = vlaneseq
  %v1629 = vshrl.u32 %v1628, 7
  %v1630 = vsub.s32 %v1627, %v1629
  %v1631 = vrot.slane %v1624, %v1630
  %v1633 = vunpack.c.l.s4 1983009808
  %v1634 = vunpack.c.0.s8 %v1633
  %v1635 = vlaneseq
  %v1636 = vshrl.u32 %v1635, 7
  %v1637 = vsub.s32 %v1634, %v1636
  %v1638 = vrot.slane %v1606, %v1637
  %1639 = vrot.lane.b32.xlu0 %v1616, 111
  %v1640 = vpop.permute.xlu0 %1639
  %1641 = vrot.lane.b32.xlu0 %v1623, 111
  %v1642 = vpop.permute.xlu0 %1641
  %1643 = vrot.lane.b32.xlu0 %v1631, 111
  %v1644 = vpop.permute.xlu0 %1643
  %1645 = vrot.lane.b32.xlu0 %v1638, 111
  %v1646 = vpop.permute.xlu0 %1645
  %v1647 = vrot.slane %v1640, 4
  %v1648 = vrot.slane %v1642, 4
  %v1649 = vrot.slane %v1644, 4
  %v1650 = vrot.slane %v1646, 4
  %v1651 = vsel %vm57, %v1647, %v1648
  %v1652 = vsel %vm230, %v1640, %v1651
  %v1653 = vsel %vm57, %v1648, %v1649
  %v1654 = vsel %vm230, %v1642, %v1653
  %v1655 = vsel %vm57, %v1649, %v1650
  %v1656 = vsel %vm230, %v1644, %v1655
  %1660 = vst [vmem:[#allocation4 + $0xa8] sm:$0xcc] %v1652
  %1661 = vst [vmem:[#allocation4 + $0xb0] sm:$0xcc] %v1654
  %1662 = vst [vmem:[#allocation4 + $0xb8] sm:$0xcc] %v1656
  %v1663 = vld [vmem:[#allocation2 + $0x2] sm:$0xff]
  %v1664 = vld [vmem:[#allocation2 + $0xa] sm:$0x3f]
  %v1667 = vcombine.high %v1663, %v1663
  %v1669 = vunpack.c.l.s4 1983009808
  %v1670 = vunpack.c.0.s8 %v1669
  %v1671 = vlaneseq
  %v1672 = vshrl.u32 %v1671, 7
  %v1673 = vsub.s32 %v1670, %v1672
  %v1674 = vrot.slane %v1663, %v1673
  %v1676 = vunpack.c.l.s4 1983009808
  %v1677 = vunpack.c.0.s8 %v1676
  %v1678 = vlaneseq
  %v1679 = vshrl.u32 %v1678, 7
  %v1680 = vsub.s32 %v1677, %v1679
  %v1681 = vrot.slane %v1667, %v1680
  %v1682 = vcombine.high %v1664, %v1664
  %v1684 = vunpack.c.l.s4 1983009808
  %v1685 = vunpack.c.0.s8 %v1684
  %v1686 = vlaneseq
  %v1687 = vshrl.u32 %v1686, 7
  %v1688 = vsub.s32 %v1685, %v1687
  %v1689 = vrot.slane %v1664, %v1688
  %v1691 = vunpack.c.l.s4 1983009808
  %v1692 = vunpack.c.0.s8 %v1691
  %v1693 = vlaneseq
  %v1694 = vshrl.u32 %v1693, 7
  %v1695 = vsub.s32 %v1692, %v1694
  %v1696 = vrot.slane %v1682, %v1695
  %1697 = vrot.lane.b32.xlu0 %v1674, 110
  %v1698 = vpop.permute.xlu0 %1697
  %1699 = vrot.lane.b32.xlu0 %v1681, 110
  %v1700 = vpop.permute.xlu0 %1699
  %1701 = vrot.lane.b32.xlu0 %v1689, 110
  %v1702 = vpop.permute.xlu0 %1701
  %1703 = vrot.lane.b32.xlu0 %v1696, 110
  %v1704 = vpop.permute.xlu0 %1703
  %v1705 = vrot.slane %v1698, 4
  %v1706 = vrot.slane %v1700, 4
  %v1707 = vrot.slane %v1702, 4
  %v1708 = vrot.slane %v1704, 4
  %v1709 = vsel %vm57, %v1705, %v1706
  %v1710 = vsel %vm263, %v1698, %v1709
  %v1711 = vsel %vm57, %v1706, %v1707
  %v1712 = vsel %vm263, %v1700, %v1711
  %v1713 = vsel %vm57, %v1707, %v1708
  %v1714 = vsel %vm263, %v1702, %v1713
  %1718 = vst [vmem:[#allocation4 + $0xc0] sm:$0x33] %v1710
  %1719 = vst [vmem:[#allocation4 + $0xc8] sm:$0x33] %v1712
  %1720 = vst [vmem:[#allocation4 + $0xd0] sm:$0x33] %v1714
  %v1721 = vld [vmem:[#allocation2 + $0x2] sm:$0xff]
  %v1722 = vld [vmem:[#allocation2 + $0xa] sm:$0x3f]
  %v1725 = vcombine.low %v1721, %v1721
  %v1727 = vunpack.c.l.s4 1983009808
  %v1728 = vunpack.c.0.s8 %v1727
  %v1729 = vlaneseq
  %v1730 = vshrl.u32 %v1729, 7
  %v1731 = vsub.s32 %v1728, %v1730
  %v1732 = vrot.slane %v1725, %v1731
  %v1734 = vunpack.c.l.s4 1983009808
  %v1735 = vunpack.c.0.s8 %v1734
  %v1736 = vlaneseq
  %v1737 = vshrl.u32 %v1736, 7
  %v1738 = vsub.s32 %v1735, %v1737
  %v1739 = vrot.slane %v1721, %v1738
  %v1740 = vcombine.low %v1722, %v1722
  %v1742 = vunpack.c.l.s4 1983009808
  %v1743 = vunpack.c.0.s8 %v1742
  %v1744 = vlaneseq
  %v1745 = vshrl.u32 %v1744, 7
  %v1746 = vsub.s32 %v1743, %v1745
  %v1747 = vrot.slane %v1740, %v1746
  %v1749 = vunpack.c.l.s4 1983009808
  %v1750 = vunpack.c.0.s8 %v1749
  %v1751 = vlaneseq
  %v1752 = vshrl.u32 %v1751, 7
  %v1753 = vsub.s32 %v1750, %v1752
  %v1754 = vrot.slane %v1722, %v1753
  %1755 = vrot.lane.b32.xlu0 %v1732, 109
  %v1756 = vpop.permute.xlu0 %1755
  %1757 = vrot.lane.b32.xlu0 %v1739, 109
  %v1758 = vpop.permute.xlu0 %1757
  %1759 = vrot.lane.b32.xlu0 %v1747, 109
  %v1760 = vpop.permute.xlu0 %1759
  %1761 = vrot.lane.b32.xlu0 %v1754, 109
  %v1762 = vpop.permute.xlu0 %1761
  %v1763 = vrot.slane %v1756, 4
  %v1764 = vrot.slane %v1758, 4
  %v1765 = vrot.slane %v1760, 4
  %v1766 = vrot.slane %v1762, 4
  %v1767 = vsel %vm57, %v1763, %v1764
  %v1768 = vsel %vm296, %v1756, %v1767
  %v1769 = vsel %vm57, %v1764, %v1765
  %v1770 = vsel %vm296, %v1758, %v1769
  %v1771 = vsel %vm57, %v1765, %v1766
  %v1772 = vsel %vm296, %v1760, %v1771
  %1776 = vst [vmem:[#allocation4 + $0xc0] sm:$0xcc] %v1768
  %1777 = vst [vmem:[#allocation4 + $0xc8] sm:$0xcc] %v1770
  %1778 = vst [vmem:[#allocation4 + $0xd0] sm:$0xcc] %v1772
  %v1779 = vld [vmem:[%s4] sm:$0x3]
  %v1780 = vld [vmem:[#allocation4] sm:$0xff]
  %v1781 = vld [vmem:[#allocation4 + $0x8] sm:$0xff]
  %v1782 = vld [vmem:[#allocation4 + $0x10] sm:$0xff]
  %v1783 = vld [vmem:[#allocation4 + $0x18] sm:$0xff]
  %v1784 = vld [vmem:[#allocation4 + $0x20] sm:$0xff]
  %v1785 = vld [vmem:[#allocation4 + $0x28] sm:$0xff]
  %v1786 = vld [vmem:[#allocation4 + $0x30] sm:$0xff]
  %v1787 = vld [vmem:[#allocation4 + $0x38] sm:$0xff]
  %v1788 = vld [vmem:[#allocation4 + $0x40] sm:$0xff]
  %v1789 = vld [vmem:[#allocation4 + $0x48] sm:$0xff]
  %v1790 = vld [vmem:[#allocation4 + $0x50] sm:$0xff]
  %v1791 = vld [vmem:[#allocation4 + $0x58] sm:$0xff]
  %v1792 = vld [vmem:[#allocation4 + $0x60] sm:$0xff]
  %v1793 = vld [vmem:[#allocation4 + $0x68] sm:$0xff]
  %v1794 = vld [vmem:[#allocation4 + $0x70] sm:$0xff]
  %v1795 = vld [vmem:[#allocation4 + $0x78] sm:$0xff]
  %v1796 = vld [vmem:[#allocation4 + $0x80] sm:$0xff]
  %v1797 = vld [vmem:[#allocation4 + $0x88] sm:$0xff]
  %v1798 = vld [vmem:[#allocation4 + $0x90] sm:$0xff]
  %v1799 = vld [vmem:[#allocation4 + $0x98] sm:$0xff]
  %v1800 = vld [vmem:[#allocation4 + $0xa0] sm:$0xff]
  %v1801 = vld [vmem:[#allocation4 + $0xa8] sm:$0xff]
  %v1802 = vld [vmem:[#allocation4 + $0xb0] sm:$0xff]
  %v1803 = vld [vmem:[#allocation4 + $0xb8] sm:$0xff]
  %v1804 = vld [vmem:[#allocation4 + $0xc0] sm:$0xff]
  %v1805 = vld [vmem:[#allocation4 + $0xc8] sm:$0xff]
  %v1806 = vld [vmem:[#allocation4 + $0xd0] sm:$0xff]
  %1808 = vset.pattern.permute.xlu0 0
  %1809 = vperm.xlu0 %1808, %v31
  %v1810 = vpop.permute.xlu0 %1809
  %v1839 = vunpack.c.l.b16 %v1780
  %v1840 = vunpack.c.h.b16 %v1780
  %v1841 = vunpack.c.l.b16 %v1781
  %v1842 = vunpack.c.h.b16 %v1781
  %v1843 = vunpack.c.l.b16 %v1782
  %v1844 = vunpack.c.h.b16 %v1782
  %v1845 = vunpack.c.l.b16 %v1783
  %v1846 = vunpack.c.h.b16 %v1783
  %v1847 = vunpack.c.l.b16 %v1784
  %v1848 = vunpack.c.h.b16 %v1784
  %v1849 = vunpack.c.l.b16 %v1785
  %v1850 = vunpack.c.h.b16 %v1785
  %v1851 = vunpack.c.l.b16 %v1786
  %v1852 = vunpack.c.h.b16 %v1786
  %v1853 = vunpack.c.l.b16 %v1787
  %v1854 = vunpack.c.h.b16 %v1787
  %v1855 = vunpack.c.l.b16 %v1788
  %v1856 = vunpack.c.h.b16 %v1788
  %v1857 = vunpack.c.l.b16 %v1789
  %v1858 = vunpack.c.h.b16 %v1789
  %v1859 = vunpack.c.l.b16 %v1790
  %v1860 = vunpack.c.h.b16 %v1790
  %v1861 = vunpack.c.l.b16 %v1791
  %v1862 = vunpack.c.h.b16 %v1791
  %v1863 = vunpack.c.l.b16 %v1792
  %v1864 = vunpack.c.h.b16 %v1792
  %v1865 = vunpack.c.l.b16 %v1793
  %v1866 = vunpack.c.h.b16 %v1793
  %v1867 = vunpack.c.l.b16 %v1794
  %v1868 = vunpack.c.h.b16 %v1794
  %v1869 = vunpack.c.l.b16 %v1795
  %v1870 = vunpack.c.h.b16 %v1795
  %v1871 = vunpack.c.l.b16 %v1796
  %v1872 = vunpack.c.h.b16 %v1796
  %v1873 = vunpack.c.l.b16 %v1797
  %v1874 = vunpack.c.h.b16 %v1797
  %v1875 = vunpack.c.l.b16 %v1798
  %v1876 = vunpack.c.h.b16 %v1798
  %v1877 = vunpack.c.l.b16 %v1799
  %v1878 = vunpack.c.h.b16 %v1799
  %v1879 = vunpack.c.l.b16 %v1800
  %v1880 = vunpack.c.h.b16 %v1800
  %v1881 = vunpack.c.l.b16 %v1801
  %v1882 = vunpack.c.h.b16 %v1801
  %v1883 = vunpack.c.l.b16 %v1802
  %v1884 = vunpack.c.h.b16 %v1802
  %v1885 = vunpack.c.l.b16 %v1803
  %v1886 = vunpack.c.h.b16 %v1803
  %v1887 = vunpack.c.l.b16 %v1804
  %v1888 = vunpack.c.h.b16 %v1804
  %v1889 = vunpack.c.l.b16 %v1805
  %v1890 = vunpack.c.h.b16 %v1805
  %v1891 = vunpack.c.l.b16 %v1806
  %v1892 = vunpack.c.h.b16 %v1806
  %v1893 = vpack.c.b16 %v1845, %v1839
  %v1894 = vpack.c.b16 %v1846, %v1840
  %v1895 = vpack.c.b16 %v1847, %v1841
  %v1896 = vpack.c.b16 %v1848, %v1842
  %v1897 = vpack.c.b16 %v1849, %v1843
  %v1898 = vpack.c.b16 %v1850, %v1844
  %v1899 = vpack.c.b16 %v1857, %v1851
  %v1900 = vpack.c.b16 %v1858, %v1852
  %v1901 = vpack.c.b16 %v1859, %v1853
  %v1902 = vpack.c.b16 %v1860, %v1854
  %v1903 = vpack.c.b16 %v1861, %v1855
  %v1904 = vpack.c.b16 %v1862, %v1856
  %v1905 = vpack.c.b16 %v1869, %v1863
  %v1906 = vpack.c.b16 %v1870, %v1864
  %v1907 = vpack.c.b16 %v1871, %v1865
  %v1908 = vpack.c.b16 %v1872, %v1866
  %v1909 = vpack.c.b16 %v1873, %v1867
  %v1910 = vpack.c.b16 %v1874, %v1868
  %v1911 = vpack.c.b16 %v1881, %v1875
  %v1912 = vpack.c.b16 %v1882, %v1876
  %v1913 = vpack.c.b16 %v1883, %v1877
  %v1914 = vpack.c.b16 %v1884, %v1878
  %v1915 = vpack.c.b16 %v1885, %v1879
  %v1916 = vpack.c.b16 %v1886, %v1880
  %v1917 = vpack.c.b16 %v1887, %v1887
  %v1918 = vpack.c.b16 %v1888, %v1888
  %v1919 = vpack.c.b16 %v1889, %v1889
  %v1920 = vpack.c.b16 %v1890, %v1890
  %v1921 = vpack.c.b16 %v1891, %v1891
  %v1922 = vpack.c.b16 %v1892, %v1892
  %v1948 = vsel %vm476, %v1779, 0
  %v1951 = vsel %vm480, %v1917, 0
  %v1954 = vsel %vm480, %v1918, 0
  %v1957 = vsel %vm480, %v1919, 0
  %v1960 = vsel %vm480, %v1920, 0
  %v1963 = vsel %vm480, %v1921, 0
  %v1966 = vsel %vm480, %v1922, 0
  %1968 = vmatprep.subr.bf16.mxu0 %v1894
  %1969 = vmatpush1.bf16.msra.mxu0 %v1893
  %1970 = vmatprep.subr.bf16.mxu0 %v1900
  %1971 = vmatpush1.bf16.msra.mxu0 %v1899
  %1972 = vmatprep.subr.bf16.mxu0 %v1906
  %1973 = vmatpush1.bf16.msra.mxu0 %v1905
  %1974 = vmatprep.subr.bf16.mxu0 %v1912
  %1975 = vmatpush1.bf16.msra.mxu0 %v1911
  %1976 = vmatprep.subr.bf16.mxu0 %v1954
  %1977 = vmatpush1.bf16.msra.mxu0 %v1951
  %1978 = vmatprep.subr.bf16.mxu0 0
  %1979 = vmatpush1.bf16.msra.mxu0 0
  %1980 = vmatprep.subr.bf16.mxu0 0
  %1981 = vmatpush1.bf16.msra.mxu0 0
  %1982 = vmatprep.subr.bf16.mxu0 0
  %1983 = vmatpush1.bf16.msra.mxu0 0
  %1984 = vmatprep.subr.bf16.mxu0 0
  %1985 = vmatpush1.bf16.msra.mxu0 0
  %1986 = vmatprep.subr.bf16.mxu0 0
  %1987 = vmatpush1.bf16.msra.mxu0 0
  %1988 = vmatprep.subr.bf16.mxu0 0
  %1989 = vmatpush1.bf16.msra.mxu0 0
  %1990 = vmatprep.subr.bf16.mxu0 0
  %1991 = vmatpush1.bf16.msra.mxu0 0
  %1992 = vmatprep.subr.bf16.mxu0 0
  %1993 = vmatpush1.bf16.msra.mxu0 0
  %1994 = vmatprep.subr.bf16.mxu0 0
  %1995 = vmatpush1.bf16.msra.mxu0 0
  %1996 = vmatprep.subr.bf16.mxu0 0
  %1997 = vmatpush1.bf16.msra.mxu0 0
  %1998 = vmatprep.subr.bf16.mxu0 0
  %1999 = vmatpush1.bf16.msra.mxu0 0
  %2000 = vmatprep.mubr.bf16.mxu0 0
  %2001 = vmatmul.mubr.bf16.gmra.mrb[0].mxu0 %v1948
  %v2002 = vpop.f32.mrb[0].mxu0
  %v2003 = vadd.f32 %v1810, %v2002
  %v2004 = vpop.f32.mrb[0].mxu0
  %v2005 = vadd.f32 %v1810, %v2004
  %v2006 = vpop.f32.mrb[0].mxu0
  %v2007 = vpop.f32.mrb[0].mxu0
  %2008 = vdwg.mxu0
  %2009 = vmatprep.subr.bf16.mxu0 %v1896
  %2010 = vmatpush1.bf16.msra.mxu0 %v1895
  %2011 = vmatprep.subr.bf16.mxu0 %v1902
  %2012 = vmatpush1.bf16.msra.mxu0 %v1901
  %2013 = vmatprep.subr.bf16.mxu0 %v1908
  %2014 = vmatpush1.bf16.msra.mxu0 %v1907
  %2015 = vmatprep.subr.bf16.mxu0 %v1914
  %2016 = vmatpush1.bf16.msra.mxu0 %v1913
  %2017 = vmatprep.subr.bf16.mxu0 %v1960
  %2018 = vmatpush1.bf16.msra.mxu0 %v1957
  %2019 = vmatprep.subr.bf16.mxu0 0
  %2020 = vmatpush1.bf16.msra.mxu0 0
  %2021 = vmatprep.subr.bf16.mxu0 0
  %2022 = vmatpush1.bf16.msra.mxu0 0
  %2023 = vmatprep.subr.bf16.mxu0 0
  %2024 = vmatpush1.bf16.msra.mxu0 0
  %2025 = vmatprep.subr.bf16.mxu0 0
  %2026 = vmatpush1.bf16.msra.mxu0 0
  %2027 = vmatprep.subr.bf16.mxu0 0
  %2028 = vmatpush1.bf16.msra.mxu0 0
  %2029 = vmatprep.subr.bf16.mxu0 0
  %2030 = vmatpush1.bf16.msra.mxu0 0
  %2031 = vmatprep.subr.bf16.mxu0 0
  %2032 = vmatpush1.bf16.msra.mxu0 0
  %2033 = vmatprep.subr.bf16.mxu0 0
  %2034 = vmatpush1.bf16.msra.mxu0 0
  %2035 = vmatprep.subr.bf16.mxu0 0
  %2036 = vmatpush1.bf16.msra.mxu0 0
  %2037 = vmatprep.subr.bf16.mxu0 0
  %2038 = vmatpush1.bf16.msra.mxu0 0
  %2039 = vmatprep.subr.bf16.mxu0 0
  %2040 = vmatpush1.bf16.msra.mxu0 0
  %2041 = vmatprep.mubr.bf16.mxu0 0
  %2042 = vmatmul.mubr.bf16.gmra.mrb[0].mxu0 %v1948
  %v2043 = vpop.f32.mrb[0].mxu0
  %v2044 = vadd.f32 %v1810, %v2043
  %v2045 = vpop.f32.mrb[0].mxu0
  %v2046 = vadd.f32 %v1810, %v2045
  %v2047 = vpop.f32.mrb[0].mxu0
  %v2048 = vpop.f32.mrb[0].mxu0
  %2049 = vdwg.mxu0
  %2050 = vmatprep.subr.bf16.mxu0 %v1898
  %2051 = vmatpush1.bf16.msra.mxu0 %v1897
  %2052 = vmatprep.subr.bf16.mxu0 %v1904
  %2053 = vmatpush1.bf16.msra.mxu0 %v1903
  %2054 = vmatprep.subr.bf16.mxu0 %v1910
  %2055 = vmatpush1.bf16.msra.mxu0 %v1909
  %2056 = vmatprep.subr.bf16.mxu0 %v1916
  %2057 = vmatpush1.bf16.msra.mxu0 %v1915
  %2058 = vmatprep.subr.bf16.mxu0 %v1966
  %2059 = vmatpush1.bf16.msra.mxu0 %v1963
  %2060 = vmatprep.subr.bf16.mxu0 0
  %2061 = vmatpush1.bf16.msra.mxu0 0
  %2062 = vmatprep.subr.bf16.mxu0 0
  %2063 = vmatpush1.bf16.msra.mxu0 0
  %2064 = vmatprep.subr.bf16.mxu0 0
  %2065 = vmatpush1.bf16.msra.mxu0 0
  %2066 = vmatprep.subr.bf16.mxu0 0
  %2067 = vmatpush1.bf16.msra.mxu0 0
  %2068 = vmatprep.subr.bf16.mxu0 0
  %2069 = vmatpush1.bf16.msra.mxu0 0
  %2070 = vmatprep.subr.bf16.mxu0 0
  %2071 = vmatpush1.bf16.msra.mxu0 0
  %2072 = vmatprep.subr.bf16.mxu0 0
  %2073 = vmatpush1.bf16.msra.mxu0 0
  %2074 = vmatprep.subr.bf16.mxu0 0
  %2075 = vmatpush1.bf16.msra.mxu0 0
  %2076 = vmatprep.subr.bf16.mxu0 0
  %2077 = vmatpush1.bf16.msra.mxu0 0
  %2078 = vmatprep.subr.bf16.mxu0 0
  %2079 = vmatpush1.bf16.msra.mxu0 0
  %2080 = vmatprep.subr.bf16.mxu0 0
  %2081 = vmatpush1.bf16.msra.mxu0 0
  %2082 = vmatprep.mubr.bf16.mxu0 0
  %2083 = vmatmul.mubr.bf16.gmra.mrb[0].mxu0 %v1948
  %v2084 = vpop.f32.mrb[0].mxu0
  %v2085 = vadd.f32 %v1810, %v2084
  %v2086 = vpop.f32.mrb[0].mxu0
  %v2087 = vadd.f32 %v1810, %v2086
  %v2088 = vpop.f32.mrb[0].mxu0
  %v2089 = vpop.f32.mrb[0].mxu0
  %2090 = vdwg.mxu0
  %v2091 = vmax.f32 %v2003, 0.0
  %v2092 = vmax.f32 %v2005, 0.0
  %v2093 = vmax.f32 %v2044, 0.0
  %v2094 = vmax.f32 %v2046, 0.0
  %v2095 = vmax.f32 %v2085, 0.0
  %v2096 = vmax.f32 %v2087, 0.0
  %v2097 = vmul.f32 %v2091, %v632
  %v2098 = vmul.f32 %v2092, %v636
  %v2099 = vmul.f32 %v2093, %v640
  %v2100 = vmul.f32 %v2094, %v644
  %v2101 = vmul.f32 %v2095, %v648
  %v2102 = vmul.f32 %v2096, %v652
  %v2103 = vsel %vm480, %v2097, 0.0
  %v2104 = vsel %vm480, %v2098, 0.0
  %v2105 = vadd.f32 %v2103, %v2104
  %v2106 = vsel %vm480, %v2099, 0.0
  %v2107 = vadd.f32 %v2105, %v2106
  %v2108 = vsel %vm480, %v2100, 0.0
  %v2109 = vadd.f32 %v2107, %v2108
  %v2110 = vsel %vm480, %v2101, 0.0
  %v2111 = vadd.f32 %v2109, %v2110
  %v2112 = vsel %vm480, %v2102, 0.0
  %v2113 = vadd.f32 %v2111, %v2112
  %2114 = vadd.xlane.f32.xlu0 %v2113
  %v2115 = vpop.xlane.xlu0 %2114
  %v2116 = vmul.f32 %v2115, 0.001953125
  %v2117 = vmul.f32 %v2097, %v2097
  %v2118 = vmul.f32 %v2098, %v2098
  %v2119 = vmul.f32 %v2099, %v2099
  %v2120 = vmul.f32 %v2100, %v2100
  %v2121 = vmul.f32 %v2101, %v2101
  %v2122 = vmul.f32 %v2102, %v2102
  %v2123 = vsel %vm480, %v2117, 0.0
  %v2124 = vsel %vm480, %v2118, 0.0
  %v2125 = vadd.f32 %v2123, %v2124
  %v2126 = vsel %vm480, %v2119, 0.0
  %v2127 = vadd.f32 %v2125, %v2126
  %v2128 = vsel %vm480, %v2120, 0.0
  %v2129 = vadd.f32 %v2127, %v2128
  %v2130 = vsel %vm480, %v2121, 0.0
  %v2131 = vadd.f32 %v2129, %v2130
  %v2132 = vsel %vm480, %v2122, 0.0
  %v2133 = vadd.f32 %v2131, %v2132
  %2134 = vadd.xlane.f32.xlu0 %v2133
  %v2135 = vpop.xlane.xlu0 %2134
  %v2136 = vmul.f32 %v2135, 0.001953125
  %v2137 = vmul.f32 %v2116, %v2116
  %v2138 = vsub.f32 %v2136, %v2137
  %v2139 = vsub.f32 %v2097, %v2116
  %v2140 = vsub.f32 %v2098, %v2116
  %v2141 = vsub.f32 %v2099, %v2116
  %v2142 = vsub.f32 %v2100, %v2116
  %v2143 = vsub.f32 %v2101, %v2116
  %v2144 = vsub.f32 %v2102, %v2116
  %v2145 = vadd.f32 %v2138, 1e-05
  %v2146 = vrsqrt.pop %v2145
  %v2147 = vmul.f32 %v2139, %v2146
  %v2148 = vmul.f32 %v2140, %v2146
  %v2149 = vmul.f32 %v2141, %v2146
  %v2150 = vmul.f32 %v2142, %v2146
  %v2151 = vmul.f32 %v2143, %v2146
  %v2152 = vmul.f32 %v2144, %v2146
  %2154 = vset.pattern.permute.xlu0 0
  %2155 = vperm.xlu0 %2154, %v32
  %v2156 = vpop.permute.xlu0 %2155
  %v2158 = vmul.f32 %v2147, %v2156
  %v2159 = vmul.f32 %v2148, %v2156
  %v2160 = vmul.f32 %v2149, %v2156
  %v2161 = vmul.f32 %v2150, %v2156
  %v2162 = vmul.f32 %v2151, %v2156
  %v2163 = vmul.f32 %v2152, %v2156
  %2165 = vset.pattern.permute.xlu0 0
  %2166 = vperm.xlu0 %2165, %v33
  %v2167 = vpop.permute.xlu0 %2166
  %v2169 = vadd.f32 %v2158, %v2167
  %v2170 = vadd.f32 %v2159, %v2167
  %v2171 = vadd.f32 %v2160, %v2167
  %v2172 = vadd.f32 %v2161, %v2167
  %v2173 = vadd.f32 %v2162, %v2167
  %v2174 = vadd.f32 %v2163, %v2167
  %v2175 = vmul.f32 %v2169, %v632
  %v2176 = vmul.f32 %v2170, %v636
  %v2177 = vmul.f32 %v2171, %v640
  %v2178 = vmul.f32 %v2172, %v644
  %v2179 = vmul.f32 %v2173, %v648
  %v2180 = vmul.f32 %v2174, %v652
  %2181 = vst [vmem:[#allocation3] sm:$0x3] 0
  %2182 = vst [vmem:[#allocation3 + $0xe] sm:$0x3] 0
  %v2183 = vpack.c.bf16 %v2175, %v2175
  %v2184 = vpack.c.bf16 %v2176, %v2176
  %v2185 = vpack.c.bf16 %v2177, %v2177
  %v2186 = vpack.c.bf16 %v2178, %v2178
  %v2187 = vpack.c.bf16 %v2179, %v2179
  %v2188 = vpack.c.bf16 %v2180, %v2180
  %v2195 = vcombine.low %v2183, %v2184
  %v2196 = vcombine.low %v2185, %v2186
  %v2198 = vunpack.c.l.s4 1983009808
  %v2199 = vunpack.c.0.s8 %v2198
  %v2200 = vlaneseq
  %v2201 = vshrl.u32 %v2200, 7
  %v2202 = vsub.s32 %v2199, %v2201
  %v2203 = vrot.slane %v2195, %v2202
  %v2205 = vunpack.c.l.s4 1983009808
  %v2206 = vunpack.c.0.s8 %v2205
  %v2207 = vlaneseq
  %v2208 = vshrl.u32 %v2207, 7
  %v2209 = vsub.s32 %v2206, %v2208
  %v2210 = vrot.slane %v2196, %v2209
  %v2211 = vcombine.low %v2203, %v2210
  %v2212 = vcombine.low %v2187, %v2188
  %v2214 = vunpack.c.l.s4 1983009808
  %v2215 = vunpack.c.0.s8 %v2214
  %v2216 = vlaneseq
  %v2217 = vshrl.u32 %v2216, 7
  %v2218 = vsub.s32 %v2215, %v2217
  %v2219 = vrot.slane %v2212, %v2218
  %2222 = vst [vmem:[#allocation3 + $0x2] sm:$0xff] %v2211
  %2223 = vst [vmem:[#allocation3 + $0xa] sm:$0xf] %v2219
  %v2224 = vld [vmem:[#allocation3] sm:$0xff]
  %v2225 = vld [vmem:[#allocation3 + $0x8] sm:$0x3f]
  %v2228 = vcombine.high %v2224, %v2224
  %v2230 = vunpack.c.l.s4 1983009808
  %v2231 = vunpack.c.0.s8 %v2230
  %v2232 = vlaneseq
  %v2233 = vshrl.u32 %v2232, 7
  %v2234 = vsub.s32 %v2231, %v2233
  %v2235 = vrot.slane %v2224, %v2234
  %v2237 = vunpack.c.l.s4 1983009808
  %v2238 = vunpack.c.0.s8 %v2237
  %v2239 = vlaneseq
  %v2240 = vshrl.u32 %v2239, 7
  %v2241 = vsub.s32 %v2238, %v2240
  %v2242 = vrot.slane %v2228, %v2241
  %v2243 = vcombine.high %v2225, %v2225
  %v2245 = vunpack.c.l.s4 1983009808
  %v2246 = vunpack.c.0.s8 %v2245
  %v2247 = vlaneseq
  %v2248 = vshrl.u32 %v2247, 7
  %v2249 = vsub.s32 %v2246, %v2248
  %v2250 = vrot.slane %v2225, %v2249
  %v2252 = vunpack.c.l.s4 1983009808
  %v2253 = vunpack.c.0.s8 %v2252
  %v2254 = vlaneseq
  %v2255 = vshrl.u32 %v2254, 7
  %v2256 = vsub.s32 %v2253, %v2255
  %v2257 = vrot.slane %v2243, %v2256
  %2258 = vrot.lane.b32.xlu0 %v2235, 19
  %v2259 = vpop.permute.xlu0 %2258
  %2260 = vrot.lane.b32.xlu0 %v2242, 19
  %v2261 = vpop.permute.xlu0 %2260
  %2262 = vrot.lane.b32.xlu0 %v2250, 19
  %v2263 = vpop.permute.xlu0 %2262
  %2264 = vrot.lane.b32.xlu0 %v2257, 19
  %v2265 = vpop.permute.xlu0 %2264
  %v2266 = vrot.slane %v2259, 4
  %v2267 = vrot.slane %v2261, 4
  %v2268 = vrot.slane %v2263, 4
  %v2269 = vrot.slane %v2265, 4
  %v2270 = vsel %vm57, %v2266, %v2267
  %v2271 = vsel %vm59, %v2259, %v2270
  %v2272 = vsel %vm57, %v2267, %v2268
  %v2273 = vsel %vm59, %v2261, %v2272
  %v2274 = vsel %vm57, %v2268, %v2269
  %v2275 = vsel %vm59, %v2263, %v2274
  %2279 = vst [vmem:[#allocation4] sm:$0x33] %v2271
  %2280 = vst [vmem:[#allocation4 + $0x8] sm:$0x33] %v2273
  %2281 = vst [vmem:[#allocation4 + $0x10] sm:$0x33] %v2275
  %v2282 = vld [vmem:[#allocation3] sm:$0xff]
  %v2283 = vld [vmem:[#allocation3 + $0x8] sm:$0x3f]
  %v2286 = vcombine.low %v2282, %v2282
  %v2288 = vunpack.c.l.s4 1983009808
  %v2289 = vunpack.c.0.s8 %v2288
  %v2290 = vlaneseq
  %v2291 = vshrl.u32 %v2290, 7
  %v2292 = vsub.s32 %v2289, %v2291
  %v2293 = vrot.slane %v2286, %v2292
  %v2295 = vunpack.c.l.s4 1983009808
  %v2296 = vunpack.c.0.s8 %v2295
  %v2297 = vlaneseq
  %v2298 = vshrl.u32 %v2297, 7
  %v2299 = vsub.s32 %v2296, %v2298
  %v2300 = vrot.slane %v2282, %v2299
  %v2301 = vcombine.low %v2283, %v2283
  %v2303 = vunpack.c.l.s4 1983009808
  %v2304 = vunpack.c.0.s8 %v2303
  %v2305 = vlaneseq
  %v2306 = vshrl.u32 %v2305, 7
  %v2307 = vsub.s32 %v2304, %v2306
  %v2308 = vrot.slane %v2301, %v2307
  %v2310 = vunpack.c.l.s4 1983009808
  %v2311 = vunpack.c.0.s8 %v2310
  %v2312 = vlaneseq
  %v2313 = vshrl.u32 %v2312, 7
  %v2314 = vsub.s32 %v2311, %v2313
  %v2315 = vrot.slane %v2283, %v2314
  %2316 = vrot.lane.b32.xlu0 %v2293, 18
  %v2317 = vpop.permute.xlu0 %2316
  %2318 = vrot.lane.b32.xlu0 %v2300, 18
  %v2319 = vpop.permute.xlu0 %2318
  %2320 = vrot.lane.b32.xlu0 %v2308, 18
  %v2321 = vpop.permute.xlu0 %2320
  %2322 = vrot.lane.b32.xlu0 %v2315, 18
  %v2323 = vpop.permute.xlu0 %2322
  %v2324 = vrot.slane %v2317, 4
  %v2325 = vrot.slane %v2319, 4
  %v2326 = vrot.slane %v2321, 4
  %v2327 = vrot.slane %v2323, 4
  %v2328 = vsel %vm57, %v2324, %v2325
  %v2329 = vsel %vm92, %v2317, %v2328
  %v2330 = vsel %vm57, %v2325, %v2326
  %v2331 = vsel %vm92, %v2319, %v2330
  %v2332 = vsel %vm57, %v2326, %v2327
  %v2333 = vsel %vm92, %v2321, %v2332
  %2337 = vst [vmem:[#allocation4] sm:$0xcc] %v2329
  %2338 = vst [vmem:[#allocation4 + $0x8] sm:$0xcc] %v2331
  %2339 = vst [vmem:[#allocation4 + $0x10] sm:$0xcc] %v2333
  %v2340 = vld [vmem:[#allocation3] sm:$0xff]
  %v2341 = vld [vmem:[#allocation3 + $0x8] sm:$0x3f]
  %v2344 = vcombine.high %v2340, %v2340
  %v2346 = vunpack.c.l.s4 1983009808
  %v2347 = vunpack.c.0.s8 %v2346
  %v2348 = vlaneseq
  %v2349 = vshrl.u32 %v2348, 7
  %v2350 = vsub.s32 %v2347, %v2349
  %v2351 = vrot.slane %v2340, %v2350
  %v2353 = vunpack.c.l.s4 1983009808
  %v2354 = vunpack.c.0.s8 %v2353
  %v2355 = vlaneseq
  %v2356 = vshrl.u32 %v2355, 7
  %v2357 = vsub.s32 %v2354, %v2356
  %v2358 = vrot.slane %v2344, %v2357
  %v2359 = vcombine.high %v2341, %v2341
  %v2361 = vunpack.c.l.s4 1983009808
  %v2362 = vunpack.c.0.s8 %v2361
  %v2363 = vlaneseq
  %v2364 = vshrl.u32 %v2363, 7
  %v2365 = vsub.s32 %v2362, %v2364
  %v2366 = vrot.slane %v2341, %v2365
  %v2368 = vunpack.c.l.s4 1983009808
  %v2369 = vunpack.c.0.s8 %v2368
  %v2370 = vlaneseq
  %v2371 = vshrl.u32 %v2370, 7
  %v2372 = vsub.s32 %v2369, %v2371
  %v2373 = vrot.slane %v2359, %v2372
  %2374 = vrot.lane.b32.xlu0 %v2351, 17
  %v2375 = vpop.permute.xlu0 %2374
  %2376 = vrot.lane.b32.xlu0 %v2358, 17
  %v2377 = vpop.permute.xlu0 %2376
  %2378 = vrot.lane.b32.xlu0 %v2366, 17
  %v2379 = vpop.permute.xlu0 %2378
  %2380 = vrot.lane.b32.xlu0 %v2373, 17
  %v2381 = vpop.permute.xlu0 %2380
  %v2382 = vrot.slane %v2375, 4
  %v2383 = vrot.slane %v2377, 4
  %v2384 = vrot.slane %v2379, 4
  %v2385 = vrot.slane %v2381, 4
  %v2386 = vsel %vm57, %v2382, %v2383
  %v2387 = vsel %vm125, %v2375, %v2386
  %v2388 = vsel %vm57, %v2383, %v2384
  %v2389 = vsel %vm125, %v2377, %v2388
  %v2390 = vsel %vm57, %v2384, %v2385
  %v2391 = vsel %vm125, %v2379, %v2390
  %2395 = vst [vmem:[#allocation4 + $0x18] sm:$0x33] %v2387
  %2396 = vst [vmem:[#allocation4 + $0x20] sm:$0x33] %v2389
  %2397 = vst [vmem:[#allocation4 + $0x28] sm:$0x33] %v2391
  %v2398 = vld [vmem:[#allocation3] sm:$0xff]
  %v2399 = vld [vmem:[#allocation3 + $0x8] sm:$0x3f]
  %v2402 = vcombine.low %v2398, %v2398
  %v2404 = vunpack.c.l.s4 1983009808
  %v2405 = vunpack.c.0.s8 %v2404
  %v2406 = vlaneseq
  %v2407 = vshrl.u32 %v2406, 7
  %v2408 = vsub.s32 %v2405, %v2407
  %v2409 = vrot.slane %v2402, %v2408
  %v2411 = vunpack.c.l.s4 1983009808
  %v2412 = vunpack.c.0.s8 %v2411
  %v2413 = vlaneseq
  %v2414 = vshrl.u32 %v2413, 7
  %v2415 = vsub.s32 %v2412, %v2414
  %v2416 = vrot.slane %v2398, %v2415
  %v2417 = vcombine.low %v2399, %v2399
  %v2419 = vunpack.c.l.s4 1983009808
  %v2420 = vunpack.c.0.s8 %v2419
  %v2421 = vlaneseq
  %v2422 = vshrl.u32 %v2421, 7
  %v2423 = vsub.s32 %v2420, %v2422
  %v2424 = vrot.slane %v2417, %v2423
  %v2426 = vunpack.c.l.s4 1983009808
  %v2427 = vunpack.c.0.s8 %v2426
  %v2428 = vlaneseq
  %v2429 = vshrl.u32 %v2428, 7
  %v2430 = vsub.s32 %v2427, %v2429
  %v2431 = vrot.slane %v2399, %v2430
  %2432 = vrot.lane.b32.xlu0 %v2409, 1
  %v2433 = vpop.permute.xlu0 %2432
  %2434 = vrot.lane.b32.xlu0 %v2416, 1
  %v2435 = vpop.permute.xlu0 %2434
  %2436 = vrot.lane.b32.xlu0 %v2424, 1
  %v2437 = vpop.permute.xlu0 %2436
  %2438 = vrot.lane.b32.xlu0 %v2431, 1
  %v2439 = vpop.permute.xlu0 %2438
  %v2440 = vrot.slane %v2433, 4
  %v2441 = vrot.slane %v2435, 4
  %v2442 = vrot.slane %v2437, 4
  %v2443 = vrot.slane %v2439, 4
  %v2444 = vsel %vm57, %v2440, %v2441
  %v2445 = vsel %vm158, %v2433, %v2444
  %v2446 = vsel %vm57, %v2441, %v2442
  %v2447 = vsel %vm158, %v2435, %v2446
  %v2448 = vsel %vm57, %v2442, %v2443
  %v2449 = vsel %vm158, %v2437, %v2448
  %2453 = vst [vmem:[#allocation4 + $0x18] sm:$0xcc] %v2445
  %2454 = vst [vmem:[#allocation4 + $0x20] sm:$0xcc] %v2447
  %2455 = vst [vmem:[#allocation4 + $0x28] sm:$0xcc] %v2449
  %v2456 = vld [vmem:[#allocation3 + $0x2] sm:$0xff]
  %v2457 = vld [vmem:[#allocation3 + $0xa] sm:$0xf]
  %v2460 = vcombine.high %v2456, %v2456
  %v2462 = vunpack.c.l.s4 1983009808
  %v2463 = vunpack.c.0.s8 %v2462
  %v2464 = vlaneseq
  %v2465 = vshrl.u32 %v2464, 7
  %v2466 = vsub.s32 %v2463, %v2465
  %v2467 = vrot.slane %v2456, %v2466
  %v2469 = vunpack.c.l.s4 1983009808
  %v2470 = vunpack.c.0.s8 %v2469
  %v2471 = vlaneseq
  %v2472 = vshrl.u32 %v2471, 7
  %v2473 = vsub.s32 %v2470, %v2472
  %v2474 = vrot.slane %v2460, %v2473
  %v2476 = vunpack.c.l.s4 1983009808
  %v2477 = vunpack.c.0.s8 %v2476
  %v2478 = vlaneseq
  %v2479 = vshrl.u32 %v2478, 7
  %v2480 = vsub.s32 %v2477, %v2479
  %v2481 = vrot.slane %v2457, %v2480
  %2485 = vst [vmem:[#allocation4 + $0x30] sm:$0x33] %v2467
  %2486 = vst [vmem:[#allocation4 + $0x38] sm:$0x33] %v2474
  %2487 = vst [vmem:[#allocation4 + $0x40] sm:$0x33] %v2481
  %v2488 = vld [vmem:[#allocation3 + $0x2] sm:$0xff]
  %v2489 = vld [vmem:[#allocation3 + $0xa] sm:$0x3f]
  %v2492 = vcombine.low %v2488, %v2488
  %v2494 = vunpack.c.l.s4 1983009808
  %v2495 = vunpack.c.0.s8 %v2494
  %v2496 = vlaneseq
  %v2497 = vshrl.u32 %v2496, 7
  %v2498 = vsub.s32 %v2495, %v2497
  %v2499 = vrot.slane %v2492, %v2498
  %v2501 = vunpack.c.l.s4 1983009808
  %v2502 = vunpack.c.0.s8 %v2501
  %v2503 = vlaneseq
  %v2504 = vshrl.u32 %v2503, 7
  %v2505 = vsub.s32 %v2502, %v2504
  %v2506 = vrot.slane %v2488, %v2505
  %v2507 = vcombine.low %v2489, %v2489
  %v2509 = vunpack.c.l.s4 1983009808
  %v2510 = vunpack.c.0.s8 %v2509
  %v2511 = vlaneseq
  %v2512 = vshrl.u32 %v2511, 7
  %v2513 = vsub.s32 %v2510, %v2512
  %v2514 = vrot.slane %v2507, %v2513
  %v2516 = vunpack.c.l.s4 1983009808
  %v2517 = vunpack.c.0.s8 %v2516
  %v2518 = vlaneseq
  %v2519 = vshrl.u32 %v2518, 7
  %v2520 = vsub.s32 %v2517, %v2519
  %v2521 = vrot.slane %v2489, %v2520
  %2522 = vrot.lane.b32.xlu0 %v2499, 127
  %v2523 = vpop.permute.xlu0 %2522
  %2524 = vrot.lane.b32.xlu0 %v2506, 127
  %v2525 = vpop.permute.xlu0 %2524
  %2526 = vrot.lane.b32.xlu0 %v2514, 127
  %v2527 = vpop.permute.xlu0 %2526
  %2528 = vrot.lane.b32.xlu0 %v2521, 127
  %v2529 = vpop.permute.xlu0 %2528
  %v2530 = vrot.slane %v2523, 4
  %v2531 = vrot.slane %v2525, 4
  %v2532 = vrot.slane %v2527, 4
  %v2533 = vrot.slane %v2529, 4
  %v2534 = vsel %vm57, %v2530, %v2531
  %v2535 = vsel %vm197, %v2523, %v2534
  %v2536 = vsel %vm57, %v2531, %v2532
  %v2537 = vsel %vm197, %v2525, %v2536
  %v2538 = vsel %vm57, %v2532, %v2533
  %v2539 = vsel %vm197, %v2527, %v2538
  %2543 = vst [vmem:[#allocation4 + $0x30] sm:$0xcc] %v2535
  %2544 = vst [vmem:[#allocation4 + $0x38] sm:$0xcc] %v2537
  %2545 = vst [vmem:[#allocation4 + $0x40] sm:$0xcc] %v2539
  %v2546 = vld [vmem:[#allocation3 + $0x2] sm:$0xff]
  %v2547 = vld [vmem:[#allocation3 + $0xa] sm:$0x3f]
  %v2550 = vcombine.high %v2546, %v2546
  %v2552 = vunpack.c.l.s4 1983009808
  %v2553 = vunpack.c.0.s8 %v2552
  %v2554 = vlaneseq
  %v2555 = vshrl.u32 %v2554, 7
  %v2556 = vsub.s32 %v2553, %v2555
  %v2557 = vrot.slane %v2546, %v2556
  %v2559 = vunpack.c.l.s4 1983009808
  %v2560 = vunpack.c.0.s8 %v2559
  %v2561 = vlaneseq
  %v2562 = vshrl.u32 %v2561, 7
  %v2563 = vsub.s32 %v2560, %v2562
  %v2564 = vrot.slane %v2550, %v2563
  %v2565 = vcombine.high %v2547, %v2547
  %v2567 = vunpack.c.l.s4 1983009808
  %v2568 = vunpack.c.0.s8 %v2567
  %v2569 = vlaneseq
  %v2570 = vshrl.u32 %v2569, 7
  %v2571 = vsub.s32 %v2568, %v2570
  %v2572 = vrot.slane %v2547, %v2571
  %v2574 = vunpack.c.l.s4 1983009808
  %v2575 = vunpack.c.0.s8 %v2574
  %v2576 = vlaneseq
  %v2577 = vshrl.u32 %v2576, 7
  %v2578 = vsub.s32 %v2575, %v2577
  %v2579 = vrot.slane %v2565, %v2578
  %2580 = vrot.lane.b32.xlu0 %v2557, 111
  %v2581 = vpop.permute.xlu0 %2580
  %2582 = vrot.lane.b32.xlu0 %v2564, 111
  %v2583 = vpop.permute.xlu0 %2582
  %2584 = vrot.lane.b32.xlu0 %v2572, 111
  %v2585 = vpop.permute.xlu0 %2584
  %2586 = vrot.lane.b32.xlu0 %v2579, 111
  %v2587 = vpop.permute.xlu0 %2586
  %v2588 = vrot.slane %v2581, 4
  %v2589 = vrot.slane %v2583, 4
  %v2590 = vrot.slane %v2585, 4
  %v2591 = vrot.slane %v2587, 4
  %v2592 = vsel %vm57, %v2588, %v2589
  %v2593 = vsel %vm230, %v2581, %v2592
  %v2594 = vsel %vm57, %v2589, %v2590
  %v2595 = vsel %vm230, %v2583, %v2594
  %v2596 = vsel %vm57, %v2590, %v2591
  %v2597 = vsel %vm230, %v2585, %v2596
  %2601 = vst [vmem:[#allocation4 + $0x48] sm:$0x33] %v2593
  %2602 = vst [vmem:[#allocation4 + $0x50] sm:$0x33] %v2595
  %2603 = vst [vmem:[#allocation4 + $0x58] sm:$0x33] %v2597
  %v2604 = vld [vmem:[#allocation3 + $0x2] sm:$0xff]
  %v2605 = vld [vmem:[#allocation3 + $0xa] sm:$0x3f]
  %v2608 = vcombine.low %v2604, %v2604
  %v2610 = vunpack.c.l.s4 1983009808
  %v2611 = vunpack.c.0.s8 %v2610
  %v2612 = vlaneseq
  %v2613 = vshrl.u32 %v2612, 7
  %v2614 = vsub.s32 %v2611, %v2613
  %v2615 = vrot.slane %v2608, %v2614
  %v2617 = vunpack.c.l.s4 1983009808
  %v2618 = vunpack.c.0.s8 %v2617
  %v2619 = vlaneseq
  %v2620 = vshrl.u32 %v2619, 7
  %v2621 = vsub.s32 %v2618, %v2620
  %v2622 = vrot.slane %v2604, %v2621
  %v2623 = vcombine.low %v2605, %v2605
  %v2625 = vunpack.c.l.s4 1983009808
  %v2626 = vunpack.c.0.s8 %v2625
  %v2627 = vlaneseq
  %v2628 = vshrl.u32 %v2627, 7
  %v2629 = vsub.s32 %v2626, %v2628
  %v2630 = vrot.slane %v2623, %v2629
  %v2632 = vunpack.c.l.s4 1983009808
  %v2633 = vunpack.c.0.s8 %v2632
  %v2634 = vlaneseq
  %v2635 = vshrl.u32 %v2634, 7
  %v2636 = vsub.s32 %v2633, %v2635
  %v2637 = vrot.slane %v2605, %v2636
  %2638 = vrot.lane.b32.xlu0 %v2615, 110
  %v2639 = vpop.permute.xlu0 %2638
  %2640 = vrot.lane.b32.xlu0 %v2622, 110
  %v2641 = vpop.permute.xlu0 %2640
  %2642 = vrot.lane.b32.xlu0 %v2630, 110
  %v2643 = vpop.permute.xlu0 %2642
  %2644 = vrot.lane.b32.xlu0 %v2637, 110
  %v2645 = vpop.permute.xlu0 %2644
  %v2646 = vrot.slane %v2639, 4
  %v2647 = vrot.slane %v2641, 4
  %v2648 = vrot.slane %v2643, 4
  %v2649 = vrot.slane %v2645, 4
  %v2650 = vsel %vm57, %v2646, %v2647
  %v2651 = vsel %vm263, %v2639, %v2650
  %v2652 = vsel %vm57, %v2647, %v2648
  %v2653 = vsel %vm263, %v2641, %v2652
  %v2654 = vsel %vm57, %v2648, %v2649
  %v2655 = vsel %vm263, %v2643, %v2654
  %2659 = vst [vmem:[#allocation4 + $0x48] sm:$0xcc] %v2651
  %2660 = vst [vmem:[#allocation4 + $0x50] sm:$0xcc] %v2653
  %2661 = vst [vmem:[#allocation4 + $0x58] sm:$0xcc] %v2655
  %v2662 = vld [vmem:[#allocation3 + $0x2] sm:$0xff]
  %v2663 = vld [vmem:[#allocation3 + $0xa] sm:$0x3f]
  %v2666 = vcombine.high %v2662, %v2662
  %v2668 = vunpack.c.l.s4 1983009808
  %v2669 = vunpack.c.0.s8 %v2668
  %v2670 = vlaneseq
  %v2671 = vshrl.u32 %v2670, 7
  %v2672 = vsub.s32 %v2669, %v2671
  %v2673 = vrot.slane %v2662, %v2672
  %v2675 = vunpack.c.l.s4 1983009808
  %v2676 = vunpack.c.0.s8 %v2675
  %v2677 = vlaneseq
  %v2678 = vshrl.u32 %v2677, 7
  %v2679 = vsub.s32 %v2676, %v2678
  %v2680 = vrot.slane %v2666, %v2679
  %v2681 = vcombine.high %v2663, %v2663
  %v2683 = vunpack.c.l.s4 1983009808
  %v2684 = vunpack.c.0.s8 %v2683
  %v2685 = vlaneseq
  %v2686 = vshrl.u32 %v2685, 7
  %v2687 = vsub.s32 %v2684, %v2686
  %v2688 = vrot.slane %v2663, %v2687
  %v2690 = vunpack.c.l.s4 1983009808
  %v2691 = vunpack.c.0.s8 %v2690
  %v2692 = vlaneseq
  %v2693 = vshrl.u32 %v2692, 7
  %v2694 = vsub.s32 %v2691, %v2693
  %v2695 = vrot.slane %v2681, %v2694
  %2696 = vrot.lane.b32.xlu0 %v2673, 109
  %v2697 = vpop.permute.xlu0 %2696
  %2698 = vrot.lane.b32.xlu0 %v2680, 109
  %v2699 = vpop.permute.xlu0 %2698
  %2700 = vrot.lane.b32.xlu0 %v2688, 109
  %v2701 = vpop.permute.xlu0 %2700
  %2702 = vrot.lane.b32.xlu0 %v2695, 109
  %v2703 = vpop.permute.xlu0 %2702
  %v2704 = vrot.slane %v2697, 4
  %v2705 = vrot.slane %v2699, 4
  %v2706 = vrot.slane %v2701, 4
  %v2707 = vrot.slane %v2703, 4
  %v2708 = vsel %vm57, %v2704, %v2705
  %v2709 = vsel %vm296, %v2697, %v2708
  %v2710 = vsel %vm57, %v2705, %v2706
  %v2711 = vsel %vm296, %v2699, %v2710
  %v2712 = vsel %vm57, %v2706, %v2707
  %v2713 = vsel %vm296, %v2701, %v2712
  %2717 = vst [vmem:[#allocation4 + $0x60] sm:$0x33] %v2709
  %2718 = vst [vmem:[#allocation4 + $0x68] sm:$0x33] %v2711
  %2719 = vst [vmem:[#allocation4 + $0x70] sm:$0x33] %v2713
  %v2720 = vld [vmem:[%s5] sm:$0x3]
  %v2721 = vld [vmem:[#allocation4] sm:$0xff]
  %v2722 = vld [vmem:[#allocation4 + $0x8] sm:$0xff]
  %v2723 = vld [vmem:[#allocation4 + $0x10] sm:$0xff]
  %v2724 = vld [vmem:[#allocation4 + $0x18] sm:$0xff]
  %v2725 = vld [vmem:[#allocation4 + $0x20] sm:$0xff]
  %v2726 = vld [vmem:[#allocation4 + $0x28] sm:$0xff]
  %v2727 = vld [vmem:[#allocation4 + $0x30] sm:$0xff]
  %v2728 = vld [vmem:[#allocation4 + $0x38] sm:$0xff]
  %v2729 = vld [vmem:[#allocation4 + $0x40] sm:$0xff]
  %v2730 = vld [vmem:[#allocation4 + $0x48] sm:$0xff]
  %v2731 = vld [vmem:[#allocation4 + $0x50] sm:$0xff]
  %v2732 = vld [vmem:[#allocation4 + $0x58] sm:$0xff]
  %v2733 = vld [vmem:[#allocation4 + $0x60] sm:$0x33]
  %v2734 = vld [vmem:[#allocation4 + $0x68] sm:$0x33]
  %v2735 = vld [vmem:[#allocation4 + $0x70] sm:$0x33]
  %2737 = vset.pattern.permute.xlu0 0
  %2738 = vperm.xlu0 %2737, %v34
  %v2739 = vpop.permute.xlu0 %2738
  %v2756 = vunpack.c.l.b16 %v2721
  %v2757 = vunpack.c.h.b16 %v2721
  %v2758 = vunpack.c.l.b16 %v2722
  %v2759 = vunpack.c.h.b16 %v2722
  %v2760 = vunpack.c.l.b16 %v2723
  %v2761 = vunpack.c.h.b16 %v2723
  %v2762 = vunpack.c.l.b16 %v2724
  %v2763 = vunpack.c.h.b16 %v2724
  %v2764 = vunpack.c.l.b16 %v2725
  %v2765 = vunpack.c.h.b16 %v2725
  %v2766 = vunpack.c.l.b16 %v2726
  %v2767 = vunpack.c.h.b16 %v2726
  %v2768 = vunpack.c.l.b16 %v2727
  %v2769 = vunpack.c.h.b16 %v2727
  %v2770 = vunpack.c.l.b16 %v2728
  %v2771 = vunpack.c.h.b16 %v2728
  %v2772 = vunpack.c.l.b16 %v2729
  %v2773 = vunpack.c.h.b16 %v2729
  %v2774 = vunpack.c.l.b16 %v2730
  %v2775 = vunpack.c.h.b16 %v2730
  %v2776 = vunpack.c.l.b16 %v2731
  %v2777 = vunpack.c.h.b16 %v2731
  %v2778 = vunpack.c.l.b16 %v2732
  %v2779 = vunpack.c.h.b16 %v2732
  %v2780 = vunpack.c.l.b16 %v2733
  %v2781 = vunpack.c.h.b16 %v2733
  %v2782 = vunpack.c.l.b16 %v2734
  %v2783 = vunpack.c.h.b16 %v2734
  %v2784 = vunpack.c.l.b16 %v2735
  %v2785 = vunpack.c.h.b16 %v2735
  %v2786 = vpack.c.b16 %v2762, %v2756
  %v2787 = vpack.c.b16 %v2763, %v2757
  %v2788 = vpack.c.b16 %v2764, %v2758
  %v2789 = vpack.c.b16 %v2765, %v2759
  %v2790 = vpack.c.b16 %v2766, %v2760
  %v2791 = vpack.c.b16 %v2767, %v2761
  %v2792 = vpack.c.b16 %v2774, %v2768
  %v2793 = vpack.c.b16 %v2775, %v2769
  %v2794 = vpack.c.b16 %v2776, %v2770
  %v2795 = vpack.c.b16 %v2777, %v2771
  %v2796 = vpack.c.b16 %v2778, %v2772
  %v2797 = vpack.c.b16 %v2779, %v2773
  %v2798 = vpack.c.b16 %v2780, %v2780
  %v2799 = vpack.c.b16 %v2781, %v2781
  %v2800 = vpack.c.b16 %v2782, %v2782
  %v2801 = vpack.c.b16 %v2783, %v2783
  %v2802 = vpack.c.b16 %v2784, %v2784
  %v2803 = vpack.c.b16 %v2785, %v2785
  %vm2816 = vcmask 293888
  %v2818 = vsel %vm2816, %v2720, 0
  %vm2820 = vcmask 1041408
  %v2822 = vsel %vm2820, %v2798, 0
  %v2825 = vsel %vm2820, %v2799, 0
  %v2828 = vsel %vm2820, %v2800, 0
  %v2831 = vsel %vm2820, %v2801, 0
  %v2834 = vsel %vm2820, %v2802, 0
  %v2837 = vsel %vm2820, %v2803, 0
  %2839 = vmatprep.subr.bf16.mxu0 %v2787
  %2840 = vmatpush1.bf16.msra.mxu0 %v2786
  %2841 = vmatprep.subr.bf16.mxu0 %v2793
  %2842 = vmatpush1.bf16.msra.mxu0 %v2792
  %2843 = vmatprep.subr.bf16.mxu0 %v2825
  %2844 = vmatpush1.bf16.msra.mxu0 %v2822
  %2845 = vmatprep.subr.bf16.mxu0 0
  %2846 = vmatpush1.bf16.msra.mxu0 0
  %2847 = vmatprep.subr.bf16.mxu0 0
  %2848 = vmatpush1.bf16.msra.mxu0 0
  %2849 = vmatprep.subr.bf16.mxu0 0
  %2850 = vmatpush1.bf16.msra.mxu0 0
  %2851 = vmatprep.subr.bf16.mxu0 0
  %2852 = vmatpush1.bf16.msra.mxu0 0
  %2853 = vmatprep.subr.bf16.mxu0 0
  %2854 = vmatpush1.bf16.msra.mxu0 0
  %2855 = vmatprep.subr.bf16.mxu0 0
  %2856 = vmatpush1.bf16.msra.mxu0 0
  %2857 = vmatprep.subr.bf16.mxu0 0
  %2858 = vmatpush1.bf16.msra.mxu0 0
  %2859 = vmatprep.subr.bf16.mxu0 0
  %2860 = vmatpush1.bf16.msra.mxu0 0
  %2861 = vmatprep.subr.bf16.mxu0 0
  %2862 = vmatpush1.bf16.msra.mxu0 0
  %2863 = vmatprep.subr.bf16.mxu0 0
  %2864 = vmatpush1.bf16.msra.mxu0 0
  %2865 = vmatprep.subr.bf16.mxu0 0
  %2866 = vmatpush1.bf16.msra.mxu0 0
  %2867 = vmatprep.subr.bf16.mxu0 0
  %2868 = vmatpush1.bf16.msra.mxu0 0
  %2869 = vmatprep.subr.bf16.mxu0 0
  %2870 = vmatpush1.bf16.msra.mxu0 0
  %2871 = vmatprep.mubr.bf16.mxu0 0
  %2872 = vmatmul.mubr.bf16.gmra.mrb[0].mxu0 %v2818
  %v2873 = vpop.f32.mrb[0].mxu0
  %v2874 = vadd.f32 %v2739, %v2873
  %v2875 = vpop.f32.mrb[0].mxu0
  %v2876 = vadd.f32 %v2739, %v2875
  %v2877 = vpop.f32.mrb[0].mxu0
  %v2878 = vpop.f32.mrb[0].mxu0
  %2879 = vdwg.mxu0
  %2880 = vmatprep.subr.bf16.mxu0 %v2789
  %2881 = vmatpush1.bf16.msra.mxu0 %v2788
  %2882 = vmatprep.subr.bf16.mxu0 %v2795
  %2883 = vmatpush1.bf16.msra.mxu0 %v2794
  %2884 = vmatprep.subr.bf16.mxu0 %v2831
  %2885 = vmatpush1.bf16.msra.mxu0 %v2828
  %2886 = vmatprep.subr.bf16.mxu0 0
  %2887 = vmatpush1.bf16.msra.mxu0 0
  %2888 = vmatprep.subr.bf16.mxu0 0
  %2889 = vmatpush1.bf16.msra.mxu0 0
  %2890 = vmatprep.subr.bf16.mxu0 0
  %2891 = vmatpush1.bf16.msra.mxu0 0
  %2892 = vmatprep.subr.bf16.mxu0 0
  %2893 = vmatpush1.bf16.msra.mxu0 0
  %2894 = vmatprep.subr.bf16.mxu0 0
  %2895 = vmatpush1.bf16.msra.mxu0 0
  %2896 = vmatprep.subr.bf16.mxu0 0
  %2897 = vmatpush1.bf16.msra.mxu0 0
  %2898 = vmatprep.subr.bf16.mxu0 0
  %2899 = vmatpush1.bf16.msra.mxu0 0
  %2900 = vmatprep.subr.bf16.mxu0 0
  %2901 = vmatpush1.bf16.msra.mxu0 0
  %2902 = vmatprep.subr.bf16.mxu0 0
  %2903 = vmatpush1.bf16.msra.mxu0 0
  %2904 = vmatprep.subr.bf16.mxu0 0
  %2905 = vmatpush1.bf16.msra.mxu0 0
  %2906 = vmatprep.subr.bf16.mxu0 0
  %2907 = vmatpush1.bf16.msra.mxu0 0
  %2908 = vmatprep.subr.bf16.mxu0 0
  %2909 = vmatpush1.bf16.msra.mxu0 0
  %2910 = vmatprep.subr.bf16.mxu0 0
  %2911 = vmatpush1.bf16.msra.mxu0 0
  %2912 = vmatprep.mubr.bf16.mxu0 0
  %2913 = vmatmul.mubr.bf16.gmra.mrb[0].mxu0 %v2818
  %v2914 = vpop.f32.mrb[0].mxu0
  %v2915 = vadd.f32 %v2739, %v2914
  %v2916 = vpop.f32.mrb[0].mxu0
  %v2917 = vadd.f32 %v2739, %v2916
  %v2918 = vpop.f32.mrb[0].mxu0
  %v2919 = vpop.f32.mrb[0].mxu0
  %2920 = vdwg.mxu0
  %2921 = vmatprep.subr.bf16.mxu0 %v2791
  %2922 = vmatpush1.bf16.msra.mxu0 %v2790
  %2923 = vmatprep.subr.bf16.mxu0 %v2797
  %2924 = vmatpush1.bf16.msra.mxu0 %v2796
  %2925 = vmatprep.subr.bf16.mxu0 %v2837
  %2926 = vmatpush1.bf16.msra.mxu0 %v2834
  %2927 = vmatprep.subr.bf16.mxu0 0
  %2928 = vmatpush1.bf16.msra.mxu0 0
  %2929 = vmatprep.subr.bf16.mxu0 0
  %2930 = vmatpush1.bf16.msra.mxu0 0
  %2931 = vmatprep.subr.bf16.mxu0 0
  %2932 = vmatpush1.bf16.msra.mxu0 0
  %2933 = vmatprep.subr.bf16.mxu0 0
  %2934 = vmatpush1.bf16.msra.mxu0 0
  %2935 = vmatprep.subr.bf16.mxu0 0
  %2936 = vmatpush1.bf16.msra.mxu0 0
  %2937 = vmatprep.subr.bf16.mxu0 0
  %2938 = vmatpush1.bf16.msra.mxu0 0
  %2939 = vmatprep.subr.bf16.mxu0 0
  %2940 = vmatpush1.bf16.msra.mxu0 0
  %2941 = vmatprep.subr.bf16.mxu0 0
  %2942 = vmatpush1.bf16.msra.mxu0 0
  %2943 = vmatprep.subr.bf16.mxu0 0
  %2944 = vmatpush1.bf16.msra.mxu0 0
  %2945 = vmatprep.subr.bf16.mxu0 0
  %2946 = vmatpush1.bf16.msra.mxu0 0
  %2947 = vmatprep.subr.bf16.mxu0 0
  %2948 = vmatpush1.bf16.msra.mxu0 0
  %2949 = vmatprep.subr.bf16.mxu0 0
  %2950 = vmatpush1.bf16.msra.mxu0 0
  %2951 = vmatprep.subr.bf16.mxu0 0
  %2952 = vmatpush1.bf16.msra.mxu0 0
  %2953 = vmatprep.mubr.bf16.mxu0 0
  %2954 = vmatmul.mubr.bf16.gmra.mrb[0].mxu0 %v2818
  %v2955 = vpop.f32.mrb[0].mxu0
  %v2956 = vadd.f32 %v2739, %v2955
  %v2957 = vpop.f32.mrb[0].mxu0
  %v2958 = vadd.f32 %v2739, %v2957
  %v2959 = vpop.f32.mrb[0].mxu0
  %v2960 = vpop.f32.mrb[0].mxu0
  %2961 = vdwg.mxu0
  %v2962 = vmax.f32 %v2874, 0.0
  %v2963 = vmax.f32 %v2876, 0.0
  %v2964 = vmax.f32 %v2915, 0.0
  %v2965 = vmax.f32 %v2917, 0.0
  %v2966 = vmax.f32 %v2956, 0.0
  %v2967 = vmax.f32 %v2958, 0.0
  %v2968 = vmul.f32 %v2962, %v632
  %v2969 = vmul.f32 %v2963, %v636
  %v2970 = vmul.f32 %v2964, %v640
  %v2971 = vmul.f32 %v2965, %v644
  %v2972 = vmul.f32 %v2966, %v648
  %v2973 = vmul.f32 %v2967, %v652
  %v2974 = vsel %vm480, %v2968, 0.0
  %v2975 = vsel %vm480, %v2969, 0.0
  %v2976 = vadd.f32 %v2974, %v2975
  %v2977 = vsel %vm480, %v2970, 0.0
  %v2978 = vadd.f32 %v2976, %v2977
  %v2979 = vsel %vm480, %v2971, 0.0
  %v2980 = vadd.f32 %v2978, %v2979
  %v2981 = vsel %vm480, %v2972, 0.0
  %v2982 = vadd.f32 %v2980, %v2981
  %v2983 = vsel %vm480, %v2973, 0.0
  %v2984 = vadd.f32 %v2982, %v2983
  %2985 = vadd.xlane.f32.xlu0 %v2984
  %v2986 = vpop.xlane.xlu0 %2985
  %v2987 = vmul.f32 %v2986, 0.001953125
  %v2988 = vmul.f32 %v2968, %v2968
  %v2989 = vmul.f32 %v2969, %v2969
  %v2990 = vmul.f32 %v2970, %v2970
  %v2991 = vmul.f32 %v2971, %v2971
  %v2992 = vmul.f32 %v2972, %v2972
  %v2993 = vmul.f32 %v2973, %v2973
  %v2994 = vsel %vm480, %v2988, 0.0
  %v2995 = vsel %vm480, %v2989, 0.0
  %v2996 = vadd.f32 %v2994, %v2995
  %v2997 = vsel %vm480, %v2990, 0.0
  %v2998 = vadd.f32 %v2996, %v2997
  %v2999 = vsel %vm480, %v2991, 0.0
  %v3000 = vadd.f32 %v2998, %v2999
  %v3001 = vsel %vm480, %v2992, 0.0
  %v3002 = vadd.f32 %v3000, %v3001
  %v3003 = vsel %vm480, %v2993, 0.0
  %v3004 = vadd.f32 %v3002, %v3003
  %3005 = vadd.xlane.f32.xlu0 %v3004
  %v3006 = vpop.xlane.xlu0 %3005
  %v3007 = vmul.f32 %v3006, 0.001953125
  %v3008 = vmul.f32 %v2987, %v2987
  %v3009 = vsub.f32 %v3007, %v3008
  %v3010 = vsub.f32 %v2968, %v2987
  %v3011 = vsub.f32 %v2969, %v2987
  %v3012 = vsub.f32 %v2970, %v2987
  %v3013 = vsub.f32 %v2971, %v2987
  %v3014 = vsub.f32 %v2972, %v2987
  %v3015 = vsub.f32 %v2973, %v2987
  %v3016 = vadd.f32 %v3009, 1e-05
  %v3017 = vrsqrt.pop %v3016
  %v3018 = vmul.f32 %v3010, %v3017
  %v3019 = vmul.f32 %v3011, %v3017
  %v3020 = vmul.f32 %v3012, %v3017
  %v3021 = vmul.f32 %v3013, %v3017
  %v3022 = vmul.f32 %v3014, %v3017
  %v3023 = vmul.f32 %v3015, %v3017
  %3025 = vset.pattern.permute.xlu0 0
  %3026 = vperm.xlu0 %3025, %v35
  %v3027 = vpop.permute.xlu0 %3026
  %v3029 = vmul.f32 %v3018, %v3027
  %v3030 = vmul.f32 %v3019, %v3027
  %v3031 = vmul.f32 %v3020, %v3027
  %v3032 = vmul.f32 %v3021, %v3027
  %v3033 = vmul.f32 %v3022, %v3027
  %v3034 = vmul.f32 %v3023, %v3027
  %3036 = vset.pattern.permute.xlu0 0
  %3037 = vperm.xlu0 %3036, %v36
  %v3038 = vpop.permute.xlu0 %3037
  %v3040 = vadd.f32 %v3029, %v3038
  %v3041 = vadd.f32 %v3030, %v3038
  %v3042 = vadd.f32 %v3031, %v3038
  %v3043 = vadd.f32 %v3032, %v3038
  %v3044 = vadd.f32 %v3033, %v3038
  %v3045 = vadd.f32 %v3034, %v3038
  %v3046 = vmul.f32 %v3040, %v632
  %v3047 = vmul.f32 %v3041, %v636
  %v3048 = vmul.f32 %v3042, %v640
  %v3049 = vmul.f32 %v3043, %v644
  %v3050 = vmul.f32 %v3044, %v648
  %v3051 = vmul.f32 %v3045, %v652
  %v3058 = vcombine.low %v3046, %v3047
  %v3059 = vcombine.low %v3048, %v3049
  %v3060 = vcombine.low %v3050, %v3051
  %3064 = vst [vmem:[%s7] sm:$0xff] %v3058
  %3065 = vst [vmem:[%s7 + $0x8] sm:$0xff] %v3059
  %3066 = vst [vmem:[%s7 + $0x10] sm:$0xff] %v3060
  // Predicated region
  $region30: #{up_forward.1} parent=0 // pred_check
    _
  $region31: #{up_forward.1} parent=0 // pred_check_branch
    %3068 = sbr.rel (0) target = $region33
  $region32: #{up_forward.1} parent=0 // pred_region
    _
  $region33: #{up_forward.1} parent=0 // pred_fallthru
    _
  // Predicated region
  $region34: #{up_forward.1} parent=0 // pred_check
    _
  $region35: #{up_forward.1} parent=0 // pred_check_branch
    %3070 = sbr.rel (0) target = $region37
  $region36: #{up_forward.1} parent=0 // pred_region
    _
  $region37: #{up_forward.1} parent=0 // pred_fallthru
    _

</llo_original>
